<compile_context>
chip_gen: v5e
topology: v5e:2x2
jax: 0.10.0
libtpu: 0.0.40
codegen_flags: <defaults>
</compile_context>

<pallas_src>
import functools

import jax
import jax.numpy as jnp
from jax.experimental import pallas as pl
from jax.experimental.pallas import tpu as pltpu

BN_EPS = 1e-5
LANE = 128  # output-channel tile (lane-dense)


def _round_up(x, m):
    return (x + m - 1) // m * m


def _compiler_params(sems):
    return pltpu.CompilerParams(dimension_semantics=sems,
                                vmem_limit_bytes=32 * 1024 * 1024)


# ----------------------------- Pallas kernels ------------------------------

def _stats_kernel(a_ref, w_ref, g_ref, b_ref, scale_ref, shift_ref,
                  sum_sc, sumsq_sc, *, inv_rows):
    """Pass 1: BN batch statistics of (patches @ w), reduced over all M rows.

    grid = (Ct, Mt).  The M axis is a reduction ('arbitrary'): per-channel
    sum / sum-of-squares accumulate in VMEM scratch; on the last M step the
    affine BN params  scale = g*rsqrt(var+eps), shift = b - mean*scale  are
    written to the (1, TC)-resident outputs.
    """
    m = pl.program_id(1)

    @pl.when(m == 0)
    def _():
        sum_sc[...] = jnp.zeros_like(sum_sc)
        sumsq_sc[...] = jnp.zeros_like(sumsq_sc)

    # bf16 x bf16 -> f32 on the MXU
    acc = jnp.dot(a_ref[...], w_ref[...], preferred_element_type=jnp.float32)
    sum_sc[...] += jnp.sum(acc, axis=0, keepdims=True)
    sumsq_sc[...] += jnp.sum(acc * acc, axis=0, keepdims=True)

    @pl.when(m == pl.num_programs(1) - 1)
    def _():
        mean = sum_sc[...] * inv_rows
        var = jnp.maximum(sumsq_sc[...] * inv_rows - mean * mean, 0.0)
        scale = g_ref[...] * jax.lax.rsqrt(var + BN_EPS)
        scale_ref[...] = scale
        shift_ref[...] = b_ref[...] - mean * scale


def _apply_kernel(a_ref, w_ref, scale_ref, shift_ref, o_ref, *, apply_relu):
    """Pass 2: out = [relu](BN(a @ w)) using precomputed scale/shift."""
    acc = jnp.dot(a_ref[...], w_ref[...], preferred_element_type=jnp.float32)
    y = acc * scale_ref[...] + shift_ref[...]
    if apply_relu:
        y = jnp.maximum(y, 0.0)
    o_ref[...] = y.astype(o_ref.dtype)


def _apply_add_relu_kernel(a_ref, w_ref, scale_ref, shift_ref, s_ref, o_ref):
    """Pass 2 (fused residual): out = relu(BN(a @ w) + shortcut)."""
    acc = jnp.dot(a_ref[...], w_ref[...], preferred_element_type=jnp.float32)
    y = acc * scale_ref[...] + shift_ref[...] + s_ref[...].astype(jnp.float32)
    o_ref[...] = jnp.maximum(y, 0.0).astype(o_ref.dtype)


# --------------------------- fused conv+BN wrapper ---------------------------

def conv_bn(patches, w, gamma, beta, *, n_rows, relu, shortcut=None,
            out_dtype=jnp.float32, block_m=512, block_c=LANE):
    """Conv (as im2col matmul) + training-mode BatchNorm [+ add] [+ ReLU].

    patches : (Mp, K)  bf16, rows beyond n_rows zero-padded.
    w       : (K, Cp)  bf16, channels beyond the real Cout zero-padded.
    gamma/beta : (1, Cp) f32, zero-padded.
    shortcut   : optional (Mp, Cp) f32 (implies final ReLU).
    returns (Mp, Cp) out_dtype.
    """
    Mp, K = patches.shape
    Cp = w.shape[1]
    tm = min(block_m, Mp)
    assert Mp % tm == 0 and Cp % block_c == 0 and tm % 8 == 0
    mt, ct = Mp // tm, Cp // block_c

    # ---- pass 1: global per-channel BN statistics -> (scale, shift) ----
    scale, shift = pl.pallas_call(
        functools.partial(_stats_kernel, inv_rows=1.0 / float(n_rows)),
        out_shape=(jax.ShapeDtypeStruct((1, Cp), jnp.float32),
                   jax.ShapeDtypeStruct((1, Cp), jnp.float32)),
        grid=(ct, mt),
        in_specs=[pl.BlockSpec((tm, K), lambda j, m: (m, 0)),
                  pl.BlockSpec((K, block_c), lambda j, m: (0, j)),
                  pl.BlockSpec((1, block_c), lambda j, m: (0, j)),
                  pl.BlockSpec((1, block_c), lambda j, m: (0, j))],
        out_specs=(pl.BlockSpec((1, block_c), lambda j, m: (0, j)),
                   pl.BlockSpec((1, block_c), lambda j, m: (0, j))),
        scratch_shapes=[pltpu.VMEM((1, block_c), jnp.float32),
                        pltpu.VMEM((1, block_c), jnp.float32)],
        # Cout tiles independent -> 'parallel' (v7x megacore); M is a reduction.
        compiler_params=_compiler_params(("parallel", "arbitrary")),
    )(patches, w, gamma, beta)

    # ---- pass 2: normalize + affine (+ residual add) (+ relu) ----
    if shortcut is None:
        kernel = functools.partial(_apply_kernel, apply_relu=relu)
        in_arrays = (patches, w, scale, shift)
        in_specs = [pl.BlockSpec((tm, K), lambda j, m: (m, 0)),
                    pl.BlockSpec((K, block_c), lambda j, m: (0, j)),
                    pl.BlockSpec((1, block_c), lambda j, m: (0, j)),
                    pl.BlockSpec((1, block_c), lambda j, m: (0, j))]
    else:
        kernel = _apply_add_relu_kernel
        in_arrays = (patches, w, scale, shift, shortcut)
        in_specs = [pl.BlockSpec((tm, K), lambda j, m: (m, 0)),
                    pl.BlockSpec((K, block_c), lambda j, m: (0, j)),
                    pl.BlockSpec((1, block_c), lambda j, m: (0, j)),
                    pl.BlockSpec((1, block_c), lambda j, m: (0, j)),
                    pl.BlockSpec((tm, block_c), lambda j, m: (m, j))]

    return pl.pallas_call(
        kernel,
        out_shape=jax.ShapeDtypeStruct((Mp, Cp), out_dtype),
        grid=(ct, mt),
        in_specs=in_specs,
        out_specs=pl.BlockSpec((tm, block_c), lambda j, m: (m, j)),
        compiler_params=_compiler_params(("parallel", "parallel")),
    )(*in_arrays)


# ------------------------------- JAX glue ----------------------------------

def im2col(x_nhwc, kh, kw, stride, pad):
    """x: (N,H,W,C) -> patches (N*Ho*Wo, kh*kw*C), row order (n, ho, wo)."""
    N, H, W, C = x_nhwc.shape
    xp = jnp.pad(x_nhwc, ((0, 0), (pad, pad), (pad, pad), (0, 0)))
    Ho = (H + 2 * pad - kh) // stride + 1
    Wo = (W + 2 * pad - kw) // stride + 1
    cols = []
    for i in range(kh):
        for j in range(kw):
            cols.append(xp[:, i:i + stride * Ho:stride, j:j + stride * Wo:stride, :])
    patches = jnp.concatenate(cols, axis=-1)          # (N, Ho, Wo, kh*kw*C)
    return patches.reshape(N * Ho * Wo, kh * kw * C), (N, Ho, Wo)


def _w_to_matrix(w_oihw, c_pad):
    """(Cout,Cin,kh,kw) -> (kh*kw*Cin, Cp) bf16, channel-padded with zeros."""
    cout, cin, kh, kw = w_oihw.shape
    wm = jnp.transpose(w_oihw, (2, 3, 1, 0)).reshape(kh * kw * cin, cout)
    return jnp.pad(wm, ((0, 0), (0, c_pad - cout))).astype(jnp.bfloat16)


def _pad_vec(v, c_pad):
    return jnp.pad(v, (0, c_pad - v.shape[0])).reshape(1, c_pad).astype(jnp.float32)


def residual_block_forward(x_nchw, params, stride, *, block_m=512):
    x = jnp.transpose(x_nchw, (0, 2, 3, 1))            # NHWC, f32
    N, H, W, Cin = x.shape
    Cout = params["w1"].shape[0]
    Cp = _round_up(Cout, LANE)                         # lane-dense channel pad
    x_bf16 = x.astype(jnp.bfloat16)                    # bf16 MXU / patch feed

    # left branch, conv1: 3x3 stride s -> BN -> ReLU
    p1, (_, Ho, Wo) = im2col(x_bf16, 3, 3, stride, 1)
    M = N * Ho * Wo
    tm = min(block_m, _round_up(M, 8))
    Mp = _round_up(M, tm)
    pad_rows = Mp - M
    p1 = jnp.pad(p1, ((0, pad_rows), (0, 0)))

    y1 = conv_bn(p1, _w_to_matrix(params["w1"], Cp),
                 _pad_vec(params["g1"], Cp), _pad_vec(params["b1"], Cp),
                 n_rows=M, relu=True, out_dtype=jnp.bfloat16, block_m=tm)
    y1_img = y1[:M, :Cout].reshape(N, Ho, Wo, Cout)    # bf16 intermediate

    # shortcut branch
    if stride != 1 or Cin != Cout:
        xs = x_bf16[:, ::stride, ::stride, :].reshape(M, Cin)
        xs = jnp.pad(xs, ((0, pad_rows), (0, 0)))
        sc = conv_bn(xs, _w_to_matrix(params["ws"], Cp),
                     _pad_vec(params["gs"], Cp), _pad_vec(params["bs"], Cp),
                     n_rows=M, relu=False, out_dtype=jnp.float32, block_m=tm)
    else:
        sc = jnp.pad(x.reshape(M, Cin), ((0, pad_rows), (0, Cp - Cin)))

    # left branch, conv2: 3x3 stride 1 -> BN, fused residual add + ReLU
    p2, _ = im2col(y1_img, 3, 3, 1, 1)
    p2 = jnp.pad(p2, ((0, pad_rows), (0, 0)))
    out = conv_bn(p2, _w_to_matrix(params["w2"], Cp),
                  _pad_vec(params["g2"], Cp), _pad_vec(params["b2"], Cp),
                  n_rows=M, relu=True, shortcut=sc,
                  out_dtype=jnp.float32, block_m=tm)

    out = out[:M, :Cout].reshape(N, Ho, Wo, Cout)
    return jnp.transpose(out, (0, 3, 1, 2))            # back to NCHW


# --------------------------- pure-JAX reference -----------------------------
# Reference matches the kernel's bf16 MXU inputs (f32 accumulation & BN) so
# the correctness check is tight and independent of bf16 quantization noise.

def _ref_forward(x_nchw, params, stride):
    def conv(x, w, s, pad):
        return jax.lax.conv_general_dilated(
            x.astype(jnp.bfloat16), w.astype(jnp.bfloat16),
            (s, s), ((pad, pad), (pad, pad)),
            dimension_numbers=("NCHW", "OIHW", "NCHW"),
            preferred_element_type=jnp.float32)

    def bn(x, g, b):
        mean = jnp.mean(x, axis=(0, 2, 3), keepdims=True)
        var = jnp.mean(jnp.square(x - mean), axis=(0, 2, 3), keepdims=True)
        return ((x - mean) * jax.lax.rsqrt(var + BN_EPS)
                * g.reshape(1, -1, 1, 1) + b.reshape(1, -1, 1, 1))

    left = jnp.maximum(bn(conv(x_nchw, params["w1"], stride, 1),
                          params["g1"], params["b1"]), 0.0)
    left = bn(conv(left, params["w2"], 1, 1), params["g2"], params["b2"])
    if stride != 1 or params["w1"].shape[1] != params["w1"].shape[0]:
        sc = bn(conv(x_nchw, params["ws"], stride, 0), params["gs"], params["bs"])
    else:
        sc = x_nchw
    return jnp.maximum(left + sc, 0.0)


# ---------------------------------- main ------------------------------------

if __name__ == "__main__":
    N, Cin, Cout, H, W, stride = 2, 4, 8, 16, 16, 2

    key = jax.random.PRNGKey(0)
    ks = jax.random.split(key, 10)
    params = {
        "w1": 0.1 * jax.random.normal(ks[0], (Cout, Cin, 3, 3), jnp.float32),
        "g1": 1.0 + 0.1 * jax.random.normal(ks[1], (Cout,), jnp.float32),
        "b1": 0.1 * jax.random.normal(ks[2], (Cout,), jnp.float32),
        "w2": 0.1 * jax.random.normal(ks[3], (Cout, Cout, 3, 3), jnp.float32),
        "g2": 1.0 + 0.1 * jax.random.normal(ks[4], (Cout,), jnp.float32),
        "b2": 0.1 * jax.random.normal(ks[5], (Cout,), jnp.float32),
        "ws": 0.1 * jax.random.normal(ks[6], (Cout, Cin, 1, 1), jnp.float32),
        "gs": 1.0 + 0.1 * jax.random.normal(ks[7], (Cout,), jnp.float32),
        "bs": 0.1 * jax.random.normal(ks[8], (Cout,), jnp.float32),
    }
    x = jax.random.normal(ks[9], (N, Cin, H, W), jnp.float32)

    # block_m=64 so the test exercises the multi-tile M reduction (Mt=2).
    fwd = jax.jit(functools.partial(residual_block_forward,
                                    stride=stride, block_m=64))
    out = jax.block_until_ready(fwd(x, params))
    ref = jax.block_until_ready(_ref_forward(x, params, stride))

    assert out.shape == (N, Cout, H // stride, W // stride), out.shape
    max_err = float(jnp.max(jnp.abs(out - ref)))
    assert jnp.allclose(out, ref, rtol=1e-2, atol=1e-2), max_err
    print("KERNEL_OK")
</pallas_src>

<mosaic_0001>
module attributes {stable_mosaic.version = 11 : i64} {
  func.func @_stats_kernel(%arg0: i32, %arg1: i32, %arg2: memref<64x36xbf16, #tpu.memory_space<vmem>>, %arg3: memref<36x128xbf16, #tpu.memory_space<vmem>>, %arg4: memref<1x128xf32, #tpu.memory_space<vmem>>, %arg5: memref<1x128xf32, #tpu.memory_space<vmem>>, %arg6: memref<1x128xf32, #tpu.memory_space<vmem>>, %arg7: memref<1x128xf32, #tpu.memory_space<vmem>>, %arg8: memref<1x128xf32, #tpu.memory_space<vmem>>, %arg9: memref<1x128xf32, #tpu.memory_space<vmem>>) attributes {dimension_semantics = [#tpu.dimension_semantics<parallel>, #tpu.dimension_semantics<arbitrary>], iteration_bounds = array<i64: 1, 2>, scalar_prefetch = 0 : i64, scratch_operands = 2 : i64, tpu.core_type = #tpu.core_type<tc>, window_params = [{transform_indices = @transform_0, window_bounds = array<i64: 64, 36>}, {transform_indices = @transform_1, window_bounds = array<i64: 36, 128>}, {transform_indices = @transform_2, window_bounds = array<i64: 1, 128>}, {transform_indices = @transform_3, window_bounds = array<i64: 1, 128>}, {transform_indices = @transform_4, window_bounds = array<i64: 1, 128>}, {transform_indices = @transform_5, window_bounds = array<i64: 1, 128>}]} {
    %c0_i32 = arith.constant 0 : i32
    %0 = arith.cmpi eq, %arg1, %c0_i32 : i32
    %1 = arith.extui %0 : i1 to i32
    %c0_i32_0 = arith.constant 0 : i32
    %2 = arith.cmpi ne, %1, %c0_i32_0 : i32
    scf.if %2 {
      %cst_15 = arith.constant 0.000000e+00 : f32
      %20 = vector.broadcast %cst_15 : f32 to vector<1x128xf32>
      %c0_16 = arith.constant 0 : index
      %c0_17 = arith.constant 0 : index
      %21 = vector.load %arg8[%c0_16, %c0_17] : memref<1x128xf32, #tpu.memory_space<vmem>>, vector<1x128xf32>
      tpu.vector_store %arg8[%c0_16, %c0_17], %20 {strides = array<i32>} : memref<1x128xf32, #tpu.memory_space<vmem>>, vector<1x128xf32>,
      %cst_18 = arith.constant 0.000000e+00 : f32
      %22 = vector.broadcast %cst_18 : f32 to vector<1x128xf32>
      %c0_19 = arith.constant 0 : index
      %c0_20 = arith.constant 0 : index
      %23 = vector.load %arg9[%c0_19, %c0_20] : memref<1x128xf32, #tpu.memory_space<vmem>>, vector<1x128xf32>
      tpu.vector_store %arg9[%c0_19, %c0_20], %22 {strides = array<i32>} : memref<1x128xf32, #tpu.memory_space<vmem>>, vector<1x128xf32>,
    } else {
    }
    %c0 = arith.constant 0 : index
    %c0_1 = arith.constant 0 : index
    %3 = vector.load %arg2[%c0, %c0_1] : memref<64x36xbf16, #tpu.memory_space<vmem>>, vector<64x36xbf16>
    %c0_2 = arith.constant 0 : index
    %c0_3 = arith.constant 0 : index
    %4 = vector.load %arg3[%c0_2, %c0_3] : memref<36x128xbf16, #tpu.memory_space<vmem>>, vector<36x128xbf16>
    %cst = arith.constant dense<0.000000e+00> : vector<64x128xf32>
    %5 = tpu.matmul %3, %4, %cst {dimension_numbers = #tpu.dot_dimension_numbers<[1], [0], [0], [1], [0, 0, 1, 1], [], []>} : vector<64x36xbf16>, vector<36x128xbf16>, vector<64x128xf32> -> vector<64x128xf32>
    %c0_4 = arith.constant 0 : index
    %c0_5 = arith.constant 0 : index
    %6 = vector.load %arg8[%c0_4, %c0_5] : memref<1x128xf32, #tpu.memory_space<vmem>>, vector<1x128xf32>
    %cst_6 = arith.constant dense<0.000000e+00> : vector<128xf32>
    %7 = vector.multi_reduction <add>, %5, %cst_6 [0] : vector<64x128xf32> to vector<128xf32>
    %8 = vector.shape_cast %7 : vector<128xf32> to vector<1x128xf32>
    %9 = arith.addf %6, %8 : vector<1x128xf32>
    %c0_7 = arith.constant 0 : index
    %c0_8 = arith.constant 0 : index
    %10 = vector.load %arg8[%c0_7, %c0_8] : memref<1x128xf32, #tpu.memory_space<vmem>>, vector<1x128xf32>
    tpu.vector_store %arg8[%c0_7, %c0_8], %9 {strides = array<i32>} : memref<1x128xf32, #tpu.memory_space<vmem>>, vector<1x128xf32>,
    %c0_9 = arith.constant 0 : index
    %c0_10 = arith.constant 0 : index
    %11 = vector.load %arg9[%c0_9, %c0_10] : memref<1x128xf32, #tpu.memory_space<vmem>>, vector<1x128xf32>
    %12 = arith.mulf %5, %5 : vector<64x128xf32>
    %cst_11 = arith.constant dense<0.000000e+00> : vector<128xf32>
    %13 = vector.multi_reduction <add>, %12, %cst_11 [0] : vector<64x128xf32> to vector<128xf32>
    %14 = vector.shape_cast %13 : vector<128xf32> to vector<1x128xf32>
    %15 = arith.addf %11, %14 : vector<1x128xf32>
    %c0_12 = arith.constant 0 : index
    %c0_13 = arith.constant 0 : index
    %16 = vector.load %arg9[%c0_12, %c0_13] : memref<1x128xf32, #tpu.memory_space<vmem>>, vector<1x128xf32>
    tpu.vector_store %arg9[%c0_12, %c0_13], %15 {strides = array<i32>} : memref<1x128xf32, #tpu.memory_space<vmem>>, vector<1x128xf32>,
    %c1_i32 = arith.constant 1 : i32
    %17 = arith.cmpi eq, %arg1, %c1_i32 : i32
    %18 = arith.extui %17 : i1 to i32
    %c0_i32_14 = arith.constant 0 : i32
    %19 = arith.cmpi ne, %18, %c0_i32_14 : i32
    scf.if %19 {
      %c0_15 = arith.constant 0 : index
      %c0_16 = arith.constant 0 : index
      %20 = vector.load %arg8[%c0_15, %c0_16] : memref<1x128xf32, #tpu.memory_space<vmem>>, vector<1x128xf32>
      %cst_17 = arith.constant 7.812500e-03 : f32
      %21 = vector.broadcast %cst_17 : f32 to vector<1x128xf32>
      %22 = arith.mulf %20, %21 : vector<1x128xf32>
      %c0_18 = arith.constant 0 : index
      %c0_19 = arith.constant 0 : index
      %23 = vector.load %arg9[%c0_18, %c0_19] : memref<1x128xf32, #tpu.memory_space<vmem>>, vector<1x128xf32>
      %cst_20 = arith.constant 7.812500e-03 : f32
      %24 = vector.broadcast %cst_20 : f32 to vector<1x128xf32>
      %25 = arith.mulf %23, %24 : vector<1x128xf32>
      %26 = arith.mulf %22, %22 : vector<1x128xf32>
      %27 = arith.subf %25, %26 : vector<1x128xf32>
      %cst_21 = arith.constant 0.000000e+00 : f32
      %28 = vector.broadcast %cst_21 : f32 to vector<1x128xf32>
      %29 = arith.maximumf %27, %28 : vector<1x128xf32>
      %c0_22 = arith.constant 0 : index
      %c0_23 = arith.constant 0 : index
      %30 = vector.load %arg4[%c0_22, %c0_23] : memref<1x128xf32, #tpu.memory_space<vmem>>, vector<1x128xf32>
      %cst_24 = arith.constant 9.99999974E-6 : f32
      %31 = vector.broadcast %cst_24 : f32 to vector<1x128xf32>
      %32 = arith.addf %29, %31 : vector<1x128xf32>
      %33 = math.rsqrt %32 : vector<1x128xf32>
      %34 = arith.mulf %30, %33 : vector<1x128xf32>
      %c0_25 = arith.constant 0 : index
      %c0_26 = arith.constant 0 : index
      %35 = vector.load %arg6[%c0_25, %c0_26] : memref<1x128xf32, #tpu.memory_space<vmem>>, vector<1x128xf32>
      tpu.vector_store %arg6[%c0_25, %c0_26], %34 {strides = array<i32>} : memref<1x128xf32, #tpu.memory_space<vmem>>, vector<1x128xf32>,
      %c0_27 = arith.constant 0 : index
      %c0_28 = arith.constant 0 : index
      %36 = vector.load %arg5[%c0_27, %c0_28] : memref<1x128xf32, #tpu.memory_space<vmem>>, vector<1x128xf32>
      %37 = arith.mulf %22, %34 : vector<1x128xf32>
      %38 = arith.subf %36, %37 : vector<1x128xf32>
      %c0_29 = arith.constant 0 : index
      %c0_30 = arith.constant 0 : index
      %39 = vector.load %arg7[%c0_29, %c0_30] : memref<1x128xf32, #tpu.memory_space<vmem>>, vector<1x128xf32>
      tpu.vector_store %arg7[%c0_29, %c0_30], %38 {strides = array<i32>} : memref<1x128xf32, #tpu.memory_space<vmem>>, vector<1x128xf32>,
    } else {
    }
    return
  }
  func.func @transform_0(%arg0: i32, %arg1: i32) -> (i32, i32) {
    %c0_i32 = arith.constant 0 : i32
    %c0_i32_0 = arith.constant 0 : i32
    return %arg1, %c0_i32 : i32, i32
  }
  func.func @transform_1(%arg0: i32, %arg1: i32) -> (i32, i32) {
    %c0_i32 = arith.constant 0 : i32
    %c0_i32_0 = arith.constant 0 : i32
    return %c0_i32, %arg0 : i32, i32
  }
  func.func @transform_2(%arg0: i32, %arg1: i32) -> (i32, i32) {
    %c0_i32 = arith.constant 0 : i32
    %c0_i32_0 = arith.constant 0 : i32
    return %c0_i32, %arg0 : i32, i32
  }
  func.func @transform_3(%arg0: i32, %arg1: i32) -> (i32, i32) {
    %c0_i32 = arith.constant 0 : i32
    %c0_i32_0 = arith.constant 0 : i32
    return %c0_i32, %arg0 : i32, i32
  }
  func.func @transform_4(%arg0: i32, %arg1: i32) -> (i32, i32) {
    %c0_i32 = arith.constant 0 : i32
    %c0_i32_0 = arith.constant 0 : i32
    return %c0_i32, %arg0 : i32, i32
  }
  func.func @transform_5(%arg0: i32, %arg1: i32) -> (i32, i32) {
    %c0_i32 = arith.constant 0 : i32
    %c0_i32_0 = arith.constant 0 : i32
    return %c0_i32, %arg0 : i32, i32
  }
}

module attributes {stable_mosaic.version = 11 : i64} {
  func.func @_apply_kernel(%arg0: i32, %arg1: i32, %arg2: memref<64x36xbf16, #tpu.memory_space<vmem>>, %arg3: memref<36x128xbf16, #tpu.memory_space<vmem>>, %arg4: memref<1x128xf32, #tpu.memory_space<vmem>>, %arg5: memref<1x128xf32, #tpu.memory_space<vmem>>, %arg6: memref<64x128xbf16, #tpu.memory_space<vmem>>) attributes {dimension_semantics = [#tpu.dimension_semantics<parallel>, #tpu.dimension_semantics<parallel>], iteration_bounds = array<i64: 1, 2>, scalar_prefetch = 0 : i64, scratch_operands = 0 : i64, tpu.core_type = #tpu.core_type<tc>, window_params = [{transform_indices = @transform_0, window_bounds = array<i64: 64, 36>}, {transform_indices = @transform_1, window_bounds = array<i64: 36, 128>}, {transform_indices = @transform_2, window_bounds = array<i64: 1, 128>}, {transform_indices = @transform_3, window_bounds = array<i64: 1, 128>}, {transform_indices = @transform_4, window_bounds = array<i64: 64, 128>}]} {
    %c0 = arith.constant 0 : index
    %c0_0 = arith.constant 0 : index
    %0 = vector.load %arg2[%c0, %c0_0] : memref<64x36xbf16, #tpu.memory_space<vmem>>, vector<64x36xbf16>
    %c0_1 = arith.constant 0 : index
    %c0_2 = arith.constant 0 : index
    %1 = vector.load %arg3[%c0_1, %c0_2] : memref<36x128xbf16, #tpu.memory_space<vmem>>, vector<36x128xbf16>
    %cst = arith.constant dense<0.000000e+00> : vector<64x128xf32>
    %2 = tpu.matmul %0, %1, %cst {dimension_numbers = #tpu.dot_dimension_numbers<[1], [0], [0], [1], [0, 0, 1, 1], [], []>} : vector<64x36xbf16>, vector<36x128xbf16>, vector<64x128xf32> -> vector<64x128xf32>
    %c0_3 = arith.constant 0 : index
    %c0_4 = arith.constant 0 : index
    %3 = vector.load %arg4[%c0_3, %c0_4] : memref<1x128xf32, #tpu.memory_space<vmem>>, vector<1x128xf32>
    %4 = vector.broadcast %3 : vector<1x128xf32> to vector<64x128xf32>
    %5 = arith.mulf %2, %4 : vector<64x128xf32>
    %c0_5 = arith.constant 0 : index
    %c0_6 = arith.constant 0 : index
    %6 = vector.load %arg5[%c0_5, %c0_6] : memref<1x128xf32, #tpu.memory_space<vmem>>, vector<1x128xf32>
    %7 = vector.broadcast %6 : vector<1x128xf32> to vector<64x128xf32>
    %8 = arith.addf %5, %7 : vector<64x128xf32>
    %cst_7 = arith.constant 0.000000e+00 : f32
    %9 = vector.broadcast %cst_7 : f32 to vector<64x128xf32>
    %10 = arith.maximumf %8, %9 : vector<64x128xf32>
    %11 = arith.truncf %10 : vector<64x128xf32> to vector<64x128xbf16>
    %c0_8 = arith.constant 0 : index
    %c0_9 = arith.constant 0 : index
    %12 = vector.load %arg6[%c0_8, %c0_9] : memref<64x128xbf16, #tpu.memory_space<vmem>>, vector<64x128xbf16>
    tpu.vector_store %arg6[%c0_8, %c0_9], %11 {strides = array<i32>} : memref<64x128xbf16, #tpu.memory_space<vmem>>, vector<64x128xbf16>,
    return
  }
  func.func @transform_0(%arg0: i32, %arg1: i32) -> (i32, i32) {
    %c0_i32 = arith.constant 0 : i32
    %c0_i32_0 = arith.constant 0 : i32
    return %arg1, %c0_i32 : i32, i32
  }
  func.func @transform_1(%arg0: i32, %arg1: i32) -> (i32, i32) {
    %c0_i32 = arith.constant 0 : i32
    %c0_i32_0 = arith.constant 0 : i32
    return %c0_i32, %arg0 : i32, i32
  }
  func.func @transform_2(%arg0: i32, %arg1: i32) -> (i32, i32) {
    %c0_i32 = arith.constant 0 : i32
    %c0_i32_0 = arith.constant 0 : i32
    return %c0_i32, %arg0 : i32, i32
  }
  func.func @transform_3(%arg0: i32, %arg1: i32) -> (i32, i32) {
    %c0_i32 = arith.constant 0 : i32
    %c0_i32_0 = arith.constant 0 : i32
    return %c0_i32, %arg0 : i32, i32
  }
  func.func @transform_4(%arg0: i32, %arg1: i32) -> (i32, i32) {
    %c0_i32 = arith.constant 0 : i32
    return %arg1, %arg0 : i32, i32
  }
}

module attributes {stable_mosaic.version = 11 : i64} {
  func.func @_stats_kernel(%arg0: i32, %arg1: i32, %arg2: memref<64x72xbf16, #tpu.memory_space<vmem>>, %arg3: memref<72x128xbf16, #tpu.memory_space<vmem>>, %arg4: memref<1x128xf32, #tpu.memory_space<vmem>>, %arg5: memref<1x128xf32, #tpu.memory_space<vmem>>, %arg6: memref<1x128xf32, #tpu.memory_space<vmem>>, %arg7: memref<1x128xf32, #tpu.memory_space<vmem>>, %arg8: memref<1x128xf32, #tpu.memory_space<vmem>>, %arg9: memref<1x128xf32, #tpu.memory_space<vmem>>) attributes {dimension_semantics = [#tpu.dimension_semantics<parallel>, #tpu.dimension_semantics<arbitrary>], iteration_bounds = array<i64: 1, 2>, scalar_prefetch = 0 : i64, scratch_operands = 2 : i64, tpu.core_type = #tpu.core_type<tc>, window_params = [{transform_indices = @transform_0, window_bounds = array<i64: 64, 72>}, {transform_indices = @transform_1, window_bounds = array<i64: 72, 128>}, {transform_indices = @transform_2, window_bounds = array<i64: 1, 128>}, {transform_indices = @transform_3, window_bounds = array<i64: 1, 128>}, {transform_indices = @transform_4, window_bounds = array<i64: 1, 128>}, {transform_indices = @transform_5, window_bounds = array<i64: 1, 128>}]} {
    %c0_i32 = arith.constant 0 : i32
    %0 = arith.cmpi eq, %arg1, %c0_i32 : i32
    %1 = arith.extui %0 : i1 to i32
    %c0_i32_0 = arith.constant 0 : i32
    %2 = arith.cmpi ne, %1, %c0_i32_0 : i32
    scf.if %2 {
      %cst_15 = arith.constant 0.000000e+00 : f32
      %20 = vector.broadcast %cst_15 : f32 to vector<1x128xf32>
      %c0_16 = arith.constant 0 : index
      %c0_17 = arith.constant 0 : index
      %21 = vector.load %arg8[%c0_16, %c0_17] : memref<1x128xf32, #tpu.memory_space<vmem>>, vector<1x128xf32>
      tpu.vector_store %arg8[%c0_16, %c0_17], %20 {strides = array<i32>} : memref<1x128xf32, #tpu.memory_space<vmem>>, vector<1x128xf32>,
      %cst_18 = arith.constant 0.000000e+00 : f32
      %22 = vector.broadcast %cst_18 : f32 to vector<1x128xf32>
      %c0_19 = arith.constant 0 : index
      %c0_20 = arith.constant 0 : index
      %23 = vector.load %arg9[%c0_19, %c0_20] : memref<1x128xf32, #tpu.memory_space<vmem>>, vector<1x128xf32>
      tpu.vector_store %arg9[%c0_19, %c0_20], %22 {strides = array<i32>} : memref<1x128xf32, #tpu.memory_space<vmem>>, vector<1x128xf32>,
    } else {
    }
    %c0 = arith.constant 0 : index
    %c0_1 = arith.constant 0 : index
    %3 = vector.load %arg2[%c0, %c0_1] : memref<64x72xbf16, #tpu.memory_space<vmem>>, vector<64x72xbf16>
    %c0_2 = arith.constant 0 : index
    %c0_3 = arith.constant 0 : index
    %4 = vector.load %arg3[%c0_2, %c0_3] : memref<72x128xbf16, #tpu.memory_space<vmem>>, vector<72x128xbf16>
    %cst = arith.constant dense<0.000000e+00> : vector<64x128xf32>
    %5 = tpu.matmul %3, %4, %cst {dimension_numbers = #tpu.dot_dimension_numbers<[1], [0], [0], [1], [0, 0, 1, 1], [], []>} : vector<64x72xbf16>, vector<72x128xbf16>, vector<64x128xf32> -> vector<64x128xf32>
    %c0_4 = arith.constant 0 : index
    %c0_5 = arith.constant 0 : index
    %6 = vector.load %arg8[%c0_4, %c0_5] : memref<1x128xf32, #tpu.memory_space<vmem>>, vector<1x128xf32>
    %cst_6 = arith.constant dense<0.000000e+00> : vector<128xf32>
    %7 = vector.multi_reduction <add>, %5, %cst_6 [0] : vector<64x128xf32> to vector<128xf32>
    %8 = vector.shape_cast %7 : vector<128xf32> to vector<1x128xf32>
    %9 = arith.addf %6, %8 : vector<1x128xf32>
    %c0_7 = arith.constant 0 : index
    %c0_8 = arith.constant 0 : index
    %10 = vector.load %arg8[%c0_7, %c0_8] : memref<1x128xf32, #tpu.memory_space<vmem>>, vector<1x128xf32>
    tpu.vector_store %arg8[%c0_7, %c0_8], %9 {strides = array<i32>} : memref<1x128xf32, #tpu.memory_space<vmem>>, vector<1x128xf32>,
    %c0_9 = arith.constant 0 : index
    %c0_10 = arith.constant 0 : index
    %11 = vector.load %arg9[%c0_9, %c0_10] : memref<1x128xf32, #tpu.memory_space<vmem>>, vector<1x128xf32>
    %12 = arith.mulf %5, %5 : vector<64x128xf32>
    %cst_11 = arith.constant dense<0.000000e+00> : vector<128xf32>
    %13 = vector.multi_reduction <add>, %12, %cst_11 [0] : vector<64x128xf32> to vector<128xf32>
    %14 = vector.shape_cast %13 : vector<128xf32> to vector<1x128xf32>
    %15 = arith.addf %11, %14 : vector<1x128xf32>
    %c0_12 = arith.constant 0 : index
    %c0_13 = arith.constant 0 : index
    %16 = vector.load %arg9[%c0_12, %c0_13] : memref<1x128xf32, #tpu.memory_space<vmem>>, vector<1x128xf32>
    tpu.vector_store %arg9[%c0_12, %c0_13], %15 {strides = array<i32>} : memref<1x128xf32, #tpu.memory_space<vmem>>, vector<1x128xf32>,
    %c1_i32 = arith.constant 1 : i32
    %17 = arith.cmpi eq, %arg1, %c1_i32 : i32
    %18 = arith.extui %17 : i1 to i32
    %c0_i32_14 = arith.constant 0 : i32
    %19 = arith.cmpi ne, %18, %c0_i32_14 : i32
    scf.if %19 {
      %c0_15 = arith.constant 0 : index
      %c0_16 = arith.constant 0 : index
      %20 = vector.load %arg8[%c0_15, %c0_16] : memref<1x128xf32, #tpu.memory_space<vmem>>, vector<1x128xf32>
      %cst_17 = arith.constant 7.812500e-03 : f32
      %21 = vector.broadcast %cst_17 : f32 to vector<1x128xf32>
      %22 = arith.mulf %20, %21 : vector<1x128xf32>
      %c0_18 = arith.constant 0 : index
      %c0_19 = arith.constant 0 : index
      %23 = vector.load %arg9[%c0_18, %c0_19] : memref<1x128xf32, #tpu.memory_space<vmem>>, vector<1x128xf32>
      %cst_20 = arith.constant 7.812500e-03 : f32
      %24 = vector.broadcast %cst_20 : f32 to vector<1x128xf32>
      %25 = arith.mulf %23, %24 : vector<1x128xf32>
      %26 = arith.mulf %22, %22 : vector<1x128xf32>
      %27 = arith.subf %25, %26 : vector<1x128xf32>
      %cst_21 = arith.constant 0.000000e+00 : f32
      %28 = vector.broadcast %cst_21 : f32 to vector<1x128xf32>
      %29 = arith.maximumf %27, %28 : vector<1x128xf32>
      %c0_22 = arith.constant 0 : index
      %c0_23 = arith.constant 0 : index
      %30 = vector.load %arg4[%c0_22, %c0_23] : memref<1x128xf32, #tpu.memory_space<vmem>>, vector<1x128xf32>
      %cst_24 = arith.constant 9.99999974E-6 : f32
      %31 = vector.broadcast %cst_24 : f32 to vector<1x128xf32>
      %32 = arith.addf %29, %31 : vector<1x128xf32>
      %33 = math.rsqrt %32 : vector<1x128xf32>
      %34 = arith.mulf %30, %33 : vector<1x128xf32>
      %c0_25 = arith.constant 0 : index
      %c0_26 = arith.constant 0 : index
      %35 = vector.load %arg6[%c0_25, %c0_26] : memref<1x128xf32, #tpu.memory_space<vmem>>, vector<1x128xf32>
      tpu.vector_store %arg6[%c0_25, %c0_26], %34 {strides = array<i32>} : memref<1x128xf32, #tpu.memory_space<vmem>>, vector<1x128xf32>,
      %c0_27 = arith.constant 0 : index
      %c0_28 = arith.constant 0 : index
      %36 = vector.load %arg5[%c0_27, %c0_28] : memref<1x128xf32, #tpu.memory_space<vmem>>, vector<1x128xf32>
      %37 = arith.mulf %22, %34 : vector<1x128xf32>
      %38 = arith.subf %36, %37 : vector<1x128xf32>
      %c0_29 = arith.constant 0 : index
      %c0_30 = arith.constant 0 : index
      %39 = vector.load %arg7[%c0_29, %c0_30] : memref<1x128xf32, #tpu.memory_space<vmem>>, vector<1x128xf32>
      tpu.vector_store %arg7[%c0_29, %c0_30], %38 {strides = array<i32>} : memref<1x128xf32, #tpu.memory_space<vmem>>, vector<1x128xf32>,
    } else {
    }
    return
  }
  func.func @transform_0(%arg0: i32, %arg1: i32) -> (i32, i32) {
    %c0_i32 = arith.constant 0 : i32
    %c0_i32_0 = arith.constant 0 : i32
    return %arg1, %c0_i32 : i32, i32
  }
  func.func @transform_1(%arg0: i32, %arg1: i32) -> (i32, i32) {
    %c0_i32 = arith.constant 0 : i32
    %c0_i32_0 = arith.constant 0 : i32
    return %c0_i32, %arg0 : i32, i32
  }
  func.func @transform_2(%arg0: i32, %arg1: i32) -> (i32, i32) {
    %c0_i32 = arith.constant 0 : i32
    %c0_i32_0 = arith.constant 0 : i32
    return %c0_i32, %arg0 : i32, i32
  }
  func.func @transform_3(%arg0: i32, %arg1: i32) -> (i32, i32) {
    %c0_i32 = arith.constant 0 : i32
    %c0_i32_0 = arith.constant 0 : i32
    return %c0_i32, %arg0 : i32, i32
  }
  func.func @transform_4(%arg0: i32, %arg1: i32) -> (i32, i32) {
    %c0_i32 = arith.constant 0 : i32
    %c0_i32_0 = arith.constant 0 : i32
    return %c0_i32, %arg0 : i32, i32
  }
  func.func @transform_5(%arg0: i32, %arg1: i32) -> (i32, i32) {
    %c0_i32 = arith.constant 0 : i32
    %c0_i32_0 = arith.constant 0 : i32
    return %c0_i32, %arg0 : i32, i32
  }
}

module attributes {stable_mosaic.version = 11 : i64} {
  func.func @_apply_kernel(%arg0: i32, %arg1: i32, %arg2: memref<64x4xbf16, #tpu.memory_space<vmem>>, %arg3: memref<4x128xbf16, #tpu.memory_space<vmem>>, %arg4: memref<1x128xf32, #tpu.memory_space<vmem>>, %arg5: memref<1x128xf32, #tpu.memory_space<vmem>>, %arg6: memref<64x128xf32, #tpu.memory_space<vmem>>) attributes {dimension_semantics = [#tpu.dimension_semantics<parallel>, #tpu.dimension_semantics<parallel>], iteration_bounds = array<i64: 1, 2>, scalar_prefetch = 0 : i64, scratch_operands = 0 : i64, tpu.core_type = #tpu.core_type<tc>, window_params = [{transform_indices = @transform_0, window_bounds = array<i64: 64, 4>}, {transform_indices = @transform_1, window_bounds = array<i64: 4, 128>}, {transform_indices = @transform_2, window_bounds = array<i64: 1, 128>}, {transform_indices = @transform_3, window_bounds = array<i64: 1, 128>}, {transform_indices = @transform_4, window_bounds = array<i64: 64, 128>}]} {
    %c0 = arith.constant 0 : index
    %c0_0 = arith.constant 0 : index
    %0 = vector.load %arg2[%c0, %c0_0] : memref<64x4xbf16, #tpu.memory_space<vmem>>, vector<64x4xbf16>
    %c0_1 = arith.constant 0 : index
    %c0_2 = arith.constant 0 : index
    %1 = vector.load %arg3[%c0_1, %c0_2] : memref<4x128xbf16, #tpu.memory_space<vmem>>, vector<4x128xbf16>
    %cst = arith.constant dense<0.000000e+00> : vector<64x128xf32>
    %2 = tpu.matmul %0, %1, %cst {dimension_numbers = #tpu.dot_dimension_numbers<[1], [0], [0], [1], [0, 0, 1, 1], [], []>} : vector<64x4xbf16>, vector<4x128xbf16>, vector<64x128xf32> -> vector<64x128xf32>
    %c0_3 = arith.constant 0 : index
    %c0_4 = arith.constant 0 : index
    %3 = vector.load %arg4[%c0_3, %c0_4] : memref<1x128xf32, #tpu.memory_space<vmem>>, vector<1x128xf32>
    %4 = vector.broadcast %3 : vector<1x128xf32> to vector<64x128xf32>
    %5 = arith.mulf %2, %4 : vector<64x128xf32>
    %c0_5 = arith.constant 0 : index
    %c0_6 = arith.constant 0 : index
    %6 = vector.load %arg5[%c0_5, %c0_6] : memref<1x128xf32, #tpu.memory_space<vmem>>, vector<1x128xf32>
    %7 = vector.broadcast %6 : vector<1x128xf32> to vector<64x128xf32>
    %8 = arith.addf %5, %7 : vector<64x128xf32>
    %c0_7 = arith.constant 0 : index
    %c0_8 = arith.constant 0 : index
    %9 = vector.load %arg6[%c0_7, %c0_8] : memref<64x128xf32, #tpu.memory_space<vmem>>, vector<64x128xf32>
    tpu.vector_store %arg6[%c0_7, %c0_8], %8 {strides = array<i32>} : memref<64x128xf32, #tpu.memory_space<vmem>>, vector<64x128xf32>,
    return
  }
  func.func @transform_0(%arg0: i32, %arg1: i32) -> (i32, i32) {
    %c0_i32 = arith.constant 0 : i32
    %c0_i32_0 = arith.constant 0 : i32
    return %arg1, %c0_i32 : i32, i32
  }
  func.func @transform_1(%arg0: i32, %arg1: i32) -> (i32, i32) {
    %c0_i32 = arith.constant 0 : i32
    %c0_i32_0 = arith.constant 0 : i32
    return %c0_i32, %arg0 : i32, i32
  }
  func.func @transform_2(%arg0: i32, %arg1: i32) -> (i32, i32) {
    %c0_i32 = arith.constant 0 : i32
    %c0_i32_0 = arith.constant 0 : i32
    return %c0_i32, %arg0 : i32, i32
  }
  func.func @transform_3(%arg0: i32, %arg1: i32) -> (i32, i32) {
    %c0_i32 = arith.constant 0 : i32
    %c0_i32_0 = arith.constant 0 : i32
    return %c0_i32, %arg0 : i32, i32
  }
  func.func @transform_4(%arg0: i32, %arg1: i32) -> (i32, i32) {
    %c0_i32 = arith.constant 0 : i32
    return %arg1, %arg0 : i32, i32
  }
}

module attributes {stable_mosaic.version = 11 : i64} {
  func.func @_apply_add_relu_kernel(%arg0: i32, %arg1: i32, %arg2: memref<64x72xbf16, #tpu.memory_space<vmem>>, %arg3: memref<72x128xbf16, #tpu.memory_space<vmem>>, %arg4: memref<1x128xf32, #tpu.memory_space<vmem>>, %arg5: memref<1x128xf32, #tpu.memory_space<vmem>>, %arg6: memref<64x128xf32, #tpu.memory_space<vmem>>, %arg7: memref<64x128xf32, #tpu.memory_space<vmem>>) attributes {dimension_semantics = [#tpu.dimension_semantics<parallel>, #tpu.dimension_semantics<parallel>], iteration_bounds = array<i64: 1, 2>, scalar_prefetch = 0 : i64, scratch_operands = 0 : i64, tpu.core_type = #tpu.core_type<tc>, window_params = [{transform_indices = @transform_0, window_bounds = array<i64: 64, 72>}, {transform_indices = @transform_1, window_bounds = array<i64: 72, 128>}, {transform_indices = @transform_2, window_bounds = array<i64: 1, 128>}, {transform_indices = @transform_3, window_bounds = array<i64: 1, 128>}, {transform_indices = @transform_4, window_bounds = array<i64: 64, 128>}, {transform_indices = @transform_5, window_bounds = array<i64: 64, 128>}]} {
    %c0 = arith.constant 0 : index
    %c0_0 = arith.constant 0 : index
    %0 = vector.load %arg2[%c0, %c0_0] : memref<64x72xbf16, #tpu.memory_space<vmem>>, vector<64x72xbf16>
    %c0_1 = arith.constant 0 : index
    %c0_2 = arith.constant 0 : index
    %1 = vector.load %arg3[%c0_1, %c0_2] : memref<72x128xbf16, #tpu.memory_space<vmem>>, vector<72x128xbf16>
    %cst = arith.constant dense<0.000000e+00> : vector<64x128xf32>
    %2 = tpu.matmul %0, %1, %cst {dimension_numbers = #tpu.dot_dimension_numbers<[1], [0], [0], [1], [0, 0, 1, 1], [], []>} : vector<64x72xbf16>, vector<72x128xbf16>, vector<64x128xf32> -> vector<64x128xf32>
    %c0_3 = arith.constant 0 : index
    %c0_4 = arith.constant 0 : index
    %3 = vector.load %arg4[%c0_3, %c0_4] : memref<1x128xf32, #tpu.memory_space<vmem>>, vector<1x128xf32>
    %4 = vector.broadcast %3 : vector<1x128xf32> to vector<64x128xf32>
    %5 = arith.mulf %2, %4 : vector<64x128xf32>
    %c0_5 = arith.constant 0 : index
    %c0_6 = arith.constant 0 : index
    %6 = vector.load %arg5[%c0_5, %c0_6] : memref<1x128xf32, #tpu.memory_space<vmem>>, vector<1x128xf32>
    %7 = vector.broadcast %6 : vector<1x128xf32> to vector<64x128xf32>
    %8 = arith.addf %5, %7 : vector<64x128xf32>
    %c0_7 = arith.constant 0 : index
    %c0_8 = arith.constant 0 : index
    %9 = vector.load %arg6[%c0_7, %c0_8] : memref<64x128xf32, #tpu.memory_space<vmem>>, vector<64x128xf32>
    %10 = arith.addf %8, %9 : vector<64x128xf32>
    %cst_9 = arith.constant 0.000000e+00 : f32
    %11 = vector.broadcast %cst_9 : f32 to vector<64x128xf32>
    %12 = arith.maximumf %10, %11 : vector<64x128xf32>
    %c0_10 = arith.constant 0 : index
    %c0_11 = arith.constant 0 : index
    %13 = vector.load %arg7[%c0_10, %c0_11] : memref<64x128xf32, #tpu.memory_space<vmem>>, vector<64x128xf32>
    tpu.vector_store %arg7[%c0_10, %c0_11], %12 {strides = array<i32>} : memref<64x128xf32, #tpu.memory_space<vmem>>, vector<64x128xf32>,
    return
  }
  func.func @transform_0(%arg0: i32, %arg1: i32) -> (i32, i32) {
    %c0_i32 = arith.constant 0 : i32
    %c0_i32_0 = arith.constant 0 : i32
    return %arg1, %c0_i32 : i32, i32
  }
  func.func @transform_1(%arg0: i32, %arg1: i32) -> (i32, i32) {
    %c0_i32 = arith.constant 0 : i32
    %c0_i32_0 = arith.constant 0 : i32
    return %c0_i32, %arg0 : i32, i32
  }
  func.func @transform_2(%arg0: i32, %arg1: i32) -> (i32, i32) {
    %c0_i32 = arith.constant 0 : i32
    %c0_i32_0 = arith.constant 0 : i32
    return %c0_i32, %arg0 : i32, i32
  }
  func.func @transform_3(%arg0: i32, %arg1: i32) -> (i32, i32) {
    %c0_i32 = arith.constant 0 : i32
    %c0_i32_0 = arith.constant 0 : i32
    return %c0_i32, %arg0 : i32, i32
  }
  func.func @transform_4(%arg0: i32, %arg1: i32) -> (i32, i32) {
    %c0_i32 = arith.constant 0 : i32
    return %arg1, %arg0 : i32, i32
  }
  func.func @transform_5(%arg0: i32, %arg1: i32) -> (i32, i32) {
    %c0_i32 = arith.constant 0 : i32
    return %arg1, %arg0 : i32, i32
  }
}

module attributes {stable_mosaic.version = 11 : i64} {
  func.func @_stats_kernel(%arg0: i32, %arg1: i32, %arg2: memref<64x4xbf16, #tpu.memory_space<vmem>>, %arg3: memref<4x128xbf16, #tpu.memory_space<vmem>>, %arg4: memref<1x128xf32, #tpu.memory_space<vmem>>, %arg5: memref<1x128xf32, #tpu.memory_space<vmem>>, %arg6: memref<1x128xf32, #tpu.memory_space<vmem>>, %arg7: memref<1x128xf32, #tpu.memory_space<vmem>>, %arg8: memref<1x128xf32, #tpu.memory_space<vmem>>, %arg9: memref<1x128xf32, #tpu.memory_space<vmem>>) attributes {dimension_semantics = [#tpu.dimension_semantics<parallel>, #tpu.dimension_semantics<arbitrary>], iteration_bounds = array<i64: 1, 2>, scalar_prefetch = 0 : i64, scratch_operands = 2 : i64, tpu.core_type = #tpu.core_type<tc>, window_params = [{transform_indices = @transform_0, window_bounds = array<i64: 64, 4>}, {transform_indices = @transform_1, window_bounds = array<i64: 4, 128>}, {transform_indices = @transform_2, window_bounds = array<i64: 1, 128>}, {transform_indices = @transform_3, window_bounds = array<i64: 1, 128>}, {transform_indices = @transform_4, window_bounds = array<i64: 1, 128>}, {transform_indices = @transform_5, window_bounds = array<i64: 1, 128>}]} {
    %c0_i32 = arith.constant 0 : i32
    %0 = arith.cmpi eq, %arg1, %c0_i32 : i32
    %1 = arith.extui %0 : i1 to i32
    %c0_i32_0 = arith.constant 0 : i32
    %2 = arith.cmpi ne, %1, %c0_i32_0 : i32
    scf.if %2 {
      %cst_15 = arith.constant 0.000000e+00 : f32
      %20 = vector.broadcast %cst_15 : f32 to vector<1x128xf32>
      %c0_16 = arith.constant 0 : index
      %c0_17 = arith.constant 0 : index
      %21 = vector.load %arg8[%c0_16, %c0_17] : memref<1x128xf32, #tpu.memory_space<vmem>>, vector<1x128xf32>
      tpu.vector_store %arg8[%c0_16, %c0_17], %20 {strides = array<i32>} : memref<1x128xf32, #tpu.memory_space<vmem>>, vector<1x128xf32>,
      %cst_18 = arith.constant 0.000000e+00 : f32
      %22 = vector.broadcast %cst_18 : f32 to vector<1x128xf32>
      %c0_19 = arith.constant 0 : index
      %c0_20 = arith.constant 0 : index
      %23 = vector.load %arg9[%c0_19, %c0_20] : memref<1x128xf32, #tpu.memory_space<vmem>>, vector<1x128xf32>
      tpu.vector_store %arg9[%c0_19, %c0_20], %22 {strides = array<i32>} : memref<1x128xf32, #tpu.memory_space<vmem>>, vector<1x128xf32>,
    } else {
    }
    %c0 = arith.constant 0 : index
    %c0_1 = arith.constant 0 : index
    %3 = vector.load %arg2[%c0, %c0_1] : memref<64x4xbf16, #tpu.memory_space<vmem>>, vector<64x4xbf16>
    %c0_2 = arith.constant 0 : index
    %c0_3 = arith.constant 0 : index
    %4 = vector.load %arg3[%c0_2, %c0_3] : memref<4x128xbf16, #tpu.memory_space<vmem>>, vector<4x128xbf16>
    %cst = arith.constant dense<0.000000e+00> : vector<64x128xf32>
    %5 = tpu.matmul %3, %4, %cst {dimension_numbers = #tpu.dot_dimension_numbers<[1], [0], [0], [1], [0, 0, 1, 1], [], []>} : vector<64x4xbf16>, vector<4x128xbf16>, vector<64x128xf32> -> vector<64x128xf32>
    %c0_4 = arith.constant 0 : index
    %c0_5 = arith.constant 0 : index
    %6 = vector.load %arg8[%c0_4, %c0_5] : memref<1x128xf32, #tpu.memory_space<vmem>>, vector<1x128xf32>
    %cst_6 = arith.constant dense<0.000000e+00> : vector<128xf32>
    %7 = vector.multi_reduction <add>, %5, %cst_6 [0] : vector<64x128xf32> to vector<128xf32>
    %8 = vector.shape_cast %7 : vector<128xf32> to vector<1x128xf32>
    %9 = arith.addf %6, %8 : vector<1x128xf32>
    %c0_7 = arith.constant 0 : index
    %c0_8 = arith.constant 0 : index
    %10 = vector.load %arg8[%c0_7, %c0_8] : memref<1x128xf32, #tpu.memory_space<vmem>>, vector<1x128xf32>
    tpu.vector_store %arg8[%c0_7, %c0_8], %9 {strides = array<i32>} : memref<1x128xf32, #tpu.memory_space<vmem>>, vector<1x128xf32>,
    %c0_9 = arith.constant 0 : index
    %c0_10 = arith.constant 0 : index
    %11 = vector.load %arg9[%c0_9, %c0_10] : memref<1x128xf32, #tpu.memory_space<vmem>>, vector<1x128xf32>
    %12 = arith.mulf %5, %5 : vector<64x128xf32>
    %cst_11 = arith.constant dense<0.000000e+00> : vector<128xf32>
    %13 = vector.multi_reduction <add>, %12, %cst_11 [0] : vector<64x128xf32> to vector<128xf32>
    %14 = vector.shape_cast %13 : vector<128xf32> to vector<1x128xf32>
    %15 = arith.addf %11, %14 : vector<1x128xf32>
    %c0_12 = arith.constant 0 : index
    %c0_13 = arith.constant 0 : index
    %16 = vector.load %arg9[%c0_12, %c0_13] : memref<1x128xf32, #tpu.memory_space<vmem>>, vector<1x128xf32>
    tpu.vector_store %arg9[%c0_12, %c0_13], %15 {strides = array<i32>} : memref<1x128xf32, #tpu.memory_space<vmem>>, vector<1x128xf32>,
    %c1_i32 = arith.constant 1 : i32
    %17 = arith.cmpi eq, %arg1, %c1_i32 : i32
    %18 = arith.extui %17 : i1 to i32
    %c0_i32_14 = arith.constant 0 : i32
    %19 = arith.cmpi ne, %18, %c0_i32_14 : i32
    scf.if %19 {
      %c0_15 = arith.constant 0 : index
      %c0_16 = arith.constant 0 : index
      %20 = vector.load %arg8[%c0_15, %c0_16] : memref<1x128xf32, #tpu.memory_space<vmem>>, vector<1x128xf32>
      %cst_17 = arith.constant 7.812500e-03 : f32
      %21 = vector.broadcast %cst_17 : f32 to vector<1x128xf32>
      %22 = arith.mulf %20, %21 : vector<1x128xf32>
      %c0_18 = arith.constant 0 : index
      %c0_19 = arith.constant 0 : index
      %23 = vector.load %arg9[%c0_18, %c0_19] : memref<1x128xf32, #tpu.memory_space<vmem>>, vector<1x128xf32>
      %cst_20 = arith.constant 7.812500e-03 : f32
      %24 = vector.broadcast %cst_20 : f32 to vector<1x128xf32>
      %25 = arith.mulf %23, %24 : vector<1x128xf32>
      %26 = arith.mulf %22, %22 : vector<1x128xf32>
      %27 = arith.subf %25, %26 : vector<1x128xf32>
      %cst_21 = arith.constant 0.000000e+00 : f32
      %28 = vector.broadcast %cst_21 : f32 to vector<1x128xf32>
      %29 = arith.maximumf %27, %28 : vector<1x128xf32>
      %c0_22 = arith.constant 0 : index
      %c0_23 = arith.constant 0 : index
      %30 = vector.load %arg4[%c0_22, %c0_23] : memref<1x128xf32, #tpu.memory_space<vmem>>, vector<1x128xf32>
      %cst_24 = arith.constant 9.99999974E-6 : f32
      %31 = vector.broadcast %cst_24 : f32 to vector<1x128xf32>
      %32 = arith.addf %29, %31 : vector<1x128xf32>
      %33 = math.rsqrt %32 : vector<1x128xf32>
      %34 = arith.mulf %30, %33 : vector<1x128xf32>
      %c0_25 = arith.constant 0 : index
      %c0_26 = arith.constant 0 : index
      %35 = vector.load %arg6[%c0_25, %c0_26] : memref<1x128xf32, #tpu.memory_space<vmem>>, vector<1x128xf32>
      tpu.vector_store %arg6[%c0_25, %c0_26], %34 {strides = array<i32>} : memref<1x128xf32, #tpu.memory_space<vmem>>, vector<1x128xf32>,
      %c0_27 = arith.constant 0 : index
      %c0_28 = arith.constant 0 : index
      %36 = vector.load %arg5[%c0_27, %c0_28] : memref<1x128xf32, #tpu.memory_space<vmem>>, vector<1x128xf32>
      %37 = arith.mulf %22, %34 : vector<1x128xf32>
      %38 = arith.subf %36, %37 : vector<1x128xf32>
      %c0_29 = arith.constant 0 : index
      %c0_30 = arith.constant 0 : index
      %39 = vector.load %arg7[%c0_29, %c0_30] : memref<1x128xf32, #tpu.memory_space<vmem>>, vector<1x128xf32>
      tpu.vector_store %arg7[%c0_29, %c0_30], %38 {strides = array<i32>} : memref<1x128xf32, #tpu.memory_space<vmem>>, vector<1x128xf32>,
    } else {
    }
    return
  }
  func.func @transform_0(%arg0: i32, %arg1: i32) -> (i32, i32) {
    %c0_i32 = arith.constant 0 : i32
    %c0_i32_0 = arith.constant 0 : i32
    return %arg1, %c0_i32 : i32, i32
  }
  func.func @transform_1(%arg0: i32, %arg1: i32) -> (i32, i32) {
    %c0_i32 = arith.constant 0 : i32
    %c0_i32_0 = arith.constant 0 : i32
    return %c0_i32, %arg0 : i32, i32
  }
  func.func @transform_2(%arg0: i32, %arg1: i32) -> (i32, i32) {
    %c0_i32 = arith.constant 0 : i32
    %c0_i32_0 = arith.constant 0 : i32
    return %c0_i32, %arg0 : i32, i32
  }
  func.func @transform_3(%arg0: i32, %arg1: i32) -> (i32, i32) {
    %c0_i32 = arith.constant 0 : i32
    %c0_i32_0 = arith.constant 0 : i32
    return %c0_i32, %arg0 : i32, i32
  }
  func.func @transform_4(%arg0: i32, %arg1: i32) -> (i32, i32) {
    %c0_i32 = arith.constant 0 : i32
    %c0_i32_0 = arith.constant 0 : i32
    return %c0_i32, %arg0 : i32, i32
  }
  func.func @transform_5(%arg0: i32, %arg1: i32) -> (i32, i32) {
    %c0_i32 = arith.constant 0 : i32
    %c0_i32_0 = arith.constant 0 : i32
    return %c0_i32, %arg0 : i32, i32
  }
}

</mosaic_0001>

<llo_original>
// kernel: residual_block_forward.7
$region0: #{residual_block_forward.7}
  #allocation0 [shape = 'u32[]', space=smem, size = 0x4, offset = 0x4, fixed_abs, tag = 'smem constant byte address 0x4 - core index']
  #allocation1 [shape = 'u32[72,128]{1,0:T(1,128)}', space=vmem, size = 0x9000, scoped, tag = 'internal scratch']
  %s0 = inlined_call_operand.vmem [shape: bf16[128,36], index: 0, kind: input, shape index: {}]
  %s1 = inlined_call_operand.vmem [shape: bf16[36,128], index: 1, kind: input, shape index: {}]
  %s2 = inlined_call_operand.vmem [shape: f32[1,128], index: 2, kind: input, shape index: {}]
  %s3 = inlined_call_operand.vmem [shape: f32[1,128], index: 3, kind: input, shape index: {}]
  %s4 = inlined_call_operand.vmem [shape: bf16[128,128], index: 4, kind: output, shape index: {}]
  %s5 = sld [smem:[#allocation0]]
  $region49: #{residual_block_forward.7} parent=0
    _
  %s7 = ssub.s32 1, %s5
  %s8 = scalar_select 0, %s7, %s5
  loop: start=0, step=1, limit=4
  $region2: #{residual_block_forward.7} parent=0 // loop_pre_header
    _
  $region3: #{residual_block_forward.7} parent=0 // loop_header
    %s10 = sphi 0, %s14
    %p11 = scmp.ge.s32.totalorder %s10, 4
    %s17 = sphi 0, %s29
    %s18 = sphi 0, %s25
    %s19 = sphi 0, %s17
    %s20 = sphi 0, %s18
    %s21 = sphi 0, %s19
    %s22 = sphi 0, %s20
    %s32 = sphi 0, %s34
    %s35 = sphi 0, %s32
    %s36 = sphi 0, %s35
    %s52 = sphi 0, %s36
    %s58 = sphi 0, %s60
    %s61 = sphi 0, %s58
    %s62 = sphi 0, %s61
    %s78 = sphi 0, %s62
    %s84 = sphi 0, %s86
    %s87 = sphi 0, %s84
    %s88 = sphi 0, %s87
    %s104 = sphi 0, %s88
    %s110 = sphi 0, %s112
    %s113 = sphi 0, %s110
    %s114 = sphi 0, %s113
    %s130 = sphi 0, %s114
    %s138 = sphi 0, %s140
    %s141 = sphi 0, %s138
    %s142 = sphi 0, %s141
    %s158 = sphi 0, %s142
  $region4: #{residual_block_forward.7} parent=0 // loop_header_branch
    %13 = sbr.rel (%p11) target = $region8
  $region5: #{residual_block_forward.7} parent=0 // loop_body
    %s15 = ssub.s32 %s10, 1
    %s16 = ssub.s32 %s10, 2
    %s23 = sadd.s32 1, %s18
    %p24 = scmp.ge.s32.totalorder %s23, 2
    %s25 = scalar_select %p24, 0, %s23
    %s26 = sadd.s32 1, %s17
    %s27 = scalar_select %p24, %s26, %s17
    %p28 = scmp.ge.s32.totalorder %s27, 1
    %s29 = scalar_select %p28, 0, %s27
    %s30 = ssub.s32 %s18, %s25
    %p31 = scmp.eq.s32.totalorder %s30, 0
    %s33 = sadd.s32 %s32, 1
    %s34 = scalar_select %p31, %s32, %s33
    %p37 = pneg %p31
    %p38 = scmp.eq.s32.totalorder %s10, 1
    %p39 = por %p37, %p38
    %p40 = scmp.ne.s32.totalorder %s32, %s35
    %p41 = scmp.eq.s32.totalorder %s10, 0
    %p42 = por %p40, %p41
    %p43 = scmp.ne.s32.totalorder %s32, %s35
    %p44 = scmp.eq.s32.totalorder %s15, 1
    %p45 = por %p43, %p44
    %p46 = scmp.ne.s32.totalorder %s35, %s36
    %p47 = scmp.eq.s32.totalorder %s15, 0
    %p48 = por %p46, %p47
    %p49 = scmp.ne.s32.totalorder %s35, %s36
    %p50 = scmp.eq.s32.totalorder %s16, 1
    %p51 = por %p49, %p50
    %p53 = scmp.ne.s32.totalorder %s36, %s52
    %p54 = scmp.eq.s32.totalorder %s16, 0
    %p55 = por %p53, %p54
    %s56 = ssub.s32 %s17, %s29
    %p57 = scmp.eq.s32.totalorder %s56, 0
    %s59 = sadd.s32 %s58, 1
    %s60 = scalar_select %p57, %s58, %s59
    %p63 = pneg %p57
    %p64 = scmp.eq.s32.totalorder %s10, 1
    %p65 = por %p63, %p64
    %p66 = scmp.ne.s32.totalorder %s58, %s61
    %p67 = scmp.eq.s32.totalorder %s10, 0
    %p68 = por %p66, %p67
    %p69 = scmp.ne.s32.totalorder %s58, %s61
    %p70 = scmp.eq.s32.totalorder %s15, 1
    %p71 = por %p69, %p70
    %p72 = scmp.ne.s32.totalorder %s61, %s62
    %p73 = scmp.eq.s32.totalorder %s15, 0
    %p74 = por %p72, %p73
    %p75 = scmp.ne.s32.totalorder %s61, %s62
    %p76 = scmp.eq.s32.totalorder %s16, 1
    %p77 = por %p75, %p76
    %p79 = scmp.ne.s32.totalorder %s62, %s78
    %p80 = scmp.eq.s32.totalorder %s16, 0
    %p81 = por %p79, %p80
    %s82 = ssub.s32 %s17, %s29
    %p83 = scmp.eq.s32.totalorder %s82, 0
    %s85 = sadd.s32 %s84, 1
    %s86 = scalar_select %p83, %s84, %s85
    %p89 = pneg %p83
    %p90 = scmp.eq.s32.totalorder %s10, 1
    %p91 = por %p89, %p90
    %p92 = scmp.ne.s32.totalorder %s84, %s87
    %p93 = scmp.eq.s32.totalorder %s10, 0
    %p94 = por %p92, %p93
    %p95 = scmp.ne.s32.totalorder %s84, %s87
    %p96 = scmp.eq.s32.totalorder %s15, 1
    %p97 = por %p95, %p96
    %p98 = scmp.ne.s32.totalorder %s87, %s88
    %p99 = scmp.eq.s32.totalorder %s15, 0
    %p100 = por %p98, %p99
    %p101 = scmp.ne.s32.totalorder %s87, %s88
    %p102 = scmp.eq.s32.totalorder %s16, 1
    %p103 = por %p101, %p102
    %p105 = scmp.ne.s32.totalorder %s88, %s104
    %p106 = scmp.eq.s32.totalorder %s16, 0
    %p107 = por %p105, %p106
    %s108 = ssub.s32 %s17, %s29
    %p109 = scmp.eq.s32.totalorder %s108, 0
    %s111 = sadd.s32 %s110, 1
    %s112 = scalar_select %p109, %s110, %s111
    %p115 = pneg %p109
    %p116 = scmp.eq.s32.totalorder %s10, 1
    %p117 = por %p115, %p116
    %p118 = scmp.ne.s32.totalorder %s110, %s113
    %p119 = scmp.eq.s32.totalorder %s10, 0
    %p120 = por %p118, %p119
    %p121 = scmp.ne.s32.totalorder %s110, %s113
    %p122 = scmp.eq.s32.totalorder %s15, 1
    %p123 = por %p121, %p122
    %p124 = scmp.ne.s32.totalorder %s113, %s114
    %p125 = scmp.eq.s32.totalorder %s15, 0
    %p126 = por %p124, %p125
    %p127 = scmp.ne.s32.totalorder %s113, %s114
    %p128 = scmp.eq.s32.totalorder %s16, 1
    %p129 = por %p127, %p128
    %p131 = scmp.ne.s32.totalorder %s114, %s130
    %p132 = scmp.eq.s32.totalorder %s16, 0
    %p133 = por %p131, %p132
    %s134 = ssub.s32 %s18, %s25
    %s135 = ssub.s32 %s17, %s29
    %s136 = sor.u32 %s134, %s135
    %p137 = scmp.eq.s32.totalorder %s136, 0
    %s139 = sadd.s32 %s138, 1
    %s140 = scalar_select %p137, %s138, %s139
    %p143 = pneg %p137
    %p144 = scmp.eq.s32.totalorder %s10, 1
    %p145 = por %p143, %p144
    %p146 = scmp.ne.s32.totalorder %s138, %s141
    %p147 = scmp.eq.s32.totalorder %s10, 0
    %p148 = por %p146, %p147
    %p149 = scmp.ne.s32.totalorder %s138, %s141
    %p150 = scmp.eq.s32.totalorder %s15, 1
    %p151 = por %p149, %p150
    %p152 = scmp.ne.s32.totalorder %s141, %s142
    %p153 = scmp.eq.s32.totalorder %s15, 0
    %p154 = por %p152, %p153
    %p155 = scmp.ne.s32.totalorder %s141, %s142
    %p156 = scmp.eq.s32.totalorder %s16, 1
    %p157 = por %p155, %p156
    %p159 = scmp.ne.s32.totalorder %s142, %s158
    %p160 = scmp.eq.s32.totalorder %s16, 0
    %p161 = por %p159, %p160
    %p162 = scmp.le.s32.totalorder 1, %s10
    %p163 = scmp.lt.s32.totalorder %s10, 3
    %p164 = pnand %p162, %p163
    %p165 = pneg %p164
    // Predicated region
    $region9: #{residual_block_forward.7} parent=5 // pred_check
      _
    $region10: #{residual_block_forward.7} parent=5 // pred_check_branch
      %167 = sbr.rel (%p164) target = $region12
    $region11: #{residual_block_forward.7} parent=5 // pred_region
      %s168 = ssub.s32 %s10, 1
      // Predicated region
      $region13: #{residual_block_forward.7} parent=11 // pred_check
        %p169 = pneg %p74
      $region14: #{residual_block_forward.7} parent=11 // pred_check_branch
        %171 = sbr.rel (%p169) target = $region16
      $region15: #{residual_block_forward.7} parent=11 // pred_region
        %p172 = scmp.lt.s32.totalorder %s19, 0
        %s173 = scalar_select %p172, %s19, 0
        %s174 = smul.addr %s173, 4
        %s175 = scalar_lea.vmem %s1, %s174
      $region16: #{residual_block_forward.7} parent=11 // pred_fallthru
        _
      // Predicated region
      $region17: #{residual_block_forward.7} parent=11 // pred_check
        %p176 = pneg %p100
      $region18: #{residual_block_forward.7} parent=11 // pred_check_branch
        %178 = sbr.rel (%p176) target = $region20
      $region19: #{residual_block_forward.7} parent=11 // pred_region
        %p179 = scmp.lt.s32.totalorder %s19, 0
        %s180 = scalar_select %p179, %s19, 0
        %s181 = scalar_lea.vmem %s2, %s180
      $region20: #{residual_block_forward.7} parent=11 // pred_fallthru
        _
      // Predicated region
      $region21: #{residual_block_forward.7} parent=11 // pred_check
        %p182 = pneg %p126
      $region22: #{residual_block_forward.7} parent=11 // pred_check_branch
        %184 = sbr.rel (%p182) target = $region24
      $region23: #{residual_block_forward.7} parent=11 // pred_region
        %p185 = scmp.lt.s32.totalorder %s19, 0
        %s186 = scalar_select %p185, %s19, 0
        %s187 = scalar_lea.vmem %s3, %s186
      $region24: #{residual_block_forward.7} parent=11 // pred_fallthru
        _
    $region12: #{residual_block_forward.7} parent=5 // pred_fallthru
      _
    %p188 = scmp.lt.s32.totalorder %s10, 2
    // Predicated region
    $region25: #{residual_block_forward.7} parent=5 // pred_check
      %p189 = pneg %p188
    $region26: #{residual_block_forward.7} parent=5 // pred_check_branch
      %191 = sbr.rel (%p189) target = $region28
    $region27: #{residual_block_forward.7} parent=5 // pred_region
      // Predicated region
      $region29: #{residual_block_forward.7} parent=27 // pred_check
        %p192 = pneg %p42
      $region30: #{residual_block_forward.7} parent=27 // pred_check_branch
        %194 = sbr.rel (%p192) target = $region32
      $region31: #{residual_block_forward.7} parent=27 // pred_region
        %s195 = smul.u32 8, %s18
        %p196 = scmp.lt.s32.totalorder %s195, 15
        %s197 = scalar_select %p196, %s195, 15
        %s198 = smul.addr %s197, 4
        %s199 = scalar_lea.vmem %s0, %s198
        %s200 = smul.u32 8, %s18
      $region32: #{residual_block_forward.7} parent=27 // pred_fallthru
        _
    $region28: #{residual_block_forward.7} parent=5 // pred_fallthru
      _
    %p201 = scmp.le.s32.totalorder 1, %s10
    %p202 = scmp.lt.s32.totalorder %s10, 3
    %p203 = pnand %p201, %p202
    %p204 = pneg %p203
    // Predicated region
    $region33: #{residual_block_forward.7} parent=5 // pred_check
      _
    $region34: #{residual_block_forward.7} parent=5 // pred_check_branch
      %206 = sbr.rel (%p203) target = $region36
    $region35: #{residual_block_forward.7} parent=5 // pred_region
      %s207 = ssub.s32 %s10, 1
      %s208 = smul.u32 8, %s20
      %p209 = scmp.lt.s32.totalorder %s208, 15
      %s210 = scalar_select %p209, %s208, 15
      %s211 = smul.addr %s210, 4
      %s212 = scalar_lea.vmem %s0, %s211
      %p213 = pneg %p48
      %p214 = pneg %p45
      %p215 = scmp.lt.s32.totalorder %s19, 0
      %s216 = scalar_select %p215, %s19, 0
      %s217 = smul.addr %s216, 4
      %s218 = scalar_lea.vmem %s1, %s217
      %p219 = pneg %p74
      %p220 = pneg %p71
      %p221 = scmp.lt.s32.totalorder %s19, 0
      %s222 = scalar_select %p221, %s19, 0
      %s223 = scalar_lea.vmem %s2, %s222
      %p224 = pneg %p100
      %p225 = pneg %p97
      %p226 = scmp.lt.s32.totalorder %s19, 0
      %s227 = scalar_select %p226, %s19, 0
      %s228 = scalar_lea.vmem %s3, %s227
      %p229 = pneg %p126
      %p230 = pneg %p123
      %p231 = pneg %p154
      %p232 = pneg %p151
      %s233 = smul.u32 8, %s20
      %p234 = scmp.lt.s32.totalorder %s233, 15
      %s235 = scalar_select %p234, %s233, 15
      %p236 = scmp.lt.s32.totalorder %s19, 0
      %s237 = scalar_select %p236, %s19, 0
      %s238 = sadd.s32 %s237, %s235
      %s239 = smul.addr %s238, 4
      %s240 = scalar_lea.vmem %s4, %s239
      %s241 = smul.u32 8, %s20
      %p242 = scmp.lt.s32.totalorder %s241, 15
      %s243 = scalar_select %p242, %s241, 15
      %s244 = smul.addr %s243, 4
      %s245 = scalar_lea.vmem %s0, %s244
      %s246 = smul.u32 8, %s20
      %p247 = scmp.lt.s32.totalorder %s19, 0
      %s248 = scalar_select %p247, %s19, 0
      %s249 = smul.addr %s248, 4
      %s250 = scalar_lea.vmem %s1, %s249
      %p251 = scmp.lt.s32.totalorder %s19, 0
      %s252 = scalar_select %p251, %s19, 0
      %s253 = scalar_lea.vmem %s2, %s252
      %p254 = scmp.lt.s32.totalorder %s19, 0
      %s255 = scalar_select %p254, %s19, 0
      %s256 = scalar_lea.vmem %s3, %s255
      %s257 = smul.u32 8, %s20
      %p258 = scmp.lt.s32.totalorder %s257, 15
      %s259 = scalar_select %p258, %s257, 15
      %p260 = scmp.lt.s32.totalorder %s19, 0
      %s261 = scalar_select %p260, %s19, 0
      %s262 = sadd.s32 %s261, %s259
      %s263 = smul.addr %s262, 4
      %s264 = scalar_lea.vmem %s4, %s263
      %s265 = smul.u32 8, %s20
      %v267 = vld [vmem:[%s245] sm:$0xf]
      %v268 = vld [vmem:[%s245 + $0x4] sm:$0xf]
      %v269 = vld [vmem:[%s245 + $0x8] sm:$0xf]
      %v270 = vld [vmem:[%s245 + $0xc] sm:$0xf]
      %v271 = vld [vmem:[%s245 + $0x10] sm:$0xf]
      %v272 = vld [vmem:[%s245 + $0x14] sm:$0xf]
      %v273 = vld [vmem:[%s245 + $0x18] sm:$0xf]
      %v274 = vld [vmem:[%s245 + $0x1c] sm:$0xf]
      %v275 = vld [vmem:[%s250] sm:$0xf]
      %v276 = vld [vmem:[%s250 + $0x4] sm:$0xf]
      %v277 = vld [vmem:[%s250 + $0x8] sm:$0xf]
      %v278 = vld [vmem:[%s250 + $0xc] sm:$0xf]
      %v279 = vld [vmem:[%s250 + $0x10] sm:$0x3]
      %v288 = vunpack.c.l.b16 %v267
      %v289 = vunpack.c.l.b16 %v268
      %v290 = vunpack.c.l.b16 %v269
      %v291 = vunpack.c.l.b16 %v270
      %v292 = vunpack.c.l.b16 %v271
      %v293 = vunpack.c.l.b16 %v272
      %v294 = vunpack.c.l.b16 %v273
      %v295 = vunpack.c.l.b16 %v274
      %v296 = vpack.c.b16 %v289, %v288
      %v297 = vpack.c.b16 %v291, %v290
      %v298 = vpack.c.b16 %v293, %v292
      %v299 = vpack.c.b16 %v295, %v294
      %v305 = vunpack.c.l.b16 %v275
      %v306 = vunpack.c.l.b16 %v276
      %v307 = vunpack.c.l.b16 %v277
      %v308 = vunpack.c.l.b16 %v278
      %v309 = vunpack.c.l.b16 %v279
      %v310 = vpack.c.b16 %v306, %v305
      %v311 = vpack.c.b16 %v308, %v307
      %v312 = vpack.c.b16 %v309, %v309
      %vm315 = vcmask 293888
      %v317 = vsel %vm315, %v296, 0
      %v320 = vsel %vm315, %v297, 0
      %v323 = vsel %vm315, %v298, 0
      %v326 = vsel %vm315, %v299, 0
      %vm328 = vcmask 1041408
      %v330 = vsel %vm328, %v312, 0
      %332 = vmatpush.bf16.msra.mxu0 0
      %333 = vmatpush.bf16.msra.mxu0 0
      %334 = vmatpush.bf16.msra.mxu0 0
      %335 = vmatpush.bf16.msra.mxu0 0
      %336 = vmatpush.bf16.msra.mxu0 0
      %337 = vmatpush.bf16.msra.mxu0 %v330
      %338 = vmatpush.bf16.msra.mxu0 %v311
      %339 = vmatpush.bf16.msra.mxu0 %v310
      %340 = vmatmul.bf16.gmra.mxu0 %v317
      %v341 = vpop.f32.mrf.mxu0
      %v342 = vadd.f32 0.0, %v341
      %v343 = vpop.f32.mrf.mxu0
      %v344 = vadd.f32 0.0, %v343
      %345 = vmatmul.bf16.gmra.mxu0 %v320
      %v346 = vpop.f32.mrf.mxu0
      %v347 = vadd.f32 0.0, %v346
      %v348 = vpop.f32.mrf.mxu0
      %v349 = vadd.f32 0.0, %v348
      %350 = vmatmul.bf16.gmra.mxu0 %v323
      %v351 = vpop.f32.mrf.mxu0
      %v352 = vadd.f32 0.0, %v351
      %v353 = vpop.f32.mrf.mxu0
      %v354 = vadd.f32 0.0, %v353
      %355 = vmatmul.bf16.gmra.mxu0 %v326
      %v356 = vpop.f32.mrf.mxu0
      %v357 = vadd.f32 0.0, %v356
      %v358 = vpop.f32.mrf.mxu0
      %v359 = vadd.f32 0.0, %v358
      %360 = vdwg.mxu0
      %v361 = vld [vmem:[%s253] sm:$0x1]
      %v363 = vperm.slane %v361, 0
      %v365 = vmul.f32 %v342, %v363
      %v366 = vmul.f32 %v344, %v363
      %v367 = vmul.f32 %v347, %v363
      %v368 = vmul.f32 %v349, %v363
      %v369 = vmul.f32 %v352, %v363
      %v370 = vmul.f32 %v354, %v363
      %v371 = vmul.f32 %v357, %v363
      %v372 = vmul.f32 %v359, %v363
      %v373 = vld [vmem:[%s256] sm:$0x1]
      %v375 = vperm.slane %v373, 0
      %v377 = vadd.f32 %v365, %v375
      %v378 = vadd.f32 %v366, %v375
      %v379 = vadd.f32 %v367, %v375
      %v380 = vadd.f32 %v368, %v375
      %v381 = vadd.f32 %v369, %v375
      %v382 = vadd.f32 %v370, %v375
      %v383 = vadd.f32 %v371, %v375
      %v384 = vadd.f32 %v372, %v375
      %v385 = vmax.f32 %v377, 0.0
      %v386 = vmax.f32 %v378, 0.0
      %v387 = vmax.f32 %v379, 0.0
      %v388 = vmax.f32 %v380, 0.0
      %v389 = vmax.f32 %v381, 0.0
      %v390 = vmax.f32 %v382, 0.0
      %v391 = vmax.f32 %v383, 0.0
      %v392 = vmax.f32 %v384, 0.0
      %v393 = vpack.c.bf16 %v385, %v385
      %v394 = vpack.c.bf16 %v386, %v386
      %v395 = vpack.c.bf16 %v387, %v387
      %v396 = vpack.c.bf16 %v388, %v388
      %v397 = vpack.c.bf16 %v389, %v389
      %v398 = vpack.c.bf16 %v390, %v390
      %v399 = vpack.c.bf16 %v391, %v391
      %v400 = vpack.c.bf16 %v392, %v392
      %401 = vst [vmem:[%s264] sm:$0xf] %v393
      %402 = vst [vmem:[%s264 + $0x4] sm:$0xf] %v394
      %403 = vst [vmem:[%s264 + $0x8] sm:$0xf] %v395
      %404 = vst [vmem:[%s264 + $0xc] sm:$0xf] %v396
      %405 = vst [vmem:[%s264 + $0x10] sm:$0xf] %v397
      %406 = vst [vmem:[%s264 + $0x14] sm:$0xf] %v398
      %407 = vst [vmem:[%s264 + $0x18] sm:$0xf] %v399
      %408 = vst [vmem:[%s264 + $0x1c] sm:$0xf] %v400
      %s409 = smul.u32 8, %s20
      %p410 = scmp.lt.s32.totalorder %s409, 15
      %s411 = scalar_select %p410, %s409, 15
      %p412 = scmp.lt.s32.totalorder %s19, 0
      %s413 = scalar_select %p412, %s19, 0
      %s414 = sadd.s32 %s413, %s411
      %s415 = smul.addr %s414, 4
      %s416 = scalar_lea.vmem %s4, %s415
      // Predicated region
      $region37: #{residual_block_forward.7} parent=35 // pred_check
        %p417 = pneg %p151
      $region38: #{residual_block_forward.7} parent=35 // pred_check_branch
        %419 = sbr.rel (%p417) target = $region40
      $region39: #{residual_block_forward.7} parent=35 // pred_region
        %s420 = smul.u32 8, %s20
      $region40: #{residual_block_forward.7} parent=35 // pred_fallthru
        _
    $region36: #{residual_block_forward.7} parent=5 // pred_fallthru
      _
    %p421 = scmp.le.s32.totalorder 2, %s10
    // Predicated region
    $region41: #{residual_block_forward.7} parent=5 // pred_check
      %p422 = pneg %p421
    $region42: #{residual_block_forward.7} parent=5 // pred_check_branch
      %424 = sbr.rel (%p422) target = $region44
    $region43: #{residual_block_forward.7} parent=5 // pred_region
      %s425 = ssub.s32 %s10, 2
      // Predicated region
      $region45: #{residual_block_forward.7} parent=43 // pred_check
        %p426 = pneg %p157
      $region46: #{residual_block_forward.7} parent=43 // pred_check_branch
        %428 = sbr.rel (%p426) target = $region48
      $region47: #{residual_block_forward.7} parent=43 // pred_region
        %s429 = smul.u32 8, %s22
        %p430 = scmp.lt.s32.totalorder %s429, 15
        %s431 = scalar_select %p430, %s429, 15
        %p432 = scmp.lt.s32.totalorder %s21, 0
        %s433 = scalar_select %p432, %s21, 0
        %s434 = sadd.s32 %s433, %s431
        %s435 = smul.addr %s434, 4
        %s436 = scalar_lea.vmem %s4, %s435
      $region48: #{residual_block_forward.7} parent=43 // pred_fallthru
        _
    $region44: #{residual_block_forward.7} parent=5 // pred_fallthru
      _
  $region6: #{residual_block_forward.7} parent=0 // loop_footer
    %s14 = sadd.s32 1, %s10
  $region7: #{residual_block_forward.7} parent=0 // loop_footer_branch
    %9 = sbr.rel target = $region3
  $region8: #{residual_block_forward.7} parent=0 // loop_exit
    _

// kernel: residual_block_forward.6
$region0: #{residual_block_forward.6}
  #allocation0 [shape = 'u32[]', space=smem, size = 0x4, offset = 0x4, fixed_abs, tag = 'smem constant byte address 0x4 - core index']
  #allocation1 [shape = 'u32[72,128]{1,0:T(1,128)}', space=vmem, size = 0x9000, scoped, tag = 'internal scratch']
  #allocation2 [shape = 'f32[1,128]{1,0:T(1,128)}', space=vmem, size = 0x200, scoped, tag = 'scratch operand']
  #allocation3 [shape = 'f32[1,128]{1,0:T(1,128)}', space=vmem, size = 0x200, scoped, tag = 'scratch operand']
  %s0 = inlined_call_operand.vmem [shape: bf16[128,36], index: 0, kind: input, shape index: {}]
  %s1 = inlined_call_operand.vmem [shape: bf16[36,128], index: 1, kind: input, shape index: {}]
  %s2 = inlined_call_operand.vmem [shape: f32[1,128], index: 2, kind: input, shape index: {}]
  %s3 = inlined_call_operand.vmem [shape: f32[1,128], index: 3, kind: input, shape index: {}]
  %s4 = inlined_call_operand.vmem [shape: f32[1,128], index: 4, kind: output, shape index: {0}]
  %s5 = inlined_call_operand.vmem [shape: f32[1,128], index: 5, kind: output, shape index: {1}]
  %6 = xla_tuple %s4, %s5
  %s7 = sld [smem:[#allocation0]]
  $region65: #{residual_block_forward.6} parent=0
    _
  %s9 = ssub.s32 1, %s7
  %s10 = scalar_select 0, %s9, %s7
  loop: start=0, step=1, limit=4
  $region2: #{residual_block_forward.6} parent=0 // loop_pre_header
    _
  $region3: #{residual_block_forward.6} parent=0 // loop_header
    %s12 = sphi 0, %s16
    %p13 = scmp.ge.s32.totalorder %s12, 4
    %s19 = sphi 0, %s31
    %s20 = sphi 0, %s27
    %s21 = sphi 0, %s19
    %s22 = sphi 0, %s20
    %s23 = sphi 0, %s21
    %s24 = sphi 0, %s22
    %s34 = sphi 0, %s36
    %s37 = sphi 0, %s34
    %s38 = sphi 0, %s37
    %s54 = sphi 0, %s38
    %s60 = sphi 0, %s62
    %s63 = sphi 0, %s60
    %s64 = sphi 0, %s63
    %s80 = sphi 0, %s64
    %s86 = sphi 0, %s88
    %s89 = sphi 0, %s86
    %s90 = sphi 0, %s89
    %s106 = sphi 0, %s90
    %s112 = sphi 0, %s114
    %s115 = sphi 0, %s112
    %s116 = sphi 0, %s115
    %s132 = sphi 0, %s116
    %s138 = sphi 0, %s140
    %s141 = sphi 0, %s138
    %s142 = sphi 0, %s141
    %s158 = sphi 0, %s142
    %s164 = sphi 0, %s166
    %s167 = sphi 0, %s164
    %s168 = sphi 0, %s167
    %s184 = sphi 0, %s168
  $region4: #{residual_block_forward.6} parent=0 // loop_header_branch
    %15 = sbr.rel (%p13) target = $region8
  $region5: #{residual_block_forward.6} parent=0 // loop_body
    %s17 = ssub.s32 %s12, 1
    %s18 = ssub.s32 %s12, 2
    %s25 = sadd.s32 1, %s20
    %p26 = scmp.ge.s32.totalorder %s25, 2
    %s27 = scalar_select %p26, 0, %s25
    %s28 = sadd.s32 1, %s19
    %s29 = scalar_select %p26, %s28, %s19
    %p30 = scmp.ge.s32.totalorder %s29, 1
    %s31 = scalar_select %p30, 0, %s29
    %s32 = ssub.s32 %s20, %s27
    %p33 = scmp.eq.s32.totalorder %s32, 0
    %s35 = sadd.s32 %s34, 1
    %s36 = scalar_select %p33, %s34, %s35
    %p39 = pneg %p33
    %p40 = scmp.eq.s32.totalorder %s12, 1
    %p41 = por %p39, %p40
    %p42 = scmp.ne.s32.totalorder %s34, %s37
    %p43 = scmp.eq.s32.totalorder %s12, 0
    %p44 = por %p42, %p43
    %p45 = scmp.ne.s32.totalorder %s34, %s37
    %p46 = scmp.eq.s32.totalorder %s17, 1
    %p47 = por %p45, %p46
    %p48 = scmp.ne.s32.totalorder %s37, %s38
    %p49 = scmp.eq.s32.totalorder %s17, 0
    %p50 = por %p48, %p49
    %p51 = scmp.ne.s32.totalorder %s37, %s38
    %p52 = scmp.eq.s32.totalorder %s18, 1
    %p53 = por %p51, %p52
    %p55 = scmp.ne.s32.totalorder %s38, %s54
    %p56 = scmp.eq.s32.totalorder %s18, 0
    %p57 = por %p55, %p56
    %s58 = ssub.s32 %s19, %s31
    %p59 = scmp.eq.s32.totalorder %s58, 0
    %s61 = sadd.s32 %s60, 1
    %s62 = scalar_select %p59, %s60, %s61
    %p65 = pneg %p59
    %p66 = scmp.eq.s32.totalorder %s12, 1
    %p67 = por %p65, %p66
    %p68 = scmp.ne.s32.totalorder %s60, %s63
    %p69 = scmp.eq.s32.totalorder %s12, 0
    %p70 = por %p68, %p69
    %p71 = scmp.ne.s32.totalorder %s60, %s63
    %p72 = scmp.eq.s32.totalorder %s17, 1
    %p73 = por %p71, %p72
    %p74 = scmp.ne.s32.totalorder %s63, %s64
    %p75 = scmp.eq.s32.totalorder %s17, 0
    %p76 = por %p74, %p75
    %p77 = scmp.ne.s32.totalorder %s63, %s64
    %p78 = scmp.eq.s32.totalorder %s18, 1
    %p79 = por %p77, %p78
    %p81 = scmp.ne.s32.totalorder %s64, %s80
    %p82 = scmp.eq.s32.totalorder %s18, 0
    %p83 = por %p81, %p82
    %s84 = ssub.s32 %s19, %s31
    %p85 = scmp.eq.s32.totalorder %s84, 0
    %s87 = sadd.s32 %s86, 1
    %s88 = scalar_select %p85, %s86, %s87
    %p91 = pneg %p85
    %p92 = scmp.eq.s32.totalorder %s12, 1
    %p93 = por %p91, %p92
    %p94 = scmp.ne.s32.totalorder %s86, %s89
    %p95 = scmp.eq.s32.totalorder %s12, 0
    %p96 = por %p94, %p95
    %p97 = scmp.ne.s32.totalorder %s86, %s89
    %p98 = scmp.eq.s32.totalorder %s17, 1
    %p99 = por %p97, %p98
    %p100 = scmp.ne.s32.totalorder %s89, %s90
    %p101 = scmp.eq.s32.totalorder %s17, 0
    %p102 = por %p100, %p101
    %p103 = scmp.ne.s32.totalorder %s89, %s90
    %p104 = scmp.eq.s32.totalorder %s18, 1
    %p105 = por %p103, %p104
    %p107 = scmp.ne.s32.totalorder %s90, %s106
    %p108 = scmp.eq.s32.totalorder %s18, 0
    %p109 = por %p107, %p108
    %s110 = ssub.s32 %s19, %s31
    %p111 = scmp.eq.s32.totalorder %s110, 0
    %s113 = sadd.s32 %s112, 1
    %s114 = scalar_select %p111, %s112, %s113
    %p117 = pneg %p111
    %p118 = scmp.eq.s32.totalorder %s12, 1
    %p119 = por %p117, %p118
    %p120 = scmp.ne.s32.totalorder %s112, %s115
    %p121 = scmp.eq.s32.totalorder %s12, 0
    %p122 = por %p120, %p121
    %p123 = scmp.ne.s32.totalorder %s112, %s115
    %p124 = scmp.eq.s32.totalorder %s17, 1
    %p125 = por %p123, %p124
    %p126 = scmp.ne.s32.totalorder %s115, %s116
    %p127 = scmp.eq.s32.totalorder %s17, 0
    %p128 = por %p126, %p127
    %p129 = scmp.ne.s32.totalorder %s115, %s116
    %p130 = scmp.eq.s32.totalorder %s18, 1
    %p131 = por %p129, %p130
    %p133 = scmp.ne.s32.totalorder %s116, %s132
    %p134 = scmp.eq.s32.totalorder %s18, 0
    %p135 = por %p133, %p134
    %s136 = ssub.s32 %s19, %s31
    %p137 = scmp.eq.s32.totalorder %s136, 0
    %s139 = sadd.s32 %s138, 1
    %s140 = scalar_select %p137, %s138, %s139
    %p143 = pneg %p137
    %p144 = scmp.eq.s32.totalorder %s12, 1
    %p145 = por %p143, %p144
    %p146 = scmp.ne.s32.totalorder %s138, %s141
    %p147 = scmp.eq.s32.totalorder %s12, 0
    %p148 = por %p146, %p147
    %p149 = scmp.ne.s32.totalorder %s138, %s141
    %p150 = scmp.eq.s32.totalorder %s17, 1
    %p151 = por %p149, %p150
    %p152 = scmp.ne.s32.totalorder %s141, %s142
    %p153 = scmp.eq.s32.totalorder %s17, 0
    %p154 = por %p152, %p153
    %p155 = scmp.ne.s32.totalorder %s141, %s142
    %p156 = scmp.eq.s32.totalorder %s18, 1
    %p157 = por %p155, %p156
    %p159 = scmp.ne.s32.totalorder %s142, %s158
    %p160 = scmp.eq.s32.totalorder %s18, 0
    %p161 = por %p159, %p160
    %s162 = ssub.s32 %s19, %s31
    %p163 = scmp.eq.s32.totalorder %s162, 0
    %s165 = sadd.s32 %s164, 1
    %s166 = scalar_select %p163, %s164, %s165
    %p169 = pneg %p163
    %p170 = scmp.eq.s32.totalorder %s12, 1
    %p171 = por %p169, %p170
    %p172 = scmp.ne.s32.totalorder %s164, %s167
    %p173 = scmp.eq.s32.totalorder %s12, 0
    %p174 = por %p172, %p173
    %p175 = scmp.ne.s32.totalorder %s164, %s167
    %p176 = scmp.eq.s32.totalorder %s17, 1
    %p177 = por %p175, %p176
    %p178 = scmp.ne.s32.totalorder %s167, %s168
    %p179 = scmp.eq.s32.totalorder %s17, 0
    %p180 = por %p178, %p179
    %p181 = scmp.ne.s32.totalorder %s167, %s168
    %p182 = scmp.eq.s32.totalorder %s18, 1
    %p183 = por %p181, %p182
    %p185 = scmp.ne.s32.totalorder %s168, %s184
    %p186 = scmp.eq.s32.totalorder %s18, 0
    %p187 = por %p185, %p186
    %p188 = scmp.le.s32.totalorder 1, %s12
    %p189 = scmp.lt.s32.totalorder %s12, 3
    %p190 = pnand %p188, %p189
    %p191 = pneg %p190
    // Predicated region
    $region9: #{residual_block_forward.6} parent=5 // pred_check
      _
    $region10: #{residual_block_forward.6} parent=5 // pred_check_branch
      %193 = sbr.rel (%p190) target = $region12
    $region11: #{residual_block_forward.6} parent=5 // pred_region
      %s194 = ssub.s32 %s12, 1
      // Predicated region
      $region13: #{residual_block_forward.6} parent=11 // pred_check
        %p195 = pneg %p76
      $region14: #{residual_block_forward.6} parent=11 // pred_check_branch
        %197 = sbr.rel (%p195) target = $region16
      $region15: #{residual_block_forward.6} parent=11 // pred_region
        %p198 = scmp.lt.s32.totalorder %s21, 0
        %s199 = scalar_select %p198, %s21, 0
        %s200 = smul.addr %s199, 4
        %s201 = scalar_lea.vmem %s1, %s200
      $region16: #{residual_block_forward.6} parent=11 // pred_fallthru
        _
      // Predicated region
      $region17: #{residual_block_forward.6} parent=11 // pred_check
        %p202 = pneg %p102
      $region18: #{residual_block_forward.6} parent=11 // pred_check_branch
        %204 = sbr.rel (%p202) target = $region20
      $region19: #{residual_block_forward.6} parent=11 // pred_region
        %p205 = scmp.lt.s32.totalorder %s21, 0
        %s206 = scalar_select %p205, %s21, 0
        %s207 = scalar_lea.vmem %s2, %s206
      $region20: #{residual_block_forward.6} parent=11 // pred_fallthru
        _
      // Predicated region
      $region21: #{residual_block_forward.6} parent=11 // pred_check
        %p208 = pneg %p128
      $region22: #{residual_block_forward.6} parent=11 // pred_check_branch
        %210 = sbr.rel (%p208) target = $region24
      $region23: #{residual_block_forward.6} parent=11 // pred_region
        %p211 = scmp.lt.s32.totalorder %s21, 0
        %s212 = scalar_select %p211, %s21, 0
        %s213 = scalar_lea.vmem %s3, %s212
      $region24: #{residual_block_forward.6} parent=11 // pred_fallthru
        _
    $region12: #{residual_block_forward.6} parent=5 // pred_fallthru
      _
    %p214 = scmp.lt.s32.totalorder %s12, 2
    // Predicated region
    $region25: #{residual_block_forward.6} parent=5 // pred_check
      %p215 = pneg %p214
    $region26: #{residual_block_forward.6} parent=5 // pred_check_branch
      %217 = sbr.rel (%p215) target = $region28
    $region27: #{residual_block_forward.6} parent=5 // pred_region
      // Predicated region
      $region29: #{residual_block_forward.6} parent=27 // pred_check
        %p218 = pneg %p44
      $region30: #{residual_block_forward.6} parent=27 // pred_check_branch
        %220 = sbr.rel (%p218) target = $region32
      $region31: #{residual_block_forward.6} parent=27 // pred_region
        %s221 = smul.u32 8, %s20
        %p222 = scmp.lt.s32.totalorder %s221, 15
        %s223 = scalar_select %p222, %s221, 15
        %s224 = smul.addr %s223, 4
        %s225 = scalar_lea.vmem %s0, %s224
        %s226 = smul.u32 8, %s20
      $region32: #{residual_block_forward.6} parent=27 // pred_fallthru
        _
    $region28: #{residual_block_forward.6} parent=5 // pred_fallthru
      _
    %p227 = scmp.le.s32.totalorder 1, %s12
    %p228 = scmp.lt.s32.totalorder %s12, 3
    %p229 = pnand %p227, %p228
    %p230 = pneg %p229
    // Predicated region
    $region33: #{residual_block_forward.6} parent=5 // pred_check
      _
    $region34: #{residual_block_forward.6} parent=5 // pred_check_branch
      %232 = sbr.rel (%p229) target = $region36
    $region35: #{residual_block_forward.6} parent=5 // pred_region
      %s233 = ssub.s32 %s12, 1
      %s234 = smul.u32 8, %s22
      %p235 = scmp.lt.s32.totalorder %s234, 15
      %s236 = scalar_select %p235, %s234, 15
      %s237 = smul.addr %s236, 4
      %s238 = scalar_lea.vmem %s0, %s237
      %p239 = pneg %p50
      %p240 = pneg %p47
      %p241 = scmp.lt.s32.totalorder %s21, 0
      %s242 = scalar_select %p241, %s21, 0
      %s243 = smul.addr %s242, 4
      %s244 = scalar_lea.vmem %s1, %s243
      %p245 = pneg %p76
      %p246 = pneg %p73
      %p247 = scmp.lt.s32.totalorder %s21, 0
      %s248 = scalar_select %p247, %s21, 0
      %s249 = scalar_lea.vmem %s2, %s248
      %p250 = pneg %p102
      %p251 = pneg %p99
      %p252 = scmp.lt.s32.totalorder %s21, 0
      %s253 = scalar_select %p252, %s21, 0
      %s254 = scalar_lea.vmem %s3, %s253
      %p255 = pneg %p128
      %p256 = pneg %p125
      %p257 = pneg %p154
      %p258 = pneg %p151
      %p259 = scmp.lt.s32.totalorder %s21, 0
      %s260 = scalar_select %p259, %s21, 0
      %s261 = scalar_lea.vmem %s4, %s260
      %p262 = pneg %p180
      %p263 = pneg %p177
      %p264 = scmp.lt.s32.totalorder %s21, 0
      %s265 = scalar_select %p264, %s21, 0
      %s266 = scalar_lea.vmem %s5, %s265
      %s267 = smul.u32 8, %s22
      %p268 = scmp.lt.s32.totalorder %s267, 15
      %s269 = scalar_select %p268, %s267, 15
      %s270 = smul.addr %s269, 4
      %s271 = scalar_lea.vmem %s0, %s270
      %s272 = smul.u32 8, %s22
      %p273 = scmp.lt.s32.totalorder %s21, 0
      %s274 = scalar_select %p273, %s21, 0
      %s275 = smul.addr %s274, 4
      %s276 = scalar_lea.vmem %s1, %s275
      %p277 = scmp.lt.s32.totalorder %s21, 0
      %s278 = scalar_select %p277, %s21, 0
      %s279 = scalar_lea.vmem %s2, %s278
      %p280 = scmp.lt.s32.totalorder %s21, 0
      %s281 = scalar_select %p280, %s21, 0
      %s282 = scalar_lea.vmem %s3, %s281
      %p283 = scmp.lt.s32.totalorder %s21, 0
      %s284 = scalar_select %p283, %s21, 0
      %s285 = scalar_lea.vmem %s4, %s284
      %p286 = scmp.lt.s32.totalorder %s21, 0
      %s287 = scalar_select %p286, %s21, 0
      %s288 = scalar_lea.vmem %s5, %s287
      %p290 = scmp.eq.s32.totalorder %s22, 0
      // Predicated region
      $region37: #{residual_block_forward.6} parent=35 // pred_check
        %p291 = pneg %p290
      $region38: #{residual_block_forward.6} parent=35 // pred_check_branch
        %293 = sbr.rel (%p291) target = $region40
      $region39: #{residual_block_forward.6} parent=35 // pred_region
        %294 = vst [vmem:[#allocation2] sm:$0x1] 0.0
        %295 = vst [vmem:[#allocation3] sm:$0x1] 0.0
      $region40: #{residual_block_forward.6} parent=35 // pred_fallthru
        _
      %v296 = vld [vmem:[%s271] sm:$0xf]
      %v297 = vld [vmem:[%s271 + $0x4] sm:$0xf]
      %v298 = vld [vmem:[%s271 + $0x8] sm:$0xf]
      %v299 = vld [vmem:[%s271 + $0xc] sm:$0xf]
      %v300 = vld [vmem:[%s271 + $0x10] sm:$0xf]
      %v301 = vld [vmem:[%s271 + $0x14] sm:$0xf]
      %v302 = vld [vmem:[%s271 + $0x18] sm:$0xf]
      %v303 = vld [vmem:[%s271 + $0x1c] sm:$0xf]
      %v304 = vld [vmem:[%s276] sm:$0xf]
      %v305 = vld [vmem:[%s276 + $0x4] sm:$0xf]
      %v306 = vld [vmem:[%s276 + $0x8] sm:$0xf]
      %v307 = vld [vmem:[%s276 + $0xc] sm:$0xf]
      %v308 = vld [vmem:[%s276 + $0x10] sm:$0x3]
      %v317 = vunpack.c.l.b16 %v296
      %v318 = vunpack.c.l.b16 %v297
      %v319 = vunpack.c.l.b16 %v298
      %v320 = vunpack.c.l.b16 %v299
      %v321 = vunpack.c.l.b16 %v300
      %v322 = vunpack.c.l.b16 %v301
      %v323 = vunpack.c.l.b16 %v302
      %v324 = vunpack.c.l.b16 %v303
      %v325 = vpack.c.b16 %v318, %v317
      %v326 = vpack.c.b16 %v320, %v319
      %v327 = vpack.c.b16 %v322, %v321
      %v328 = vpack.c.b16 %v324, %v323
      %v334 = vunpack.c.l.b16 %v304
      %v335 = vunpack.c.l.b16 %v305
      %v336 = vunpack.c.l.b16 %v306
      %v337 = vunpack.c.l.b16 %v307
      %v338 = vunpack.c.l.b16 %v308
      %v339 = vpack.c.b16 %v335, %v334
      %v340 = vpack.c.b16 %v337, %v336
      %v341 = vpack.c.b16 %v338, %v338
      %vm344 = vcmask 293888
      %v346 = vsel %vm344, %v325, 0
      %v349 = vsel %vm344, %v326, 0
      %v352 = vsel %vm344, %v327, 0
      %v355 = vsel %vm344, %v328, 0
      %vm357 = vcmask 1041408
      %v359 = vsel %vm357, %v341, 0
      %361 = vmatpush.bf16.msra.mxu0 0
      %362 = vmatpush.bf16.msra.mxu0 0
      %363 = vmatpush.bf16.msra.mxu0 0
      %364 = vmatpush.bf16.msra.mxu0 0
      %365 = vmatpush.bf16.msra.mxu0 0
      %366 = vmatpush.bf16.msra.mxu0 %v359
      %367 = vmatpush.bf16.msra.mxu0 %v340
      %368 = vmatpush.bf16.msra.mxu0 %v339
      %369 = vmatmul.bf16.gmra.mxu0 %v346
      %v370 = vpop.f32.mrf.mxu0
      %v371 = vadd.f32 0.0, %v370
      %v372 = vpop.f32.mrf.mxu0
      %v373 = vadd.f32 0.0, %v372
      %374 = vmatmul.bf16.gmra.mxu0 %v349
      %v375 = vpop.f32.mrf.mxu0
      %v376 = vadd.f32 0.0, %v375
      %v377 = vpop.f32.mrf.mxu0
      %v378 = vadd.f32 0.0, %v377
      %379 = vmatmul.bf16.gmra.mxu0 %v352
      %v380 = vpop.f32.mrf.mxu0
      %v381 = vadd.f32 0.0, %v380
      %v382 = vpop.f32.mrf.mxu0
      %v383 = vadd.f32 0.0, %v382
      %384 = vmatmul.bf16.gmra.mxu0 %v355
      %v385 = vpop.f32.mrf.mxu0
      %v386 = vadd.f32 0.0, %v385
      %v387 = vpop.f32.mrf.mxu0
      %v388 = vadd.f32 0.0, %v387
      %389 = vdwg.mxu0
      %v390 = vld [vmem:[#allocation2] sm:$0x1]
      %v391 = vadd.f32 %v371, %v373
      %v392 = vadd.f32 %v391, %v376
      %v393 = vadd.f32 %v392, %v378
      %v394 = vadd.f32 %v393, %v381
      %v395 = vadd.f32 %v394, %v383
      %v396 = vadd.f32 %v395, %v386
      %v397 = vadd.f32 %v396, %v388
      %v398 = vrot.slane %v397, 4
      %v399 = vadd.f32 %v397, %v398
      %v400 = vrot.slane %v399, 2
      %v401 = vadd.f32 %v399, %v400
      %v402 = vrot.slane %v401, 1
      %v403 = vadd.f32 %v401, %v402
      %v404 = vadd.f32 %v390, %v403
      %405 = vst [vmem:[#allocation2] sm:$0x1] %v404
      %v406 = vld [vmem:[#allocation3] sm:$0x1]
      %v407 = vmul.f32 %v371, %v371
      %v408 = vmul.f32 %v373, %v373
      %v409 = vmul.f32 %v376, %v376
      %v410 = vmul.f32 %v378, %v378
      %v411 = vmul.f32 %v381, %v381
      %v412 = vmul.f32 %v383, %v383
      %v413 = vmul.f32 %v386, %v386
      %v414 = vmul.f32 %v388, %v388
      %v415 = vadd.f32 %v407, %v408
      %v416 = vadd.f32 %v415, %v409
      %v417 = vadd.f32 %v416, %v410
      %v418 = vadd.f32 %v417, %v411
      %v419 = vadd.f32 %v418, %v412
      %v420 = vadd.f32 %v419, %v413
      %v421 = vadd.f32 %v420, %v414
      %v422 = vrot.slane %v421, 4
      %v423 = vadd.f32 %v421, %v422
      %v424 = vrot.slane %v423, 2
      %v425 = vadd.f32 %v423, %v424
      %v426 = vrot.slane %v425, 1
      %v427 = vadd.f32 %v425, %v426
      %v428 = vadd.f32 %v406, %v427
      %429 = vst [vmem:[#allocation3] sm:$0x1] %v428
      %p430 = scmp.eq.s32.totalorder %s22, 1
      // Predicated region
      $region41: #{residual_block_forward.6} parent=35 // pred_check
        %p431 = pneg %p430
      $region42: #{residual_block_forward.6} parent=35 // pred_check_branch
        %433 = sbr.rel (%p431) target = $region44
      $region43: #{residual_block_forward.6} parent=35 // pred_region
        %v434 = vld [vmem:[#allocation2] sm:$0x1]
        %v435 = vmul.f32 %v434, 0.0078125
        %v436 = vld [vmem:[#allocation3] sm:$0x1]
        %v437 = vmul.f32 %v436, 0.0078125
        %v438 = vmul.f32 %v435, %v435
        %v439 = vsub.f32 %v437, %v438
        %v440 = vmax.f32 %v439, 0.0
        %v441 = vld [vmem:[%s279] sm:$0x1]
        %v442 = vadd.f32 %v440, 1e-05
        %v443 = vrsqrt.pop %v442
        %v444 = vmul.f32 %v443, %v442
        %v445 = vmul.f32 %v444, %v443
        %v446 = vmul.f32 0.5, %v445
        %v447 = vsub.f32 1.5, %v446
        %v448 = vmul.f32 %v443, %v447
        %vm449 = vweird.f32 %v442
        %vm450 = vweird.f32 %v443
        %vm451 = vmor %vm449, %vm450
        %v452 = vsel %vm451, %v443, %v448
        %v453 = vmul.f32 %v441, %v452
        %454 = vst [vmem:[%s285] sm:$0x1] %v453
        %v455 = vld [vmem:[%s282] sm:$0x1]
        %v456 = vmul.f32 %v435, %v453
        %v457 = vsub.f32 %v455, %v456
        %458 = vst [vmem:[%s288] sm:$0x1] %v457
      $region44: #{residual_block_forward.6} parent=35 // pred_fallthru
        _
      %p459 = scmp.lt.s32.totalorder %s21, 0
      %s460 = scalar_select %p459, %s21, 0
      %s461 = scalar_lea.vmem %s4, %s460
      %p462 = scmp.lt.s32.totalorder %s21, 0
      %s463 = scalar_select %p462, %s21, 0
      %s464 = scalar_lea.vmem %s5, %s463
      // Predicated region
      $region45: #{residual_block_forward.6} parent=35 // pred_check
        %p465 = pneg %p151
      $region46: #{residual_block_forward.6} parent=35 // pred_check_branch
        %467 = sbr.rel (%p465) target = $region48
      $region47: #{residual_block_forward.6} parent=35 // pred_region
        _
      $region48: #{residual_block_forward.6} parent=35 // pred_fallthru
        _
      // Predicated region
      $region49: #{residual_block_forward.6} parent=35 // pred_check
        %p468 = pneg %p177
      $region50: #{residual_block_forward.6} parent=35 // pred_check_branch
        %470 = sbr.rel (%p468) target = $region52
      $region51: #{residual_block_forward.6} parent=35 // pred_region
        _
      $region52: #{residual_block_forward.6} parent=35 // pred_fallthru
        _
      // Predicated region
      $region53: #{residual_block_forward.6} parent=35 // pred_check
        %p471 = pneg %p151
      $region54: #{residual_block_forward.6} parent=35 // pred_check_branch
        %473 = sbr.rel (%p471) target = $region56
      $region55: #{residual_block_forward.6} parent=35 // pred_region
        %p474 = scmp.lt.s32.totalorder %s21, 0
        %s475 = scalar_select %p474, %s21, 0
        %s476 = scalar_lea.vmem %s4, %s475
      $region56: #{residual_block_forward.6} parent=35 // pred_fallthru
        _
      // Predicated region
      $region57: #{residual_block_forward.6} parent=35 // pred_check
        %p477 = pneg %p177
      $region58: #{residual_block_forward.6} parent=35 // pred_check_branch
        %479 = sbr.rel (%p477) target = $region60
      $region59: #{residual_block_forward.6} parent=35 // pred_region
        %p480 = scmp.lt.s32.totalorder %s21, 0
        %s481 = scalar_select %p480, %s21, 0
        %s482 = scalar_lea.vmem %s5, %s481
      $region60: #{residual_block_forward.6} parent=35 // pred_fallthru
        _
    $region36: #{residual_block_forward.6} parent=5 // pred_fallthru
      _
    %p483 = scmp.le.s32.totalorder 2, %s12
    // Predicated region
    $region61: #{residual_block_forward.6} parent=5 // pred_check
      %p484 = pneg %p483
    $region62: #{residual_block_forward.6} parent=5 // pred_check_branch
      %486 = sbr.rel (%p484) target = $region64
    $region63: #{residual_block_forward.6} parent=5 // pred_region
      %s487 = ssub.s32 %s12, 2
    $region64: #{residual_block_forward.6} parent=5 // pred_fallthru
      _
  $region6: #{residual_block_forward.6} parent=0 // loop_footer
    %s16 = sadd.s32 1, %s12
  $region7: #{residual_block_forward.6} parent=0 // loop_footer_branch
    %11 = sbr.rel target = $region3
  $region8: #{residual_block_forward.6} parent=0 // loop_exit
    _

// kernel: residual_block_forward.10
$region0: #{residual_block_forward.10}
  #allocation0 [shape = 'u32[]', space=smem, size = 0x4, offset = 0x4, fixed_abs, tag = 'smem constant byte address 0x4 - core index']
  #allocation1 [shape = 'u32[72,128]{1,0:T(1,128)}', space=vmem, size = 0x9000, scoped, tag = 'internal scratch']
  #allocation2 [shape = 'f32[1,128]{1,0:T(1,128)}', space=vmem, size = 0x200, scoped, tag = 'scratch operand']
  #allocation3 [shape = 'f32[1,128]{1,0:T(1,128)}', space=vmem, size = 0x200, scoped, tag = 'scratch operand']
  %s0 = inlined_call_operand.vmem [shape: bf16[128,72], index: 0, kind: input, shape index: {}]
  %s1 = inlined_call_operand.vmem [shape: bf16[72,128], index: 1, kind: input, shape index: {}]
  %s2 = inlined_call_operand.vmem [shape: f32[1,128], index: 2, kind: input, shape index: {}]
  %s3 = inlined_call_operand.vmem [shape: f32[1,128], index: 3, kind: input, shape index: {}]
  %s4 = inlined_call_operand.vmem [shape: f32[1,128], index: 4, kind: output, shape index: {0}]
  %s5 = inlined_call_operand.vmem [shape: f32[1,128], index: 5, kind: output, shape index: {1}]
  %6 = xla_tuple %s4, %s5
  %s7 = sld [smem:[#allocation0]]
  $region65: #{residual_block_forward.10} parent=0
    _
  %s9 = ssub.s32 1, %s7
  %s10 = scalar_select 0, %s9, %s7
  loop: start=0, step=1, limit=4
  $region2: #{residual_block_forward.10} parent=0 // loop_pre_header
    _
  $region3: #{residual_block_forward.10} parent=0 // loop_header
    %s12 = sphi 0, %s16
    %p13 = scmp.ge.s32.totalorder %s12, 4
    %s19 = sphi 0, %s31
    %s20 = sphi 0, %s27
    %s21 = sphi 0, %s19
    %s22 = sphi 0, %s20
    %s23 = sphi 0, %s21
    %s24 = sphi 0, %s22
    %s34 = sphi 0, %s36
    %s37 = sphi 0, %s34
    %s38 = sphi 0, %s37
    %s54 = sphi 0, %s38
    %s60 = sphi 0, %s62
    %s63 = sphi 0, %s60
    %s64 = sphi 0, %s63
    %s80 = sphi 0, %s64
    %s86 = sphi 0, %s88
    %s89 = sphi 0, %s86
    %s90 = sphi 0, %s89
    %s106 = sphi 0, %s90
    %s112 = sphi 0, %s114
    %s115 = sphi 0, %s112
    %s116 = sphi 0, %s115
    %s132 = sphi 0, %s116
    %s138 = sphi 0, %s140
    %s141 = sphi 0, %s138
    %s142 = sphi 0, %s141
    %s158 = sphi 0, %s142
    %s164 = sphi 0, %s166
    %s167 = sphi 0, %s164
    %s168 = sphi 0, %s167
    %s184 = sphi 0, %s168
  $region4: #{residual_block_forward.10} parent=0 // loop_header_branch
    %15 = sbr.rel (%p13) target = $region8
  $region5: #{residual_block_forward.10} parent=0 // loop_body
    %s17 = ssub.s32 %s12, 1
    %s18 = ssub.s32 %s12, 2
    %s25 = sadd.s32 1, %s20
    %p26 = scmp.ge.s32.totalorder %s25, 2
    %s27 = scalar_select %p26, 0, %s25
    %s28 = sadd.s32 1, %s19
    %s29 = scalar_select %p26, %s28, %s19
    %p30 = scmp.ge.s32.totalorder %s29, 1
    %s31 = scalar_select %p30, 0, %s29
    %s32 = ssub.s32 %s20, %s27
    %p33 = scmp.eq.s32.totalorder %s32, 0
    %s35 = sadd.s32 %s34, 1
    %s36 = scalar_select %p33, %s34, %s35
    %p39 = pneg %p33
    %p40 = scmp.eq.s32.totalorder %s12, 1
    %p41 = por %p39, %p40
    %p42 = scmp.ne.s32.totalorder %s34, %s37
    %p43 = scmp.eq.s32.totalorder %s12, 0
    %p44 = por %p42, %p43
    %p45 = scmp.ne.s32.totalorder %s34, %s37
    %p46 = scmp.eq.s32.totalorder %s17, 1
    %p47 = por %p45, %p46
    %p48 = scmp.ne.s32.totalorder %s37, %s38
    %p49 = scmp.eq.s32.totalorder %s17, 0
    %p50 = por %p48, %p49
    %p51 = scmp.ne.s32.totalorder %s37, %s38
    %p52 = scmp.eq.s32.totalorder %s18, 1
    %p53 = por %p51, %p52
    %p55 = scmp.ne.s32.totalorder %s38, %s54
    %p56 = scmp.eq.s32.totalorder %s18, 0
    %p57 = por %p55, %p56
    %s58 = ssub.s32 %s19, %s31
    %p59 = scmp.eq.s32.totalorder %s58, 0
    %s61 = sadd.s32 %s60, 1
    %s62 = scalar_select %p59, %s60, %s61
    %p65 = pneg %p59
    %p66 = scmp.eq.s32.totalorder %s12, 1
    %p67 = por %p65, %p66
    %p68 = scmp.ne.s32.totalorder %s60, %s63
    %p69 = scmp.eq.s32.totalorder %s12, 0
    %p70 = por %p68, %p69
    %p71 = scmp.ne.s32.totalorder %s60, %s63
    %p72 = scmp.eq.s32.totalorder %s17, 1
    %p73 = por %p71, %p72
    %p74 = scmp.ne.s32.totalorder %s63, %s64
    %p75 = scmp.eq.s32.totalorder %s17, 0
    %p76 = por %p74, %p75
    %p77 = scmp.ne.s32.totalorder %s63, %s64
    %p78 = scmp.eq.s32.totalorder %s18, 1
    %p79 = por %p77, %p78
    %p81 = scmp.ne.s32.totalorder %s64, %s80
    %p82 = scmp.eq.s32.totalorder %s18, 0
    %p83 = por %p81, %p82
    %s84 = ssub.s32 %s19, %s31
    %p85 = scmp.eq.s32.totalorder %s84, 0
    %s87 = sadd.s32 %s86, 1
    %s88 = scalar_select %p85, %s86, %s87
    %p91 = pneg %p85
    %p92 = scmp.eq.s32.totalorder %s12, 1
    %p93 = por %p91, %p92
    %p94 = scmp.ne.s32.totalorder %s86, %s89
    %p95 = scmp.eq.s32.totalorder %s12, 0
    %p96 = por %p94, %p95
    %p97 = scmp.ne.s32.totalorder %s86, %s89
    %p98 = scmp.eq.s32.totalorder %s17, 1
    %p99 = por %p97, %p98
    %p100 = scmp.ne.s32.totalorder %s89, %s90
    %p101 = scmp.eq.s32.totalorder %s17, 0
    %p102 = por %p100, %p101
    %p103 = scmp.ne.s32.totalorder %s89, %s90
    %p104 = scmp.eq.s32.totalorder %s18, 1
    %p105 = por %p103, %p104
    %p107 = scmp.ne.s32.totalorder %s90, %s106
    %p108 = scmp.eq.s32.totalorder %s18, 0
    %p109 = por %p107, %p108
    %s110 = ssub.s32 %s19, %s31
    %p111 = scmp.eq.s32.totalorder %s110, 0
    %s113 = sadd.s32 %s112, 1
    %s114 = scalar_select %p111, %s112, %s113
    %p117 = pneg %p111
    %p118 = scmp.eq.s32.totalorder %s12, 1
    %p119 = por %p117, %p118
    %p120 = scmp.ne.s32.totalorder %s112, %s115
    %p121 = scmp.eq.s32.totalorder %s12, 0
    %p122 = por %p120, %p121
    %p123 = scmp.ne.s32.totalorder %s112, %s115
    %p124 = scmp.eq.s32.totalorder %s17, 1
    %p125 = por %p123, %p124
    %p126 = scmp.ne.s32.totalorder %s115, %s116
    %p127 = scmp.eq.s32.totalorder %s17, 0
    %p128 = por %p126, %p127
    %p129 = scmp.ne.s32.totalorder %s115, %s116
    %p130 = scmp.eq.s32.totalorder %s18, 1
    %p131 = por %p129, %p130
    %p133 = scmp.ne.s32.totalorder %s116, %s132
    %p134 = scmp.eq.s32.totalorder %s18, 0
    %p135 = por %p133, %p134
    %s136 = ssub.s32 %s19, %s31
    %p137 = scmp.eq.s32.totalorder %s136, 0
    %s139 = sadd.s32 %s138, 1
    %s140 = scalar_select %p137, %s138, %s139
    %p143 = pneg %p137
    %p144 = scmp.eq.s32.totalorder %s12, 1
    %p145 = por %p143, %p144
    %p146 = scmp.ne.s32.totalorder %s138, %s141
    %p147 = scmp.eq.s32.totalorder %s12, 0
    %p148 = por %p146, %p147
    %p149 = scmp.ne.s32.totalorder %s138, %s141
    %p150 = scmp.eq.s32.totalorder %s17, 1
    %p151 = por %p149, %p150
    %p152 = scmp.ne.s32.totalorder %s141, %s142
    %p153 = scmp.eq.s32.totalorder %s17, 0
    %p154 = por %p152, %p153
    %p155 = scmp.ne.s32.totalorder %s141, %s142
    %p156 = scmp.eq.s32.totalorder %s18, 1
    %p157 = por %p155, %p156
    %p159 = scmp.ne.s32.totalorder %s142, %s158
    %p160 = scmp.eq.s32.totalorder %s18, 0
    %p161 = por %p159, %p160
    %s162 = ssub.s32 %s19, %s31
    %p163 = scmp.eq.s32.totalorder %s162, 0
    %s165 = sadd.s32 %s164, 1
    %s166 = scalar_select %p163, %s164, %s165
    %p169 = pneg %p163
    %p170 = scmp.eq.s32.totalorder %s12, 1
    %p171 = por %p169, %p170
    %p172 = scmp.ne.s32.totalorder %s164, %s167
    %p173 = scmp.eq.s32.totalorder %s12, 0
    %p174 = por %p172, %p173
    %p175 = scmp.ne.s32.totalorder %s164, %s167
    %p176 = scmp.eq.s32.totalorder %s17, 1
    %p177 = por %p175, %p176
    %p178 = scmp.ne.s32.totalorder %s167, %s168
    %p179 = scmp.eq.s32.totalorder %s17, 0
    %p180 = por %p178, %p179
    %p181 = scmp.ne.s32.totalorder %s167, %s168
    %p182 = scmp.eq.s32.totalorder %s18, 1
    %p183 = por %p181, %p182
    %p185 = scmp.ne.s32.totalorder %s168, %s184
    %p186 = scmp.eq.s32.totalorder %s18, 0
    %p187 = por %p185, %p186
    %p188 = scmp.le.s32.totalorder 1, %s12
    %p189 = scmp.lt.s32.totalorder %s12, 3
    %p190 = pnand %p188, %p189
    %p191 = pneg %p190
    // Predicated region
    $region9: #{residual_block_forward.10} parent=5 // pred_check
      _
    $region10: #{residual_block_forward.10} parent=5 // pred_check_branch
      %193 = sbr.rel (%p190) target = $region12
    $region11: #{residual_block_forward.10} parent=5 // pred_region
      %s194 = ssub.s32 %s12, 1
      // Predicated region
      $region13: #{residual_block_forward.10} parent=11 // pred_check
        %p195 = pneg %p76
      $region14: #{residual_block_forward.10} parent=11 // pred_check_branch
        %197 = sbr.rel (%p195) target = $region16
      $region15: #{residual_block_forward.10} parent=11 // pred_region
        %p198 = scmp.lt.s32.totalorder %s21, 0
        %s199 = scalar_select %p198, %s21, 0
        %s200 = smul.addr %s199, 4
        %s201 = scalar_lea.vmem %s1, %s200
      $region16: #{residual_block_forward.10} parent=11 // pred_fallthru
        _
      // Predicated region
      $region17: #{residual_block_forward.10} parent=11 // pred_check
        %p202 = pneg %p102
      $region18: #{residual_block_forward.10} parent=11 // pred_check_branch
        %204 = sbr.rel (%p202) target = $region20
      $region19: #{residual_block_forward.10} parent=11 // pred_region
        %p205 = scmp.lt.s32.totalorder %s21, 0
        %s206 = scalar_select %p205, %s21, 0
        %s207 = scalar_lea.vmem %s2, %s206
      $region20: #{residual_block_forward.10} parent=11 // pred_fallthru
        _
      // Predicated region
      $region21: #{residual_block_forward.10} parent=11 // pred_check
        %p208 = pneg %p128
      $region22: #{residual_block_forward.10} parent=11 // pred_check_branch
        %210 = sbr.rel (%p208) target = $region24
      $region23: #{residual_block_forward.10} parent=11 // pred_region
        %p211 = scmp.lt.s32.totalorder %s21, 0
        %s212 = scalar_select %p211, %s21, 0
        %s213 = scalar_lea.vmem %s3, %s212
      $region24: #{residual_block_forward.10} parent=11 // pred_fallthru
        _
    $region12: #{residual_block_forward.10} parent=5 // pred_fallthru
      _
    %p214 = scmp.lt.s32.totalorder %s12, 2
    // Predicated region
    $region25: #{residual_block_forward.10} parent=5 // pred_check
      %p215 = pneg %p214
    $region26: #{residual_block_forward.10} parent=5 // pred_check_branch
      %217 = sbr.rel (%p215) target = $region28
    $region27: #{residual_block_forward.10} parent=5 // pred_region
      // Predicated region
      $region29: #{residual_block_forward.10} parent=27 // pred_check
        %p218 = pneg %p44
      $region30: #{residual_block_forward.10} parent=27 // pred_check_branch
        %220 = sbr.rel (%p218) target = $region32
      $region31: #{residual_block_forward.10} parent=27 // pred_region
        %s221 = smul.u32 8, %s20
        %p222 = scmp.lt.s32.totalorder %s221, 15
        %s223 = scalar_select %p222, %s221, 15
        %s224 = smul.addr %s223, 4
        %s225 = scalar_lea.vmem %s0, %s224
        %s226 = smul.u32 8, %s20
      $region32: #{residual_block_forward.10} parent=27 // pred_fallthru
        _
    $region28: #{residual_block_forward.10} parent=5 // pred_fallthru
      _
    %p227 = scmp.le.s32.totalorder 1, %s12
    %p228 = scmp.lt.s32.totalorder %s12, 3
    %p229 = pnand %p227, %p228
    %p230 = pneg %p229
    // Predicated region
    $region33: #{residual_block_forward.10} parent=5 // pred_check
      _
    $region34: #{residual_block_forward.10} parent=5 // pred_check_branch
      %232 = sbr.rel (%p229) target = $region36
    $region35: #{residual_block_forward.10} parent=5 // pred_region
      %s233 = ssub.s32 %s12, 1
      %s234 = smul.u32 8, %s22
      %p235 = scmp.lt.s32.totalorder %s234, 15
      %s236 = scalar_select %p235, %s234, 15
      %s237 = smul.addr %s236, 4
      %s238 = scalar_lea.vmem %s0, %s237
      %p239 = pneg %p50
      %p240 = pneg %p47
      %p241 = scmp.lt.s32.totalorder %s21, 0
      %s242 = scalar_select %p241, %s21, 0
      %s243 = smul.addr %s242, 4
      %s244 = scalar_lea.vmem %s1, %s243
      %p245 = pneg %p76
      %p246 = pneg %p73
      %p247 = scmp.lt.s32.totalorder %s21, 0
      %s248 = scalar_select %p247, %s21, 0
      %s249 = scalar_lea.vmem %s2, %s248
      %p250 = pneg %p102
      %p251 = pneg %p99
      %p252 = scmp.lt.s32.totalorder %s21, 0
      %s253 = scalar_select %p252, %s21, 0
      %s254 = scalar_lea.vmem %s3, %s253
      %p255 = pneg %p128
      %p256 = pneg %p125
      %p257 = pneg %p154
      %p258 = pneg %p151
      %p259 = scmp.lt.s32.totalorder %s21, 0
      %s260 = scalar_select %p259, %s21, 0
      %s261 = scalar_lea.vmem %s4, %s260
      %p262 = pneg %p180
      %p263 = pneg %p177
      %p264 = scmp.lt.s32.totalorder %s21, 0
      %s265 = scalar_select %p264, %s21, 0
      %s266 = scalar_lea.vmem %s5, %s265
      %s267 = smul.u32 8, %s22
      %p268 = scmp.lt.s32.totalorder %s267, 15
      %s269 = scalar_select %p268, %s267, 15
      %s270 = smul.addr %s269, 4
      %s271 = scalar_lea.vmem %s0, %s270
      %s272 = smul.u32 8, %s22
      %p273 = scmp.lt.s32.totalorder %s21, 0
      %s274 = scalar_select %p273, %s21, 0
      %s275 = smul.addr %s274, 4
      %s276 = scalar_lea.vmem %s1, %s275
      %p277 = scmp.lt.s32.totalorder %s21, 0
      %s278 = scalar_select %p277, %s21, 0
      %s279 = scalar_lea.vmem %s2, %s278
      %p280 = scmp.lt.s32.totalorder %s21, 0
      %s281 = scalar_select %p280, %s21, 0
      %s282 = scalar_lea.vmem %s3, %s281
      %p283 = scmp.lt.s32.totalorder %s21, 0
      %s284 = scalar_select %p283, %s21, 0
      %s285 = scalar_lea.vmem %s4, %s284
      %p286 = scmp.lt.s32.totalorder %s21, 0
      %s287 = scalar_select %p286, %s21, 0
      %s288 = scalar_lea.vmem %s5, %s287
      %p290 = scmp.eq.s32.totalorder %s22, 0
      // Predicated region
      $region37: #{residual_block_forward.10} parent=35 // pred_check
        %p291 = pneg %p290
      $region38: #{residual_block_forward.10} parent=35 // pred_check_branch
        %293 = sbr.rel (%p291) target = $region40
      $region39: #{residual_block_forward.10} parent=35 // pred_region
        %294 = vst [vmem:[#allocation2] sm:$0x1] 0.0
        %295 = vst [vmem:[#allocation3] sm:$0x1] 0.0
      $region40: #{residual_block_forward.10} parent=35 // pred_fallthru
        _
      %v296 = vld [vmem:[%s271] sm:$0xf]
      %v297 = vld [vmem:[%s271 + $0x4] sm:$0xf]
      %v298 = vld [vmem:[%s271 + $0x8] sm:$0xf]
      %v299 = vld [vmem:[%s271 + $0xc] sm:$0xf]
      %v300 = vld [vmem:[%s271 + $0x10] sm:$0xf]
      %v301 = vld [vmem:[%s271 + $0x14] sm:$0xf]
      %v302 = vld [vmem:[%s271 + $0x18] sm:$0xf]
      %v303 = vld [vmem:[%s271 + $0x1c] sm:$0xf]
      %v304 = vld [vmem:[%s276] sm:$0xf]
      %v305 = vld [vmem:[%s276 + $0x4] sm:$0xf]
      %v306 = vld [vmem:[%s276 + $0x8] sm:$0xf]
      %v307 = vld [vmem:[%s276 + $0xc] sm:$0xf]
      %v308 = vld [vmem:[%s276 + $0x10] sm:$0xf]
      %v309 = vld [vmem:[%s276 + $0x14] sm:$0xf]
      %v310 = vld [vmem:[%s276 + $0x18] sm:$0xf]
      %v311 = vld [vmem:[%s276 + $0x1c] sm:$0xf]
      %v312 = vld [vmem:[%s276 + $0x20] sm:$0xf]
      %v321 = vunpack.c.l.b16 %v296
      %v322 = vunpack.c.l.b16 %v297
      %v323 = vunpack.c.l.b16 %v298
      %v324 = vunpack.c.l.b16 %v299
      %v325 = vunpack.c.l.b16 %v300
      %v326 = vunpack.c.l.b16 %v301
      %v327 = vunpack.c.l.b16 %v302
      %v328 = vunpack.c.l.b16 %v303
      %v329 = vpack.c.b16 %v322, %v321
      %v330 = vpack.c.b16 %v324, %v323
      %v331 = vpack.c.b16 %v326, %v325
      %v332 = vpack.c.b16 %v328, %v327
      %v342 = vunpack.c.l.b16 %v304
      %v343 = vunpack.c.l.b16 %v305
      %v344 = vunpack.c.l.b16 %v306
      %v345 = vunpack.c.l.b16 %v307
      %v346 = vunpack.c.l.b16 %v308
      %v347 = vunpack.c.l.b16 %v309
      %v348 = vunpack.c.l.b16 %v310
      %v349 = vunpack.c.l.b16 %v311
      %v350 = vunpack.c.l.b16 %v312
      %v351 = vpack.c.b16 %v343, %v342
      %v352 = vpack.c.b16 %v345, %v344
      %v353 = vpack.c.b16 %v347, %v346
      %v354 = vpack.c.b16 %v349, %v348
      %v355 = vpack.c.b16 %v350, %v350
      %vm360 = vcmask 588800
      %v362 = vsel %vm360, %v329, 0
      %v365 = vsel %vm360, %v330, 0
      %v368 = vsel %vm360, %v331, 0
      %v371 = vsel %vm360, %v332, 0
      %vm373 = vcmask 1043456
      %v375 = vsel %vm373, %v355, 0
      %377 = vmatpush.bf16.msra.mxu0 0
      %378 = vmatpush.bf16.msra.mxu0 0
      %379 = vmatpush.bf16.msra.mxu0 0
      %380 = vmatpush.bf16.msra.mxu0 %v375
      %381 = vmatpush.bf16.msra.mxu0 %v354
      %382 = vmatpush.bf16.msra.mxu0 %v353
      %383 = vmatpush.bf16.msra.mxu0 %v352
      %384 = vmatpush.bf16.msra.mxu0 %v351
      %385 = vmatmul.bf16.gmra.mxu0 %v362
      %v386 = vpop.f32.mrf.mxu0
      %v387 = vadd.f32 0.0, %v386
      %v388 = vpop.f32.mrf.mxu0
      %v389 = vadd.f32 0.0, %v388
      %390 = vmatmul.bf16.gmra.mxu0 %v365
      %v391 = vpop.f32.mrf.mxu0
      %v392 = vadd.f32 0.0, %v391
      %v393 = vpop.f32.mrf.mxu0
      %v394 = vadd.f32 0.0, %v393
      %395 = vmatmul.bf16.gmra.mxu0 %v368
      %v396 = vpop.f32.mrf.mxu0
      %v397 = vadd.f32 0.0, %v396
      %v398 = vpop.f32.mrf.mxu0
      %v399 = vadd.f32 0.0, %v398
      %400 = vmatmul.bf16.gmra.mxu0 %v371
      %v401 = vpop.f32.mrf.mxu0
      %v402 = vadd.f32 0.0, %v401
      %v403 = vpop.f32.mrf.mxu0
      %v404 = vadd.f32 0.0, %v403
      %405 = vdwg.mxu0
      %v406 = vld [vmem:[#allocation2] sm:$0x1]
      %v407 = vadd.f32 %v387, %v389
      %v408 = vadd.f32 %v407, %v392
      %v409 = vadd.f32 %v408, %v394
      %v410 = vadd.f32 %v409, %v397
      %v411 = vadd.f32 %v410, %v399
      %v412 = vadd.f32 %v411, %v402
      %v413 = vadd.f32 %v412, %v404
      %v414 = vrot.slane %v413, 4
      %v415 = vadd.f32 %v413, %v414
      %v416 = vrot.slane %v415, 2
      %v417 = vadd.f32 %v415, %v416
      %v418 = vrot.slane %v417, 1
      %v419 = vadd.f32 %v417, %v418
      %v420 = vadd.f32 %v406, %v419
      %421 = vst [vmem:[#allocation2] sm:$0x1] %v420
      %v422 = vld [vmem:[#allocation3] sm:$0x1]
      %v423 = vmul.f32 %v387, %v387
      %v424 = vmul.f32 %v389, %v389
      %v425 = vmul.f32 %v392, %v392
      %v426 = vmul.f32 %v394, %v394
      %v427 = vmul.f32 %v397, %v397
      %v428 = vmul.f32 %v399, %v399
      %v429 = vmul.f32 %v402, %v402
      %v430 = vmul.f32 %v404, %v404
      %v431 = vadd.f32 %v423, %v424
      %v432 = vadd.f32 %v431, %v425
      %v433 = vadd.f32 %v432, %v426
      %v434 = vadd.f32 %v433, %v427
      %v435 = vadd.f32 %v434, %v428
      %v436 = vadd.f32 %v435, %v429
      %v437 = vadd.f32 %v436, %v430
      %v438 = vrot.slane %v437, 4
      %v439 = vadd.f32 %v437, %v438
      %v440 = vrot.slane %v439, 2
      %v441 = vadd.f32 %v439, %v440
      %v442 = vrot.slane %v441, 1
      %v443 = vadd.f32 %v441, %v442
      %v444 = vadd.f32 %v422, %v443
      %445 = vst [vmem:[#allocation3] sm:$0x1] %v444
      %p446 = scmp.eq.s32.totalorder %s22, 1
      // Predicated region
      $region41: #{residual_block_forward.10} parent=35 // pred_check
        %p447 = pneg %p446
      $region42: #{residual_block_forward.10} parent=35 // pred_check_branch
        %449 = sbr.rel (%p447) target = $region44
      $region43: #{residual_block_forward.10} parent=35 // pred_region
        %v450 = vld [vmem:[#allocation2] sm:$0x1]
        %v451 = vmul.f32 %v450, 0.0078125
        %v452 = vld [vmem:[#allocation3] sm:$0x1]
        %v453 = vmul.f32 %v452, 0.0078125
        %v454 = vmul.f32 %v451, %v451
        %v455 = vsub.f32 %v453, %v454
        %v456 = vmax.f32 %v455, 0.0
        %v457 = vld [vmem:[%s279] sm:$0x1]
        %v458 = vadd.f32 %v456, 1e-05
        %v459 = vrsqrt.pop %v458
        %v460 = vmul.f32 %v459, %v458
        %v461 = vmul.f32 %v460, %v459
        %v462 = vmul.f32 0.5, %v461
        %v463 = vsub.f32 1.5, %v462
        %v464 = vmul.f32 %v459, %v463
        %vm465 = vweird.f32 %v458
        %vm466 = vweird.f32 %v459
        %vm467 = vmor %vm465, %vm466
        %v468 = vsel %vm467, %v459, %v464
        %v469 = vmul.f32 %v457, %v468
        %470 = vst [vmem:[%s285] sm:$0x1] %v469
        %v471 = vld [vmem:[%s282] sm:$0x1]
        %v472 = vmul.f32 %v451, %v469
        %v473 = vsub.f32 %v471, %v472
        %474 = vst [vmem:[%s288] sm:$0x1] %v473
      $region44: #{residual_block_forward.10} parent=35 // pred_fallthru
        _
      %p475 = scmp.lt.s32.totalorder %s21, 0
      %s476 = scalar_select %p475, %s21, 0
      %s477 = scalar_lea.vmem %s4, %s476
      %p478 = scmp.lt.s32.totalorder %s21, 0
      %s479 = scalar_select %p478, %s21, 0
      %s480 = scalar_lea.vmem %s5, %s479
      // Predicated region
      $region45: #{residual_block_forward.10} parent=35 // pred_check
        %p481 = pneg %p151
      $region46: #{residual_block_forward.10} parent=35 // pred_check_branch
        %483 = sbr.rel (%p481) target = $region48
      $region47: #{residual_block_forward.10} parent=35 // pred_region
        _
      $region48: #{residual_block_forward.10} parent=35 // pred_fallthru
        _
      // Predicated region
      $region49: #{residual_block_forward.10} parent=35 // pred_check
        %p484 = pneg %p177
      $region50: #{residual_block_forward.10} parent=35 // pred_check_branch
        %486 = sbr.rel (%p484) target = $region52
      $region51: #{residual_block_forward.10} parent=35 // pred_region
        _
      $region52: #{residual_block_forward.10} parent=35 // pred_fallthru
        _
      // Predicated region
      $region53: #{residual_block_forward.10} parent=35 // pred_check
        %p487 = pneg %p151
      $region54: #{residual_block_forward.10} parent=35 // pred_check_branch
        %489 = sbr.rel (%p487) target = $region56
      $region55: #{residual_block_forward.10} parent=35 // pred_region
        %p490 = scmp.lt.s32.totalorder %s21, 0
        %s491 = scalar_select %p490, %s21, 0
        %s492 = scalar_lea.vmem %s4, %s491
      $region56: #{residual_block_forward.10} parent=35 // pred_fallthru
        _
      // Predicated region
      $region57: #{residual_block_forward.10} parent=35 // pred_check
        %p493 = pneg %p177
      $region58: #{residual_block_forward.10} parent=35 // pred_check_branch
        %495 = sbr.rel (%p493) target = $region60
      $region59: #{residual_block_forward.10} parent=35 // pred_region
        %p496 = scmp.lt.s32.totalorder %s21, 0
        %s497 = scalar_select %p496, %s21, 0
        %s498 = scalar_lea.vmem %s5, %s497
      $region60: #{residual_block_forward.10} parent=35 // pred_fallthru
        _
    $region36: #{residual_block_forward.10} parent=5 // pred_fallthru
      _
    %p499 = scmp.le.s32.totalorder 2, %s12
    // Predicated region
    $region61: #{residual_block_forward.10} parent=5 // pred_check
      %p500 = pneg %p499
    $region62: #{residual_block_forward.10} parent=5 // pred_check_branch
      %502 = sbr.rel (%p500) target = $region64
    $region63: #{residual_block_forward.10} parent=5 // pred_region
      %s503 = ssub.s32 %s12, 2
    $region64: #{residual_block_forward.10} parent=5 // pred_fallthru
      _
  $region6: #{residual_block_forward.10} parent=0 // loop_footer
    %s16 = sadd.s32 1, %s12
  $region7: #{residual_block_forward.10} parent=0 // loop_footer_branch
    %11 = sbr.rel target = $region3
  $region8: #{residual_block_forward.10} parent=0 // loop_exit
    _

// kernel: residual_block_forward.9
$region0: #{residual_block_forward.9}
  #allocation0 [shape = 'u32[]', space=smem, size = 0x4, offset = 0x4, fixed_abs, tag = 'smem constant byte address 0x4 - core index']
  #allocation1 [shape = 'u32[72,128]{1,0:T(1,128)}', space=vmem, size = 0x9000, scoped, tag = 'internal scratch']
  %s0 = inlined_call_operand.vmem [shape: bf16[128,4], index: 0, kind: input, shape index: {}]
  %s1 = inlined_call_operand.vmem [shape: bf16[4,128], index: 1, kind: input, shape index: {}]
  %s2 = inlined_call_operand.vmem [shape: f32[1,128], index: 2, kind: input, shape index: {}]
  %s3 = inlined_call_operand.vmem [shape: f32[1,128], index: 3, kind: input, shape index: {}]
  %s4 = inlined_call_operand.vmem [shape: f32[128,128], index: 4, kind: output, shape index: {}]
  %s5 = sld [smem:[#allocation0]]
  $region49: #{residual_block_forward.9} parent=0
    _
  %s7 = ssub.s32 1, %s5
  %s8 = scalar_select 0, %s7, %s5
  loop: start=0, step=1, limit=4
  $region2: #{residual_block_forward.9} parent=0 // loop_pre_header
    _
  $region3: #{residual_block_forward.9} parent=0 // loop_header
    %s10 = sphi 0, %s14
    %p11 = scmp.ge.s32.totalorder %s10, 4
    %s17 = sphi 0, %s29
    %s18 = sphi 0, %s25
    %s19 = sphi 0, %s17
    %s20 = sphi 0, %s18
    %s21 = sphi 0, %s19
    %s22 = sphi 0, %s20
    %s32 = sphi 0, %s34
    %s35 = sphi 0, %s32
    %s36 = sphi 0, %s35
    %s52 = sphi 0, %s36
    %s58 = sphi 0, %s60
    %s61 = sphi 0, %s58
    %s62 = sphi 0, %s61
    %s78 = sphi 0, %s62
    %s84 = sphi 0, %s86
    %s87 = sphi 0, %s84
    %s88 = sphi 0, %s87
    %s104 = sphi 0, %s88
    %s110 = sphi 0, %s112
    %s113 = sphi 0, %s110
    %s114 = sphi 0, %s113
    %s130 = sphi 0, %s114
    %s138 = sphi 0, %s140
    %s141 = sphi 0, %s138
    %s142 = sphi 0, %s141
    %s158 = sphi 0, %s142
  $region4: #{residual_block_forward.9} parent=0 // loop_header_branch
    %13 = sbr.rel (%p11) target = $region8
  $region5: #{residual_block_forward.9} parent=0 // loop_body
    %s15 = ssub.s32 %s10, 1
    %s16 = ssub.s32 %s10, 2
    %s23 = sadd.s32 1, %s18
    %p24 = scmp.ge.s32.totalorder %s23, 2
    %s25 = scalar_select %p24, 0, %s23
    %s26 = sadd.s32 1, %s17
    %s27 = scalar_select %p24, %s26, %s17
    %p28 = scmp.ge.s32.totalorder %s27, 1
    %s29 = scalar_select %p28, 0, %s27
    %s30 = ssub.s32 %s18, %s25
    %p31 = scmp.eq.s32.totalorder %s30, 0
    %s33 = sadd.s32 %s32, 1
    %s34 = scalar_select %p31, %s32, %s33
    %p37 = pneg %p31
    %p38 = scmp.eq.s32.totalorder %s10, 1
    %p39 = por %p37, %p38
    %p40 = scmp.ne.s32.totalorder %s32, %s35
    %p41 = scmp.eq.s32.totalorder %s10, 0
    %p42 = por %p40, %p41
    %p43 = scmp.ne.s32.totalorder %s32, %s35
    %p44 = scmp.eq.s32.totalorder %s15, 1
    %p45 = por %p43, %p44
    %p46 = scmp.ne.s32.totalorder %s35, %s36
    %p47 = scmp.eq.s32.totalorder %s15, 0
    %p48 = por %p46, %p47
    %p49 = scmp.ne.s32.totalorder %s35, %s36
    %p50 = scmp.eq.s32.totalorder %s16, 1
    %p51 = por %p49, %p50
    %p53 = scmp.ne.s32.totalorder %s36, %s52
    %p54 = scmp.eq.s32.totalorder %s16, 0
    %p55 = por %p53, %p54
    %s56 = ssub.s32 %s17, %s29
    %p57 = scmp.eq.s32.totalorder %s56, 0
    %s59 = sadd.s32 %s58, 1
    %s60 = scalar_select %p57, %s58, %s59
    %p63 = pneg %p57
    %p64 = scmp.eq.s32.totalorder %s10, 1
    %p65 = por %p63, %p64
    %p66 = scmp.ne.s32.totalorder %s58, %s61
    %p67 = scmp.eq.s32.totalorder %s10, 0
    %p68 = por %p66, %p67
    %p69 = scmp.ne.s32.totalorder %s58, %s61
    %p70 = scmp.eq.s32.totalorder %s15, 1
    %p71 = por %p69, %p70
    %p72 = scmp.ne.s32.totalorder %s61, %s62
    %p73 = scmp.eq.s32.totalorder %s15, 0
    %p74 = por %p72, %p73
    %p75 = scmp.ne.s32.totalorder %s61, %s62
    %p76 = scmp.eq.s32.totalorder %s16, 1
    %p77 = por %p75, %p76
    %p79 = scmp.ne.s32.totalorder %s62, %s78
    %p80 = scmp.eq.s32.totalorder %s16, 0
    %p81 = por %p79, %p80
    %s82 = ssub.s32 %s17, %s29
    %p83 = scmp.eq.s32.totalorder %s82, 0
    %s85 = sadd.s32 %s84, 1
    %s86 = scalar_select %p83, %s84, %s85
    %p89 = pneg %p83
    %p90 = scmp.eq.s32.totalorder %s10, 1
    %p91 = por %p89, %p90
    %p92 = scmp.ne.s32.totalorder %s84, %s87
    %p93 = scmp.eq.s32.totalorder %s10, 0
    %p94 = por %p92, %p93
    %p95 = scmp.ne.s32.totalorder %s84, %s87
    %p96 = scmp.eq.s32.totalorder %s15, 1
    %p97 = por %p95, %p96
    %p98 = scmp.ne.s32.totalorder %s87, %s88
    %p99 = scmp.eq.s32.totalorder %s15, 0
    %p100 = por %p98, %p99
    %p101 = scmp.ne.s32.totalorder %s87, %s88
    %p102 = scmp.eq.s32.totalorder %s16, 1
    %p103 = por %p101, %p102
    %p105 = scmp.ne.s32.totalorder %s88, %s104
    %p106 = scmp.eq.s32.totalorder %s16, 0
    %p107 = por %p105, %p106
    %s108 = ssub.s32 %s17, %s29
    %p109 = scmp.eq.s32.totalorder %s108, 0
    %s111 = sadd.s32 %s110, 1
    %s112 = scalar_select %p109, %s110, %s111
    %p115 = pneg %p109
    %p116 = scmp.eq.s32.totalorder %s10, 1
    %p117 = por %p115, %p116
    %p118 = scmp.ne.s32.totalorder %s110, %s113
    %p119 = scmp.eq.s32.totalorder %s10, 0
    %p120 = por %p118, %p119
    %p121 = scmp.ne.s32.totalorder %s110, %s113
    %p122 = scmp.eq.s32.totalorder %s15, 1
    %p123 = por %p121, %p122
    %p124 = scmp.ne.s32.totalorder %s113, %s114
    %p125 = scmp.eq.s32.totalorder %s15, 0
    %p126 = por %p124, %p125
    %p127 = scmp.ne.s32.totalorder %s113, %s114
    %p128 = scmp.eq.s32.totalorder %s16, 1
    %p129 = por %p127, %p128
    %p131 = scmp.ne.s32.totalorder %s114, %s130
    %p132 = scmp.eq.s32.totalorder %s16, 0
    %p133 = por %p131, %p132
    %s134 = ssub.s32 %s18, %s25
    %s135 = ssub.s32 %s17, %s29
    %s136 = sor.u32 %s134, %s135
    %p137 = scmp.eq.s32.totalorder %s136, 0
    %s139 = sadd.s32 %s138, 1
    %s140 = scalar_select %p137, %s138, %s139
    %p143 = pneg %p137
    %p144 = scmp.eq.s32.totalorder %s10, 1
    %p145 = por %p143, %p144
    %p146 = scmp.ne.s32.totalorder %s138, %s141
    %p147 = scmp.eq.s32.totalorder %s10, 0
    %p148 = por %p146, %p147
    %p149 = scmp.ne.s32.totalorder %s138, %s141
    %p150 = scmp.eq.s32.totalorder %s15, 1
    %p151 = por %p149, %p150
    %p152 = scmp.ne.s32.totalorder %s141, %s142
    %p153 = scmp.eq.s32.totalorder %s15, 0
    %p154 = por %p152, %p153
    %p155 = scmp.ne.s32.totalorder %s141, %s142
    %p156 = scmp.eq.s32.totalorder %s16, 1
    %p157 = por %p155, %p156
    %p159 = scmp.ne.s32.totalorder %s142, %s158
    %p160 = scmp.eq.s32.totalorder %s16, 0
    %p161 = por %p159, %p160
    %p162 = scmp.le.s32.totalorder 1, %s10
    %p163 = scmp.lt.s32.totalorder %s10, 3
    %p164 = pnand %p162, %p163
    %p165 = pneg %p164
    // Predicated region
    $region9: #{residual_block_forward.9} parent=5 // pred_check
      _
    $region10: #{residual_block_forward.9} parent=5 // pred_check_branch
      %167 = sbr.rel (%p164) target = $region12
    $region11: #{residual_block_forward.9} parent=5 // pred_region
      %s168 = ssub.s32 %s10, 1
      // Predicated region
      $region13: #{residual_block_forward.9} parent=11 // pred_check
        %p169 = pneg %p74
      $region14: #{residual_block_forward.9} parent=11 // pred_check_branch
        %171 = sbr.rel (%p169) target = $region16
      $region15: #{residual_block_forward.9} parent=11 // pred_region
        %p172 = scmp.lt.s32.totalorder %s19, 0
        %s173 = scalar_select %p172, %s19, 0
        %s174 = smul.addr %s173, 2
        %s175 = scalar_lea.vmem %s1, %s174
      $region16: #{residual_block_forward.9} parent=11 // pred_fallthru
        _
      // Predicated region
      $region17: #{residual_block_forward.9} parent=11 // pred_check
        %p176 = pneg %p100
      $region18: #{residual_block_forward.9} parent=11 // pred_check_branch
        %178 = sbr.rel (%p176) target = $region20
      $region19: #{residual_block_forward.9} parent=11 // pred_region
        %p179 = scmp.lt.s32.totalorder %s19, 0
        %s180 = scalar_select %p179, %s19, 0
        %s181 = scalar_lea.vmem %s2, %s180
      $region20: #{residual_block_forward.9} parent=11 // pred_fallthru
        _
      // Predicated region
      $region21: #{residual_block_forward.9} parent=11 // pred_check
        %p182 = pneg %p126
      $region22: #{residual_block_forward.9} parent=11 // pred_check_branch
        %184 = sbr.rel (%p182) target = $region24
      $region23: #{residual_block_forward.9} parent=11 // pred_region
        %p185 = scmp.lt.s32.totalorder %s19, 0
        %s186 = scalar_select %p185, %s19, 0
        %s187 = scalar_lea.vmem %s3, %s186
      $region24: #{residual_block_forward.9} parent=11 // pred_fallthru
        _
    $region12: #{residual_block_forward.9} parent=5 // pred_fallthru
      _
    %p188 = scmp.lt.s32.totalorder %s10, 2
    // Predicated region
    $region25: #{residual_block_forward.9} parent=5 // pred_check
      %p189 = pneg %p188
    $region26: #{residual_block_forward.9} parent=5 // pred_check_branch
      %191 = sbr.rel (%p189) target = $region28
    $region27: #{residual_block_forward.9} parent=5 // pred_region
      // Predicated region
      $region29: #{residual_block_forward.9} parent=27 // pred_check
        %p192 = pneg %p42
      $region30: #{residual_block_forward.9} parent=27 // pred_check_branch
        %194 = sbr.rel (%p192) target = $region32
      $region31: #{residual_block_forward.9} parent=27 // pred_region
        %s195 = smul.u32 8, %s18
        %p196 = scmp.lt.s32.totalorder %s195, 15
        %s197 = scalar_select %p196, %s195, 15
        %s198 = smul.addr %s197, 4
        %s199 = scalar_lea.vmem %s0, %s198
        %s200 = smul.u32 8, %s18
      $region32: #{residual_block_forward.9} parent=27 // pred_fallthru
        _
    $region28: #{residual_block_forward.9} parent=5 // pred_fallthru
      _
    %p201 = scmp.le.s32.totalorder 1, %s10
    %p202 = scmp.lt.s32.totalorder %s10, 3
    %p203 = pnand %p201, %p202
    %p204 = pneg %p203
    // Predicated region
    $region33: #{residual_block_forward.9} parent=5 // pred_check
      _
    $region34: #{residual_block_forward.9} parent=5 // pred_check_branch
      %206 = sbr.rel (%p203) target = $region36
    $region35: #{residual_block_forward.9} parent=5 // pred_region
      %s207 = ssub.s32 %s10, 1
      %s208 = smul.u32 8, %s20
      %p209 = scmp.lt.s32.totalorder %s208, 15
      %s210 = scalar_select %p209, %s208, 15
      %s211 = smul.addr %s210, 4
      %s212 = scalar_lea.vmem %s0, %s211
      %p213 = pneg %p48
      %p214 = pneg %p45
      %p215 = scmp.lt.s32.totalorder %s19, 0
      %s216 = scalar_select %p215, %s19, 0
      %s217 = smul.addr %s216, 2
      %s218 = scalar_lea.vmem %s1, %s217
      %p219 = pneg %p74
      %p220 = pneg %p71
      %p221 = scmp.lt.s32.totalorder %s19, 0
      %s222 = scalar_select %p221, %s19, 0
      %s223 = scalar_lea.vmem %s2, %s222
      %p224 = pneg %p100
      %p225 = pneg %p97
      %p226 = scmp.lt.s32.totalorder %s19, 0
      %s227 = scalar_select %p226, %s19, 0
      %s228 = scalar_lea.vmem %s3, %s227
      %p229 = pneg %p126
      %p230 = pneg %p123
      %p231 = pneg %p154
      %p232 = pneg %p151
      %s233 = smul.u32 8, %s20
      %p234 = scmp.lt.s32.totalorder %s233, 15
      %s235 = scalar_select %p234, %s233, 15
      %p236 = scmp.lt.s32.totalorder %s19, 0
      %s237 = scalar_select %p236, %s19, 0
      %s238 = sadd.s32 %s237, %s235
      %s239 = smul.addr %s238, 8
      %s240 = scalar_lea.vmem %s4, %s239
      %s241 = smul.u32 8, %s20
      %p242 = scmp.lt.s32.totalorder %s241, 15
      %s243 = scalar_select %p242, %s241, 15
      %s244 = smul.addr %s243, 4
      %s245 = scalar_lea.vmem %s0, %s244
      %s246 = smul.u32 8, %s20
      %p247 = scmp.lt.s32.totalorder %s19, 0
      %s248 = scalar_select %p247, %s19, 0
      %s249 = smul.addr %s248, 2
      %s250 = scalar_lea.vmem %s1, %s249
      %p251 = scmp.lt.s32.totalorder %s19, 0
      %s252 = scalar_select %p251, %s19, 0
      %s253 = scalar_lea.vmem %s2, %s252
      %p254 = scmp.lt.s32.totalorder %s19, 0
      %s255 = scalar_select %p254, %s19, 0
      %s256 = scalar_lea.vmem %s3, %s255
      %s257 = smul.u32 8, %s20
      %p258 = scmp.lt.s32.totalorder %s257, 15
      %s259 = scalar_select %p258, %s257, 15
      %p260 = scmp.lt.s32.totalorder %s19, 0
      %s261 = scalar_select %p260, %s19, 0
      %s262 = sadd.s32 %s261, %s259
      %s263 = smul.addr %s262, 8
      %s264 = scalar_lea.vmem %s4, %s263
      %s265 = smul.u32 8, %s20
      %v267 = vld [vmem:[%s245] sm:$0xf]
      %v268 = vld [vmem:[%s245 + $0x4] sm:$0xf]
      %v269 = vld [vmem:[%s245 + $0x8] sm:$0xf]
      %v270 = vld [vmem:[%s245 + $0xc] sm:$0xf]
      %v271 = vld [vmem:[%s245 + $0x10] sm:$0xf]
      %v272 = vld [vmem:[%s245 + $0x14] sm:$0xf]
      %v273 = vld [vmem:[%s245 + $0x18] sm:$0xf]
      %v274 = vld [vmem:[%s245 + $0x1c] sm:$0xf]
      %v275 = vld [vmem:[%s250] sm:$0x3]
      %v284 = vunpack.c.l.b16 %v267
      %v285 = vunpack.c.l.b16 %v268
      %v286 = vunpack.c.l.b16 %v269
      %v287 = vunpack.c.l.b16 %v270
      %v288 = vunpack.c.l.b16 %v271
      %v289 = vunpack.c.l.b16 %v272
      %v290 = vunpack.c.l.b16 %v273
      %v291 = vunpack.c.l.b16 %v274
      %v292 = vpack.c.b16 %v285, %v284
      %v293 = vpack.c.b16 %v287, %v286
      %v294 = vpack.c.b16 %v289, %v288
      %v295 = vpack.c.b16 %v291, %v290
      %vm296 = vcmask 31744
      %v298 = vsel %vm296, %v292, 0
      %v301 = vsel %vm296, %v293, 0
      %v304 = vsel %vm296, %v294, 0
      %v307 = vsel %vm296, %v295, 0
      %vm309 = vcmask 1041408
      %v311 = vsel %vm309, %v275, 0
      %313 = vmatpush.bf16.msra.mxu0 0
      %314 = vmatpush.bf16.msra.mxu0 0
      %315 = vmatpush.bf16.msra.mxu0 0
      %316 = vmatpush.bf16.msra.mxu0 0
      %317 = vmatpush.bf16.msra.mxu0 0
      %318 = vmatpush.bf16.msra.mxu0 0
      %319 = vmatpush.bf16.msra.mxu0 0
      %320 = vmatpush.bf16.msra.mxu0 %v311
      %321 = vmatmul.bf16.gmra.mxu0 %v298
      %v322 = vpop.f32.mrf.mxu0
      %v323 = vadd.f32 0.0, %v322
      %v324 = vpop.f32.mrf.mxu0
      %v325 = vadd.f32 0.0, %v324
      %326 = vmatmul.bf16.gmra.mxu0 %v301
      %v327 = vpop.f32.mrf.mxu0
      %v328 = vadd.f32 0.0, %v327
      %v329 = vpop.f32.mrf.mxu0
      %v330 = vadd.f32 0.0, %v329
      %331 = vmatmul.bf16.gmra.mxu0 %v304
      %v332 = vpop.f32.mrf.mxu0
      %v333 = vadd.f32 0.0, %v332
      %v334 = vpop.f32.mrf.mxu0
      %v335 = vadd.f32 0.0, %v334
      %336 = vmatmul.bf16.gmra.mxu0 %v307
      %v337 = vpop.f32.mrf.mxu0
      %v338 = vadd.f32 0.0, %v337
      %v339 = vpop.f32.mrf.mxu0
      %v340 = vadd.f32 0.0, %v339
      %341 = vdwg.mxu0
      %v342 = vld [vmem:[%s253] sm:$0x1]
      %v344 = vperm.slane %v342, 0
      %v346 = vmul.f32 %v323, %v344
      %v347 = vmul.f32 %v325, %v344
      %v348 = vmul.f32 %v328, %v344
      %v349 = vmul.f32 %v330, %v344
      %v350 = vmul.f32 %v333, %v344
      %v351 = vmul.f32 %v335, %v344
      %v352 = vmul.f32 %v338, %v344
      %v353 = vmul.f32 %v340, %v344
      %v354 = vld [vmem:[%s256] sm:$0x1]
      %v356 = vperm.slane %v354, 0
      %v358 = vadd.f32 %v346, %v356
      %v359 = vadd.f32 %v347, %v356
      %v360 = vadd.f32 %v348, %v356
      %v361 = vadd.f32 %v349, %v356
      %v362 = vadd.f32 %v350, %v356
      %v363 = vadd.f32 %v351, %v356
      %v364 = vadd.f32 %v352, %v356
      %v365 = vadd.f32 %v353, %v356
      %366 = vst [vmem:[%s264] sm:$0xff] %v358
      %367 = vst [vmem:[%s264 + $0x8] sm:$0xff] %v359
      %368 = vst [vmem:[%s264 + $0x10] sm:$0xff] %v360
      %369 = vst [vmem:[%s264 + $0x18] sm:$0xff] %v361
      %370 = vst [vmem:[%s264 + $0x20] sm:$0xff] %v362
      %371 = vst [vmem:[%s264 + $0x28] sm:$0xff] %v363
      %372 = vst [vmem:[%s264 + $0x30] sm:$0xff] %v364
      %373 = vst [vmem:[%s264 + $0x38] sm:$0xff] %v365
      %s374 = smul.u32 8, %s20
      %p375 = scmp.lt.s32.totalorder %s374, 15
      %s376 = scalar_select %p375, %s374, 15
      %p377 = scmp.lt.s32.totalorder %s19, 0
      %s378 = scalar_select %p377, %s19, 0
      %s379 = sadd.s32 %s378, %s376
      %s380 = smul.addr %s379, 8
      %s381 = scalar_lea.vmem %s4, %s380
      // Predicated region
      $region37: #{residual_block_forward.9} parent=35 // pred_check
        %p382 = pneg %p151
      $region38: #{residual_block_forward.9} parent=35 // pred_check_branch
        %384 = sbr.rel (%p382) target = $region40
      $region39: #{residual_block_forward.9} parent=35 // pred_region
        %s385 = smul.u32 8, %s20
      $region40: #{residual_block_forward.9} parent=35 // pred_fallthru
        _
    $region36: #{residual_block_forward.9} parent=5 // pred_fallthru
      _
    %p386 = scmp.le.s32.totalorder 2, %s10
    // Predicated region
    $region41: #{residual_block_forward.9} parent=5 // pred_check
      %p387 = pneg %p386
    $region42: #{residual_block_forward.9} parent=5 // pred_check_branch
      %389 = sbr.rel (%p387) target = $region44
    $region43: #{residual_block_forward.9} parent=5 // pred_region
      %s390 = ssub.s32 %s10, 2
      // Predicated region
      $region45: #{residual_block_forward.9} parent=43 // pred_check
        %p391 = pneg %p157
      $region46: #{residual_block_forward.9} parent=43 // pred_check_branch
        %393 = sbr.rel (%p391) target = $region48
      $region47: #{residual_block_forward.9} parent=43 // pred_region
        %s394 = smul.u32 8, %s22
        %p395 = scmp.lt.s32.totalorder %s394, 15
        %s396 = scalar_select %p395, %s394, 15
        %p397 = scmp.lt.s32.totalorder %s21, 0
        %s398 = scalar_select %p397, %s21, 0
        %s399 = sadd.s32 %s398, %s396
        %s400 = smul.addr %s399, 8
        %s401 = scalar_lea.vmem %s4, %s400
      $region48: #{residual_block_forward.9} parent=43 // pred_fallthru
        _
    $region44: #{residual_block_forward.9} parent=5 // pred_fallthru
      _
  $region6: #{residual_block_forward.9} parent=0 // loop_footer
    %s14 = sadd.s32 1, %s10
  $region7: #{residual_block_forward.9} parent=0 // loop_footer_branch
    %9 = sbr.rel target = $region3
  $region8: #{residual_block_forward.9} parent=0 // loop_exit
    _

// kernel: residual_block_forward.11
$region0: #{residual_block_forward.11}
  #allocation0 [shape = 'u32[]', space=smem, size = 0x4, offset = 0x4, fixed_abs, tag = 'smem constant byte address 0x4 - core index']
  #allocation1 [shape = 'u32[72,128]{1,0:T(1,128)}', space=vmem, size = 0x9000, scoped, tag = 'internal scratch']
  %s0 = inlined_call_operand.vmem [shape: bf16[128,72], index: 0, kind: input, shape index: {}]
  %s1 = inlined_call_operand.vmem [shape: bf16[72,128], index: 1, kind: input, shape index: {}]
  %s2 = inlined_call_operand.vmem [shape: f32[1,128], index: 2, kind: input, shape index: {}]
  %s3 = inlined_call_operand.vmem [shape: f32[1,128], index: 3, kind: input, shape index: {}]
  %s4 = inlined_call_operand.vmem [shape: f32[128,128], index: 4, kind: input, shape index: {}]
  %s5 = inlined_call_operand.vmem [shape: f32[128,128], index: 5, kind: output, shape index: {}]
  %s6 = sld [smem:[#allocation0]]
  $region53: #{residual_block_forward.11} parent=0
    _
  %s8 = ssub.s32 1, %s6
  %s9 = scalar_select 0, %s8, %s6
  loop: start=0, step=1, limit=4
  $region2: #{residual_block_forward.11} parent=0 // loop_pre_header
    _
  $region3: #{residual_block_forward.11} parent=0 // loop_header
    %s11 = sphi 0, %s15
    %p12 = scmp.ge.s32.totalorder %s11, 4
    %s18 = sphi 0, %s30
    %s19 = sphi 0, %s26
    %s20 = sphi 0, %s18
    %s21 = sphi 0, %s19
    %s22 = sphi 0, %s20
    %s23 = sphi 0, %s21
    %s33 = sphi 0, %s35
    %s36 = sphi 0, %s33
    %s37 = sphi 0, %s36
    %s53 = sphi 0, %s37
    %s59 = sphi 0, %s61
    %s62 = sphi 0, %s59
    %s63 = sphi 0, %s62
    %s79 = sphi 0, %s63
    %s85 = sphi 0, %s87
    %s88 = sphi 0, %s85
    %s89 = sphi 0, %s88
    %s105 = sphi 0, %s89
    %s111 = sphi 0, %s113
    %s114 = sphi 0, %s111
    %s115 = sphi 0, %s114
    %s131 = sphi 0, %s115
    %s139 = sphi 0, %s141
    %s142 = sphi 0, %s139
    %s143 = sphi 0, %s142
    %s159 = sphi 0, %s143
    %s167 = sphi 0, %s169
    %s170 = sphi 0, %s167
    %s171 = sphi 0, %s170
    %s187 = sphi 0, %s171
  $region4: #{residual_block_forward.11} parent=0 // loop_header_branch
    %14 = sbr.rel (%p12) target = $region8
  $region5: #{residual_block_forward.11} parent=0 // loop_body
    %s16 = ssub.s32 %s11, 1
    %s17 = ssub.s32 %s11, 2
    %s24 = sadd.s32 1, %s19
    %p25 = scmp.ge.s32.totalorder %s24, 2
    %s26 = scalar_select %p25, 0, %s24
    %s27 = sadd.s32 1, %s18
    %s28 = scalar_select %p25, %s27, %s18
    %p29 = scmp.ge.s32.totalorder %s28, 1
    %s30 = scalar_select %p29, 0, %s28
    %s31 = ssub.s32 %s19, %s26
    %p32 = scmp.eq.s32.totalorder %s31, 0
    %s34 = sadd.s32 %s33, 1
    %s35 = scalar_select %p32, %s33, %s34
    %p38 = pneg %p32
    %p39 = scmp.eq.s32.totalorder %s11, 1
    %p40 = por %p38, %p39
    %p41 = scmp.ne.s32.totalorder %s33, %s36
    %p42 = scmp.eq.s32.totalorder %s11, 0
    %p43 = por %p41, %p42
    %p44 = scmp.ne.s32.totalorder %s33, %s36
    %p45 = scmp.eq.s32.totalorder %s16, 1
    %p46 = por %p44, %p45
    %p47 = scmp.ne.s32.totalorder %s36, %s37
    %p48 = scmp.eq.s32.totalorder %s16, 0
    %p49 = por %p47, %p48
    %p50 = scmp.ne.s32.totalorder %s36, %s37
    %p51 = scmp.eq.s32.totalorder %s17, 1
    %p52 = por %p50, %p51
    %p54 = scmp.ne.s32.totalorder %s37, %s53
    %p55 = scmp.eq.s32.totalorder %s17, 0
    %p56 = por %p54, %p55
    %s57 = ssub.s32 %s18, %s30
    %p58 = scmp.eq.s32.totalorder %s57, 0
    %s60 = sadd.s32 %s59, 1
    %s61 = scalar_select %p58, %s59, %s60
    %p64 = pneg %p58
    %p65 = scmp.eq.s32.totalorder %s11, 1
    %p66 = por %p64, %p65
    %p67 = scmp.ne.s32.totalorder %s59, %s62
    %p68 = scmp.eq.s32.totalorder %s11, 0
    %p69 = por %p67, %p68
    %p70 = scmp.ne.s32.totalorder %s59, %s62
    %p71 = scmp.eq.s32.totalorder %s16, 1
    %p72 = por %p70, %p71
    %p73 = scmp.ne.s32.totalorder %s62, %s63
    %p74 = scmp.eq.s32.totalorder %s16, 0
    %p75 = por %p73, %p74
    %p76 = scmp.ne.s32.totalorder %s62, %s63
    %p77 = scmp.eq.s32.totalorder %s17, 1
    %p78 = por %p76, %p77
    %p80 = scmp.ne.s32.totalorder %s63, %s79
    %p81 = scmp.eq.s32.totalorder %s17, 0
    %p82 = por %p80, %p81
    %s83 = ssub.s32 %s18, %s30
    %p84 = scmp.eq.s32.totalorder %s83, 0
    %s86 = sadd.s32 %s85, 1
    %s87 = scalar_select %p84, %s85, %s86
    %p90 = pneg %p84
    %p91 = scmp.eq.s32.totalorder %s11, 1
    %p92 = por %p90, %p91
    %p93 = scmp.ne.s32.totalorder %s85, %s88
    %p94 = scmp.eq.s32.totalorder %s11, 0
    %p95 = por %p93, %p94
    %p96 = scmp.ne.s32.totalorder %s85, %s88
    %p97 = scmp.eq.s32.totalorder %s16, 1
    %p98 = por %p96, %p97
    %p99 = scmp.ne.s32.totalorder %s88, %s89
    %p100 = scmp.eq.s32.totalorder %s16, 0
    %p101 = por %p99, %p100
    %p102 = scmp.ne.s32.totalorder %s88, %s89
    %p103 = scmp.eq.s32.totalorder %s17, 1
    %p104 = por %p102, %p103
    %p106 = scmp.ne.s32.totalorder %s89, %s105
    %p107 = scmp.eq.s32.totalorder %s17, 0
    %p108 = por %p106, %p107
    %s109 = ssub.s32 %s18, %s30
    %p110 = scmp.eq.s32.totalorder %s109, 0
    %s112 = sadd.s32 %s111, 1
    %s113 = scalar_select %p110, %s111, %s112
    %p116 = pneg %p110
    %p117 = scmp.eq.s32.totalorder %s11, 1
    %p118 = por %p116, %p117
    %p119 = scmp.ne.s32.totalorder %s111, %s114
    %p120 = scmp.eq.s32.totalorder %s11, 0
    %p121 = por %p119, %p120
    %p122 = scmp.ne.s32.totalorder %s111, %s114
    %p123 = scmp.eq.s32.totalorder %s16, 1
    %p124 = por %p122, %p123
    %p125 = scmp.ne.s32.totalorder %s114, %s115
    %p126 = scmp.eq.s32.totalorder %s16, 0
    %p127 = por %p125, %p126
    %p128 = scmp.ne.s32.totalorder %s114, %s115
    %p129 = scmp.eq.s32.totalorder %s17, 1
    %p130 = por %p128, %p129
    %p132 = scmp.ne.s32.totalorder %s115, %s131
    %p133 = scmp.eq.s32.totalorder %s17, 0
    %p134 = por %p132, %p133
    %s135 = ssub.s32 %s19, %s26
    %s136 = ssub.s32 %s18, %s30
    %s137 = sor.u32 %s135, %s136
    %p138 = scmp.eq.s32.totalorder %s137, 0
    %s140 = sadd.s32 %s139, 1
    %s141 = scalar_select %p138, %s139, %s140
    %p144 = pneg %p138
    %p145 = scmp.eq.s32.totalorder %s11, 1
    %p146 = por %p144, %p145
    %p147 = scmp.ne.s32.totalorder %s139, %s142
    %p148 = scmp.eq.s32.totalorder %s11, 0
    %p149 = por %p147, %p148
    %p150 = scmp.ne.s32.totalorder %s139, %s142
    %p151 = scmp.eq.s32.totalorder %s16, 1
    %p152 = por %p150, %p151
    %p153 = scmp.ne.s32.totalorder %s142, %s143
    %p154 = scmp.eq.s32.totalorder %s16, 0
    %p155 = por %p153, %p154
    %p156 = scmp.ne.s32.totalorder %s142, %s143
    %p157 = scmp.eq.s32.totalorder %s17, 1
    %p158 = por %p156, %p157
    %p160 = scmp.ne.s32.totalorder %s143, %s159
    %p161 = scmp.eq.s32.totalorder %s17, 0
    %p162 = por %p160, %p161
    %s163 = ssub.s32 %s19, %s26
    %s164 = ssub.s32 %s18, %s30
    %s165 = sor.u32 %s163, %s164
    %p166 = scmp.eq.s32.totalorder %s165, 0
    %s168 = sadd.s32 %s167, 1
    %s169 = scalar_select %p166, %s167, %s168
    %p172 = pneg %p166
    %p173 = scmp.eq.s32.totalorder %s11, 1
    %p174 = por %p172, %p173
    %p175 = scmp.ne.s32.totalorder %s167, %s170
    %p176 = scmp.eq.s32.totalorder %s11, 0
    %p177 = por %p175, %p176
    %p178 = scmp.ne.s32.totalorder %s167, %s170
    %p179 = scmp.eq.s32.totalorder %s16, 1
    %p180 = por %p178, %p179
    %p181 = scmp.ne.s32.totalorder %s170, %s171
    %p182 = scmp.eq.s32.totalorder %s16, 0
    %p183 = por %p181, %p182
    %p184 = scmp.ne.s32.totalorder %s170, %s171
    %p185 = scmp.eq.s32.totalorder %s17, 1
    %p186 = por %p184, %p185
    %p188 = scmp.ne.s32.totalorder %s171, %s187
    %p189 = scmp.eq.s32.totalorder %s17, 0
    %p190 = por %p188, %p189
    %p191 = scmp.le.s32.totalorder 1, %s11
    %p192 = scmp.lt.s32.totalorder %s11, 3
    %p193 = pnand %p191, %p192
    %p194 = pneg %p193
    // Predicated region
    $region9: #{residual_block_forward.11} parent=5 // pred_check
      _
    $region10: #{residual_block_forward.11} parent=5 // pred_check_branch
      %196 = sbr.rel (%p193) target = $region12
    $region11: #{residual_block_forward.11} parent=5 // pred_region
      %s197 = ssub.s32 %s11, 1
      // Predicated region
      $region13: #{residual_block_forward.11} parent=11 // pred_check
        %p198 = pneg %p75
      $region14: #{residual_block_forward.11} parent=11 // pred_check_branch
        %200 = sbr.rel (%p198) target = $region16
      $region15: #{residual_block_forward.11} parent=11 // pred_region
        %p201 = scmp.lt.s32.totalorder %s20, 0
        %s202 = scalar_select %p201, %s20, 0
        %s203 = smul.addr %s202, 4
        %s204 = scalar_lea.vmem %s1, %s203
      $region16: #{residual_block_forward.11} parent=11 // pred_fallthru
        _
      // Predicated region
      $region17: #{residual_block_forward.11} parent=11 // pred_check
        %p205 = pneg %p101
      $region18: #{residual_block_forward.11} parent=11 // pred_check_branch
        %207 = sbr.rel (%p205) target = $region20
      $region19: #{residual_block_forward.11} parent=11 // pred_region
        %p208 = scmp.lt.s32.totalorder %s20, 0
        %s209 = scalar_select %p208, %s20, 0
        %s210 = scalar_lea.vmem %s2, %s209
      $region20: #{residual_block_forward.11} parent=11 // pred_fallthru
        _
      // Predicated region
      $region21: #{residual_block_forward.11} parent=11 // pred_check
        %p211 = pneg %p127
      $region22: #{residual_block_forward.11} parent=11 // pred_check_branch
        %213 = sbr.rel (%p211) target = $region24
      $region23: #{residual_block_forward.11} parent=11 // pred_region
        %p214 = scmp.lt.s32.totalorder %s20, 0
        %s215 = scalar_select %p214, %s20, 0
        %s216 = scalar_lea.vmem %s3, %s215
      $region24: #{residual_block_forward.11} parent=11 // pred_fallthru
        _
    $region12: #{residual_block_forward.11} parent=5 // pred_fallthru
      _
    %p217 = scmp.lt.s32.totalorder %s11, 2
    // Predicated region
    $region25: #{residual_block_forward.11} parent=5 // pred_check
      %p218 = pneg %p217
    $region26: #{residual_block_forward.11} parent=5 // pred_check_branch
      %220 = sbr.rel (%p218) target = $region28
    $region27: #{residual_block_forward.11} parent=5 // pred_region
      // Predicated region
      $region29: #{residual_block_forward.11} parent=27 // pred_check
        %p221 = pneg %p43
      $region30: #{residual_block_forward.11} parent=27 // pred_check_branch
        %223 = sbr.rel (%p221) target = $region32
      $region31: #{residual_block_forward.11} parent=27 // pred_region
        %s224 = smul.u32 8, %s19
        %p225 = scmp.lt.s32.totalorder %s224, 15
        %s226 = scalar_select %p225, %s224, 15
        %s227 = smul.addr %s226, 4
        %s228 = scalar_lea.vmem %s0, %s227
        %s229 = smul.u32 8, %s19
      $region32: #{residual_block_forward.11} parent=27 // pred_fallthru
        _
      // Predicated region
      $region33: #{residual_block_forward.11} parent=27 // pred_check
        %p230 = pneg %p149
      $region34: #{residual_block_forward.11} parent=27 // pred_check_branch
        %232 = sbr.rel (%p230) target = $region36
      $region35: #{residual_block_forward.11} parent=27 // pred_region
        %s233 = smul.u32 8, %s19
        %p234 = scmp.lt.s32.totalorder %s233, 15
        %s235 = scalar_select %p234, %s233, 15
        %p236 = scmp.lt.s32.totalorder %s18, 0
        %s237 = scalar_select %p236, %s18, 0
        %s238 = sadd.s32 %s237, %s235
        %s239 = smul.addr %s238, 8
        %s240 = scalar_lea.vmem %s4, %s239
        %s241 = smul.u32 8, %s19
      $region36: #{residual_block_forward.11} parent=27 // pred_fallthru
        _
    $region28: #{residual_block_forward.11} parent=5 // pred_fallthru
      _
    %p242 = scmp.le.s32.totalorder 1, %s11
    %p243 = scmp.lt.s32.totalorder %s11, 3
    %p244 = pnand %p242, %p243
    %p245 = pneg %p244
    // Predicated region
    $region37: #{residual_block_forward.11} parent=5 // pred_check
      _
    $region38: #{residual_block_forward.11} parent=5 // pred_check_branch
      %247 = sbr.rel (%p244) target = $region40
    $region39: #{residual_block_forward.11} parent=5 // pred_region
      %s248 = ssub.s32 %s11, 1
      %s249 = smul.u32 8, %s21
      %p250 = scmp.lt.s32.totalorder %s249, 15
      %s251 = scalar_select %p250, %s249, 15
      %s252 = smul.addr %s251, 4
      %s253 = scalar_lea.vmem %s0, %s252
      %p254 = pneg %p49
      %p255 = pneg %p46
      %p256 = scmp.lt.s32.totalorder %s20, 0
      %s257 = scalar_select %p256, %s20, 0
      %s258 = smul.addr %s257, 4
      %s259 = scalar_lea.vmem %s1, %s258
      %p260 = pneg %p75
      %p261 = pneg %p72
      %p262 = scmp.lt.s32.totalorder %s20, 0
      %s263 = scalar_select %p262, %s20, 0
      %s264 = scalar_lea.vmem %s2, %s263
      %p265 = pneg %p101
      %p266 = pneg %p98
      %p267 = scmp.lt.s32.totalorder %s20, 0
      %s268 = scalar_select %p267, %s20, 0
      %s269 = scalar_lea.vmem %s3, %s268
      %p270 = pneg %p127
      %p271 = pneg %p124
      %s272 = smul.u32 8, %s21
      %p273 = scmp.lt.s32.totalorder %s272, 15
      %s274 = scalar_select %p273, %s272, 15
      %p275 = scmp.lt.s32.totalorder %s20, 0
      %s276 = scalar_select %p275, %s20, 0
      %s277 = sadd.s32 %s276, %s274
      %s278 = smul.addr %s277, 8
      %s279 = scalar_lea.vmem %s4, %s278
      %p280 = pneg %p155
      %p281 = pneg %p152
      %p282 = pneg %p183
      %p283 = pneg %p180
      %s284 = smul.u32 8, %s21
      %p285 = scmp.lt.s32.totalorder %s284, 15
      %s286 = scalar_select %p285, %s284, 15
      %p287 = scmp.lt.s32.totalorder %s20, 0
      %s288 = scalar_select %p287, %s20, 0
      %s289 = sadd.s32 %s288, %s286
      %s290 = smul.addr %s289, 8
      %s291 = scalar_lea.vmem %s5, %s290
      %s292 = smul.u32 8, %s21
      %p293 = scmp.lt.s32.totalorder %s292, 15
      %s294 = scalar_select %p293, %s292, 15
      %s295 = smul.addr %s294, 4
      %s296 = scalar_lea.vmem %s0, %s295
      %s297 = smul.u32 8, %s21
      %p298 = scmp.lt.s32.totalorder %s20, 0
      %s299 = scalar_select %p298, %s20, 0
      %s300 = smul.addr %s299, 4
      %s301 = scalar_lea.vmem %s1, %s300
      %p302 = scmp.lt.s32.totalorder %s20, 0
      %s303 = scalar_select %p302, %s20, 0
      %s304 = scalar_lea.vmem %s2, %s303
      %p305 = scmp.lt.s32.totalorder %s20, 0
      %s306 = scalar_select %p305, %s20, 0
      %s307 = scalar_lea.vmem %s3, %s306
      %s308 = smul.u32 8, %s21
      %p309 = scmp.lt.s32.totalorder %s308, 15
      %s310 = scalar_select %p309, %s308, 15
      %p311 = scmp.lt.s32.totalorder %s20, 0
      %s312 = scalar_select %p311, %s20, 0
      %s313 = sadd.s32 %s312, %s310
      %s314 = smul.addr %s313, 8
      %s315 = scalar_lea.vmem %s4, %s314
      %s316 = smul.u32 8, %s21
      %s317 = smul.u32 8, %s21
      %p318 = scmp.lt.s32.totalorder %s317, 15
      %s319 = scalar_select %p318, %s317, 15
      %p320 = scmp.lt.s32.totalorder %s20, 0
      %s321 = scalar_select %p320, %s20, 0
      %s322 = sadd.s32 %s321, %s319
      %s323 = smul.addr %s322, 8
      %s324 = scalar_lea.vmem %s5, %s323
      %s325 = smul.u32 8, %s21
      %v327 = vld [vmem:[%s296] sm:$0xf]
      %v328 = vld [vmem:[%s296 + $0x4] sm:$0xf]
      %v329 = vld [vmem:[%s296 + $0x8] sm:$0xf]
      %v330 = vld [vmem:[%s296 + $0xc] sm:$0xf]
      %v331 = vld [vmem:[%s296 + $0x10] sm:$0xf]
      %v332 = vld [vmem:[%s296 + $0x14] sm:$0xf]
      %v333 = vld [vmem:[%s296 + $0x18] sm:$0xf]
      %v334 = vld [vmem:[%s296 + $0x1c] sm:$0xf]
      %v335 = vld [vmem:[%s301] sm:$0xf]
      %v336 = vld [vmem:[%s301 + $0x4] sm:$0xf]
      %v337 = vld [vmem:[%s301 + $0x8] sm:$0xf]
      %v338 = vld [vmem:[%s301 + $0xc] sm:$0xf]
      %v339 = vld [vmem:[%s301 + $0x10] sm:$0xf]
      %v340 = vld [vmem:[%s301 + $0x14] sm:$0xf]
      %v341 = vld [vmem:[%s301 + $0x18] sm:$0xf]
      %v342 = vld [vmem:[%s301 + $0x1c] sm:$0xf]
      %v343 = vld [vmem:[%s301 + $0x20] sm:$0xf]
      %v352 = vunpack.c.l.b16 %v327
      %v353 = vunpack.c.l.b16 %v328
      %v354 = vunpack.c.l.b16 %v329
      %v355 = vunpack.c.l.b16 %v330
      %v356 = vunpack.c.l.b16 %v331
      %v357 = vunpack.c.l.b16 %v332
      %v358 = vunpack.c.l.b16 %v333
      %v359 = vunpack.c.l.b16 %v334
      %v360 = vpack.c.b16 %v353, %v352
      %v361 = vpack.c.b16 %v355, %v354
      %v362 = vpack.c.b16 %v357, %v356
      %v363 = vpack.c.b16 %v359, %v358
      %v373 = vunpack.c.l.b16 %v335
      %v374 = vunpack.c.l.b16 %v336
      %v375 = vunpack.c.l.b16 %v337
      %v376 = vunpack.c.l.b16 %v338
      %v377 = vunpack.c.l.b16 %v339
      %v378 = vunpack.c.l.b16 %v340
      %v379 = vunpack.c.l.b16 %v341
      %v380 = vunpack.c.l.b16 %v342
      %v381 = vunpack.c.l.b16 %v343
      %v382 = vpack.c.b16 %v374, %v373
      %v383 = vpack.c.b16 %v376, %v375
      %v384 = vpack.c.b16 %v378, %v377
      %v385 = vpack.c.b16 %v380, %v379
      %v386 = vpack.c.b16 %v381, %v381
      %vm391 = vcmask 588800
      %v393 = vsel %vm391, %v360, 0
      %v396 = vsel %vm391, %v361, 0
      %v399 = vsel %vm391, %v362, 0
      %v402 = vsel %vm391, %v363, 0
      %vm404 = vcmask 1043456
      %v406 = vsel %vm404, %v386, 0
      %408 = vmatpush.bf16.msra.mxu0 0
      %409 = vmatpush.bf16.msra.mxu0 0
      %410 = vmatpush.bf16.msra.mxu0 0
      %411 = vmatpush.bf16.msra.mxu0 %v406
      %412 = vmatpush.bf16.msra.mxu0 %v385
      %413 = vmatpush.bf16.msra.mxu0 %v384
      %414 = vmatpush.bf16.msra.mxu0 %v383
      %415 = vmatpush.bf16.msra.mxu0 %v382
      %416 = vmatmul.bf16.gmra.mxu0 %v393
      %v417 = vpop.f32.mrf.mxu0
      %v418 = vadd.f32 0.0, %v417
      %v419 = vpop.f32.mrf.mxu0
      %v420 = vadd.f32 0.0, %v419
      %421 = vmatmul.bf16.gmra.mxu0 %v396
      %v422 = vpop.f32.mrf.mxu0
      %v423 = vadd.f32 0.0, %v422
      %v424 = vpop.f32.mrf.mxu0
      %v425 = vadd.f32 0.0, %v424
      %426 = vmatmul.bf16.gmra.mxu0 %v399
      %v427 = vpop.f32.mrf.mxu0
      %v428 = vadd.f32 0.0, %v427
      %v429 = vpop.f32.mrf.mxu0
      %v430 = vadd.f32 0.0, %v429
      %431 = vmatmul.bf16.gmra.mxu0 %v402
      %v432 = vpop.f32.mrf.mxu0
      %v433 = vadd.f32 0.0, %v432
      %v434 = vpop.f32.mrf.mxu0
      %v435 = vadd.f32 0.0, %v434
      %436 = vdwg.mxu0
      %v437 = vld [vmem:[%s304] sm:$0x1]
      %v439 = vperm.slane %v437, 0
      %v441 = vmul.f32 %v418, %v439
      %v442 = vmul.f32 %v420, %v439
      %v443 = vmul.f32 %v423, %v439
      %v444 = vmul.f32 %v425, %v439
      %v445 = vmul.f32 %v428, %v439
      %v446 = vmul.f32 %v430, %v439
      %v447 = vmul.f32 %v433, %v439
      %v448 = vmul.f32 %v435, %v439
      %v449 = vld [vmem:[%s307] sm:$0x1]
      %v451 = vperm.slane %v449, 0
      %v453 = vadd.f32 %v441, %v451
      %v454 = vadd.f32 %v442, %v451
      %v455 = vadd.f32 %v443, %v451
      %v456 = vadd.f32 %v444, %v451
      %v457 = vadd.f32 %v445, %v451
      %v458 = vadd.f32 %v446, %v451
      %v459 = vadd.f32 %v447, %v451
      %v460 = vadd.f32 %v448, %v451
      %v461 = vld [vmem:[%s315] sm:$0xff]
      %v462 = vld [vmem:[%s315 + $0x8] sm:$0xff]
      %v463 = vld [vmem:[%s315 + $0x10] sm:$0xff]
      %v464 = vld [vmem:[%s315 + $0x18] sm:$0xff]
      %v465 = vld [vmem:[%s315 + $0x20] sm:$0xff]
      %v466 = vld [vmem:[%s315 + $0x28] sm:$0xff]
      %v467 = vld [vmem:[%s315 + $0x30] sm:$0xff]
      %v468 = vld [vmem:[%s315 + $0x38] sm:$0xff]
      %v469 = vadd.f32 %v453, %v461
      %v470 = vadd.f32 %v454, %v462
      %v471 = vadd.f32 %v455, %v463
      %v472 = vadd.f32 %v456, %v464
      %v473 = vadd.f32 %v457, %v465
      %v474 = vadd.f32 %v458, %v466
      %v475 = vadd.f32 %v459, %v467
      %v476 = vadd.f32 %v460, %v468
      %v477 = vmax.f32 %v469, 0.0
      %v478 = vmax.f32 %v470, 0.0
      %v479 = vmax.f32 %v471, 0.0
      %v480 = vmax.f32 %v472, 0.0
      %v481 = vmax.f32 %v473, 0.0
      %v482 = vmax.f32 %v474, 0.0
      %v483 = vmax.f32 %v475, 0.0
      %v484 = vmax.f32 %v476, 0.0
      %485 = vst [vmem:[%s324] sm:$0xff] %v477
      %486 = vst [vmem:[%s324 + $0x8] sm:$0xff] %v478
      %487 = vst [vmem:[%s324 + $0x10] sm:$0xff] %v479
      %488 = vst [vmem:[%s324 + $0x18] sm:$0xff] %v480
      %489 = vst [vmem:[%s324 + $0x20] sm:$0xff] %v481
      %490 = vst [vmem:[%s324 + $0x28] sm:$0xff] %v482
      %491 = vst [vmem:[%s324 + $0x30] sm:$0xff] %v483
      %492 = vst [vmem:[%s324 + $0x38] sm:$0xff] %v484
      %s493 = smul.u32 8, %s21
      %p494 = scmp.lt.s32.totalorder %s493, 15
      %s495 = scalar_select %p494, %s493, 15
      %p496 = scmp.lt.s32.totalorder %s20, 0
      %s497 = scalar_select %p496, %s20, 0
      %s498 = sadd.s32 %s497, %s495
      %s499 = smul.addr %s498, 8
      %s500 = scalar_lea.vmem %s5, %s499
      // Predicated region
      $region41: #{residual_block_forward.11} parent=39 // pred_check
        %p501 = pneg %p180
      $region42: #{residual_block_forward.11} parent=39 // pred_check_branch
        %503 = sbr.rel (%p501) target = $region44
      $region43: #{residual_block_forward.11} parent=39 // pred_region
        %s504 = smul.u32 8, %s21
      $region44: #{residual_block_forward.11} parent=39 // pred_fallthru
        _
    $region40: #{residual_block_forward.11} parent=5 // pred_fallthru
      _
    %p505 = scmp.le.s32.totalorder 2, %s11
    // Predicated region
    $region45: #{residual_block_forward.11} parent=5 // pred_check
      %p506 = pneg %p505
    $region46: #{residual_block_forward.11} parent=5 // pred_check_branch
      %508 = sbr.rel (%p506) target = $region48
    $region47: #{residual_block_forward.11} parent=5 // pred_region
      %s509 = ssub.s32 %s11, 2
      // Predicated region
      $region49: #{residual_block_forward.11} parent=47 // pred_check
        %p510 = pneg %p186
      $region50: #{residual_block_forward.11} parent=47 // pred_check_branch
        %512 = sbr.rel (%p510) target = $region52
      $region51: #{residual_block_forward.11} parent=47 // pred_region
        %s513 = smul.u32 8, %s23
        %p514 = scmp.lt.s32.totalorder %s513, 15
        %s515 = scalar_select %p514, %s513, 15
        %p516 = scmp.lt.s32.totalorder %s22, 0
        %s517 = scalar_select %p516, %s22, 0
        %s518 = sadd.s32 %s517, %s515
        %s519 = smul.addr %s518, 8
        %s520 = scalar_lea.vmem %s5, %s519
      $region52: #{residual_block_forward.11} parent=47 // pred_fallthru
        _
    $region48: #{residual_block_forward.11} parent=5 // pred_fallthru
      _
  $region6: #{residual_block_forward.11} parent=0 // loop_footer
    %s15 = sadd.s32 1, %s11
  $region7: #{residual_block_forward.11} parent=0 // loop_footer_branch
    %10 = sbr.rel target = $region3
  $region8: #{residual_block_forward.11} parent=0 // loop_exit
    _

// kernel: residual_block_forward.8
$region0: #{residual_block_forward.8}
  #allocation0 [shape = 'u32[]', space=smem, size = 0x4, offset = 0x4, fixed_abs, tag = 'smem constant byte address 0x4 - core index']
  #allocation1 [shape = 'u32[72,128]{1,0:T(1,128)}', space=vmem, size = 0x9000, scoped, tag = 'internal scratch']
  #allocation2 [shape = 'f32[1,128]{1,0:T(1,128)}', space=vmem, size = 0x200, scoped, tag = 'scratch operand']
  #allocation3 [shape = 'f32[1,128]{1,0:T(1,128)}', space=vmem, size = 0x200, scoped, tag = 'scratch operand']
  %s0 = inlined_call_operand.vmem [shape: bf16[128,4], index: 0, kind: input, shape index: {}]
  %s1 = inlined_call_operand.vmem [shape: bf16[4,128], index: 1, kind: input, shape index: {}]
  %s2 = inlined_call_operand.vmem [shape: f32[1,128], index: 2, kind: input, shape index: {}]
  %s3 = inlined_call_operand.vmem [shape: f32[1,128], index: 3, kind: input, shape index: {}]
  %s4 = inlined_call_operand.vmem [shape: f32[1,128], index: 4, kind: output, shape index: {0}]
  %s5 = inlined_call_operand.vmem [shape: f32[1,128], index: 5, kind: output, shape index: {1}]
  %6 = xla_tuple %s4, %s5
  %s7 = sld [smem:[#allocation0]]
  $region65: #{residual_block_forward.8} parent=0
    _
  %s9 = ssub.s32 1, %s7
  %s10 = scalar_select 0, %s9, %s7
  loop: start=0, step=1, limit=4
  $region2: #{residual_block_forward.8} parent=0 // loop_pre_header
    _
  $region3: #{residual_block_forward.8} parent=0 // loop_header
    %s12 = sphi 0, %s16
    %p13 = scmp.ge.s32.totalorder %s12, 4
    %s19 = sphi 0, %s31
    %s20 = sphi 0, %s27
    %s21 = sphi 0, %s19
    %s22 = sphi 0, %s20
    %s23 = sphi 0, %s21
    %s24 = sphi 0, %s22
    %s34 = sphi 0, %s36
    %s37 = sphi 0, %s34
    %s38 = sphi 0, %s37
    %s54 = sphi 0, %s38
    %s60 = sphi 0, %s62
    %s63 = sphi 0, %s60
    %s64 = sphi 0, %s63
    %s80 = sphi 0, %s64
    %s86 = sphi 0, %s88
    %s89 = sphi 0, %s86
    %s90 = sphi 0, %s89
    %s106 = sphi 0, %s90
    %s112 = sphi 0, %s114
    %s115 = sphi 0, %s112
    %s116 = sphi 0, %s115
    %s132 = sphi 0, %s116
    %s138 = sphi 0, %s140
    %s141 = sphi 0, %s138
    %s142 = sphi 0, %s141
    %s158 = sphi 0, %s142
    %s164 = sphi 0, %s166
    %s167 = sphi 0, %s164
    %s168 = sphi 0, %s167
    %s184 = sphi 0, %s168
  $region4: #{residual_block_forward.8} parent=0 // loop_header_branch
    %15 = sbr.rel (%p13) target = $region8
  $region5: #{residual_block_forward.8} parent=0 // loop_body
    %s17 = ssub.s32 %s12, 1
    %s18 = ssub.s32 %s12, 2
    %s25 = sadd.s32 1, %s20
    %p26 = scmp.ge.s32.totalorder %s25, 2
    %s27 = scalar_select %p26, 0, %s25
    %s28 = sadd.s32 1, %s19
    %s29 = scalar_select %p26, %s28, %s19
    %p30 = scmp.ge.s32.totalorder %s29, 1
    %s31 = scalar_select %p30, 0, %s29
    %s32 = ssub.s32 %s20, %s27
    %p33 = scmp.eq.s32.totalorder %s32, 0
    %s35 = sadd.s32 %s34, 1
    %s36 = scalar_select %p33, %s34, %s35
    %p39 = pneg %p33
    %p40 = scmp.eq.s32.totalorder %s12, 1
    %p41 = por %p39, %p40
    %p42 = scmp.ne.s32.totalorder %s34, %s37
    %p43 = scmp.eq.s32.totalorder %s12, 0
    %p44 = por %p42, %p43
    %p45 = scmp.ne.s32.totalorder %s34, %s37
    %p46 = scmp.eq.s32.totalorder %s17, 1
    %p47 = por %p45, %p46
    %p48 = scmp.ne.s32.totalorder %s37, %s38
    %p49 = scmp.eq.s32.totalorder %s17, 0
    %p50 = por %p48, %p49
    %p51 = scmp.ne.s32.totalorder %s37, %s38
    %p52 = scmp.eq.s32.totalorder %s18, 1
    %p53 = por %p51, %p52
    %p55 = scmp.ne.s32.totalorder %s38, %s54
    %p56 = scmp.eq.s32.totalorder %s18, 0
    %p57 = por %p55, %p56
    %s58 = ssub.s32 %s19, %s31
    %p59 = scmp.eq.s32.totalorder %s58, 0
    %s61 = sadd.s32 %s60, 1
    %s62 = scalar_select %p59, %s60, %s61
    %p65 = pneg %p59
    %p66 = scmp.eq.s32.totalorder %s12, 1
    %p67 = por %p65, %p66
    %p68 = scmp.ne.s32.totalorder %s60, %s63
    %p69 = scmp.eq.s32.totalorder %s12, 0
    %p70 = por %p68, %p69
    %p71 = scmp.ne.s32.totalorder %s60, %s63
    %p72 = scmp.eq.s32.totalorder %s17, 1
    %p73 = por %p71, %p72
    %p74 = scmp.ne.s32.totalorder %s63, %s64
    %p75 = scmp.eq.s32.totalorder %s17, 0
    %p76 = por %p74, %p75
    %p77 = scmp.ne.s32.totalorder %s63, %s64
    %p78 = scmp.eq.s32.totalorder %s18, 1
    %p79 = por %p77, %p78
    %p81 = scmp.ne.s32.totalorder %s64, %s80
    %p82 = scmp.eq.s32.totalorder %s18, 0
    %p83 = por %p81, %p82
    %s84 = ssub.s32 %s19, %s31
    %p85 = scmp.eq.s32.totalorder %s84, 0
    %s87 = sadd.s32 %s86, 1
    %s88 = scalar_select %p85, %s86, %s87
    %p91 = pneg %p85
    %p92 = scmp.eq.s32.totalorder %s12, 1
    %p93 = por %p91, %p92
    %p94 = scmp.ne.s32.totalorder %s86, %s89
    %p95 = scmp.eq.s32.totalorder %s12, 0
    %p96 = por %p94, %p95
    %p97 = scmp.ne.s32.totalorder %s86, %s89
    %p98 = scmp.eq.s32.totalorder %s17, 1
    %p99 = por %p97, %p98
    %p100 = scmp.ne.s32.totalorder %s89, %s90
    %p101 = scmp.eq.s32.totalorder %s17, 0
    %p102 = por %p100, %p101
    %p103 = scmp.ne.s32.totalorder %s89, %s90
    %p104 = scmp.eq.s32.totalorder %s18, 1
    %p105 = por %p103, %p104
    %p107 = scmp.ne.s32.totalorder %s90, %s106
    %p108 = scmp.eq.s32.totalorder %s18, 0
    %p109 = por %p107, %p108
    %s110 = ssub.s32 %s19, %s31
    %p111 = scmp.eq.s32.totalorder %s110, 0
    %s113 = sadd.s32 %s112, 1
    %s114 = scalar_select %p111, %s112, %s113
    %p117 = pneg %p111
    %p118 = scmp.eq.s32.totalorder %s12, 1
    %p119 = por %p117, %p118
    %p120 = scmp.ne.s32.totalorder %s112, %s115
    %p121 = scmp.eq.s32.totalorder %s12, 0
    %p122 = por %p120, %p121
    %p123 = scmp.ne.s32.totalorder %s112, %s115
    %p124 = scmp.eq.s32.totalorder %s17, 1
    %p125 = por %p123, %p124
    %p126 = scmp.ne.s32.totalorder %s115, %s116
    %p127 = scmp.eq.s32.totalorder %s17, 0
    %p128 = por %p126, %p127
    %p129 = scmp.ne.s32.totalorder %s115, %s116
    %p130 = scmp.eq.s32.totalorder %s18, 1
    %p131 = por %p129, %p130
    %p133 = scmp.ne.s32.totalorder %s116, %s132
    %p134 = scmp.eq.s32.totalorder %s18, 0
    %p135 = por %p133, %p134
    %s136 = ssub.s32 %s19, %s31
    %p137 = scmp.eq.s32.totalorder %s136, 0
    %s139 = sadd.s32 %s138, 1
    %s140 = scalar_select %p137, %s138, %s139
    %p143 = pneg %p137
    %p144 = scmp.eq.s32.totalorder %s12, 1
    %p145 = por %p143, %p144
    %p146 = scmp.ne.s32.totalorder %s138, %s141
    %p147 = scmp.eq.s32.totalorder %s12, 0
    %p148 = por %p146, %p147
    %p149 = scmp.ne.s32.totalorder %s138, %s141
    %p150 = scmp.eq.s32.totalorder %s17, 1
    %p151 = por %p149, %p150
    %p152 = scmp.ne.s32.totalorder %s141, %s142
    %p153 = scmp.eq.s32.totalorder %s17, 0
    %p154 = por %p152, %p153
    %p155 = scmp.ne.s32.totalorder %s141, %s142
    %p156 = scmp.eq.s32.totalorder %s18, 1
    %p157 = por %p155, %p156
    %p159 = scmp.ne.s32.totalorder %s142, %s158
    %p160 = scmp.eq.s32.totalorder %s18, 0
    %p161 = por %p159, %p160
    %s162 = ssub.s32 %s19, %s31
    %p163 = scmp.eq.s32.totalorder %s162, 0
    %s165 = sadd.s32 %s164, 1
    %s166 = scalar_select %p163, %s164, %s165
    %p169 = pneg %p163
    %p170 = scmp.eq.s32.totalorder %s12, 1
    %p171 = por %p169, %p170
    %p172 = scmp.ne.s32.totalorder %s164, %s167
    %p173 = scmp.eq.s32.totalorder %s12, 0
    %p174 = por %p172, %p173
    %p175 = scmp.ne.s32.totalorder %s164, %s167
    %p176 = scmp.eq.s32.totalorder %s17, 1
    %p177 = por %p175, %p176
    %p178 = scmp.ne.s32.totalorder %s167, %s168
    %p179 = scmp.eq.s32.totalorder %s17, 0
    %p180 = por %p178, %p179
    %p181 = scmp.ne.s32.totalorder %s167, %s168
    %p182 = scmp.eq.s32.totalorder %s18, 1
    %p183 = por %p181, %p182
    %p185 = scmp.ne.s32.totalorder %s168, %s184
    %p186 = scmp.eq.s32.totalorder %s18, 0
    %p187 = por %p185, %p186
    %p188 = scmp.le.s32.totalorder 1, %s12
    %p189 = scmp.lt.s32.totalorder %s12, 3
    %p190 = pnand %p188, %p189
    %p191 = pneg %p190
    // Predicated region
    $region9: #{residual_block_forward.8} parent=5 // pred_check
      _
    $region10: #{residual_block_forward.8} parent=5 // pred_check_branch
      %193 = sbr.rel (%p190) target = $region12
    $region11: #{residual_block_forward.8} parent=5 // pred_region
      %s194 = ssub.s32 %s12, 1
      // Predicated region
      $region13: #{residual_block_forward.8} parent=11 // pred_check
        %p195 = pneg %p76
      $region14: #{residual_block_forward.8} parent=11 // pred_check_branch
        %197 = sbr.rel (%p195) target = $region16
      $region15: #{residual_block_forward.8} parent=11 // pred_region
        %p198 = scmp.lt.s32.totalorder %s21, 0
        %s199 = scalar_select %p198, %s21, 0
        %s200 = smul.addr %s199, 2
        %s201 = scalar_lea.vmem %s1, %s200
      $region16: #{residual_block_forward.8} parent=11 // pred_fallthru
        _
      // Predicated region
      $region17: #{residual_block_forward.8} parent=11 // pred_check
        %p202 = pneg %p102
      $region18: #{residual_block_forward.8} parent=11 // pred_check_branch
        %204 = sbr.rel (%p202) target = $region20
      $region19: #{residual_block_forward.8} parent=11 // pred_region
        %p205 = scmp.lt.s32.totalorder %s21, 0
        %s206 = scalar_select %p205, %s21, 0
        %s207 = scalar_lea.vmem %s2, %s206
      $region20: #{residual_block_forward.8} parent=11 // pred_fallthru
        _
      // Predicated region
      $region21: #{residual_block_forward.8} parent=11 // pred_check
        %p208 = pneg %p128
      $region22: #{residual_block_forward.8} parent=11 // pred_check_branch
        %210 = sbr.rel (%p208) target = $region24
      $region23: #{residual_block_forward.8} parent=11 // pred_region
        %p211 = scmp.lt.s32.totalorder %s21, 0
        %s212 = scalar_select %p211, %s21, 0
        %s213 = scalar_lea.vmem %s3, %s212
      $region24: #{residual_block_forward.8} parent=11 // pred_fallthru
        _
    $region12: #{residual_block_forward.8} parent=5 // pred_fallthru
      _
    %p214 = scmp.lt.s32.totalorder %s12, 2
    // Predicated region
    $region25: #{residual_block_forward.8} parent=5 // pred_check
      %p215 = pneg %p214
    $region26: #{residual_block_forward.8} parent=5 // pred_check_branch
      %217 = sbr.rel (%p215) target = $region28
    $region27: #{residual_block_forward.8} parent=5 // pred_region
      // Predicated region
      $region29: #{residual_block_forward.8} parent=27 // pred_check
        %p218 = pneg %p44
      $region30: #{residual_block_forward.8} parent=27 // pred_check_branch
        %220 = sbr.rel (%p218) target = $region32
      $region31: #{residual_block_forward.8} parent=27 // pred_region
        %s221 = smul.u32 8, %s20
        %p222 = scmp.lt.s32.totalorder %s221, 15
        %s223 = scalar_select %p222, %s221, 15
        %s224 = smul.addr %s223, 4
        %s225 = scalar_lea.vmem %s0, %s224
        %s226 = smul.u32 8, %s20
      $region32: #{residual_block_forward.8} parent=27 // pred_fallthru
        _
    $region28: #{residual_block_forward.8} parent=5 // pred_fallthru
      _
    %p227 = scmp.le.s32.totalorder 1, %s12
    %p228 = scmp.lt.s32.totalorder %s12, 3
    %p229 = pnand %p227, %p228
    %p230 = pneg %p229
    // Predicated region
    $region33: #{residual_block_forward.8} parent=5 // pred_check
      _
    $region34: #{residual_block_forward.8} parent=5 // pred_check_branch
      %232 = sbr.rel (%p229) target = $region36
    $region35: #{residual_block_forward.8} parent=5 // pred_region
      %s233 = ssub.s32 %s12, 1
      %s234 = smul.u32 8, %s22
      %p235 = scmp.lt.s32.totalorder %s234, 15
      %s236 = scalar_select %p235, %s234, 15
      %s237 = smul.addr %s236, 4
      %s238 = scalar_lea.vmem %s0, %s237
      %p239 = pneg %p50
      %p240 = pneg %p47
      %p241 = scmp.lt.s32.totalorder %s21, 0
      %s242 = scalar_select %p241, %s21, 0
      %s243 = smul.addr %s242, 2
      %s244 = scalar_lea.vmem %s1, %s243
      %p245 = pneg %p76
      %p246 = pneg %p73
      %p247 = scmp.lt.s32.totalorder %s21, 0
      %s248 = scalar_select %p247, %s21, 0
      %s249 = scalar_lea.vmem %s2, %s248
      %p250 = pneg %p102
      %p251 = pneg %p99
      %p252 = scmp.lt.s32.totalorder %s21, 0
      %s253 = scalar_select %p252, %s21, 0
      %s254 = scalar_lea.vmem %s3, %s253
      %p255 = pneg %p128
      %p256 = pneg %p125
      %p257 = pneg %p154
      %p258 = pneg %p151
      %p259 = scmp.lt.s32.totalorder %s21, 0
      %s260 = scalar_select %p259, %s21, 0
      %s261 = scalar_lea.vmem %s4, %s260
      %p262 = pneg %p180
      %p263 = pneg %p177
      %p264 = scmp.lt.s32.totalorder %s21, 0
      %s265 = scalar_select %p264, %s21, 0
      %s266 = scalar_lea.vmem %s5, %s265
      %s267 = smul.u32 8, %s22
      %p268 = scmp.lt.s32.totalorder %s267, 15
      %s269 = scalar_select %p268, %s267, 15
      %s270 = smul.addr %s269, 4
      %s271 = scalar_lea.vmem %s0, %s270
      %s272 = smul.u32 8, %s22
      %p273 = scmp.lt.s32.totalorder %s21, 0
      %s274 = scalar_select %p273, %s21, 0
      %s275 = smul.addr %s274, 2
      %s276 = scalar_lea.vmem %s1, %s275
      %p277 = scmp.lt.s32.totalorder %s21, 0
      %s278 = scalar_select %p277, %s21, 0
      %s279 = scalar_lea.vmem %s2, %s278
      %p280 = scmp.lt.s32.totalorder %s21, 0
      %s281 = scalar_select %p280, %s21, 0
      %s282 = scalar_lea.vmem %s3, %s281
      %p283 = scmp.lt.s32.totalorder %s21, 0
      %s284 = scalar_select %p283, %s21, 0
      %s285 = scalar_lea.vmem %s4, %s284
      %p286 = scmp.lt.s32.totalorder %s21, 0
      %s287 = scalar_select %p286, %s21, 0
      %s288 = scalar_lea.vmem %s5, %s287
      %p290 = scmp.eq.s32.totalorder %s22, 0
      // Predicated region
      $region37: #{residual_block_forward.8} parent=35 // pred_check
        %p291 = pneg %p290
      $region38: #{residual_block_forward.8} parent=35 // pred_check_branch
        %293 = sbr.rel (%p291) target = $region40
      $region39: #{residual_block_forward.8} parent=35 // pred_region
        %294 = vst [vmem:[#allocation2] sm:$0x1] 0.0
        %295 = vst [vmem:[#allocation3] sm:$0x1] 0.0
      $region40: #{residual_block_forward.8} parent=35 // pred_fallthru
        _
      %v296 = vld [vmem:[%s271] sm:$0xf]
      %v297 = vld [vmem:[%s271 + $0x4] sm:$0xf]
      %v298 = vld [vmem:[%s271 + $0x8] sm:$0xf]
      %v299 = vld [vmem:[%s271 + $0xc] sm:$0xf]
      %v300 = vld [vmem:[%s271 + $0x10] sm:$0xf]
      %v301 = vld [vmem:[%s271 + $0x14] sm:$0xf]
      %v302 = vld [vmem:[%s271 + $0x18] sm:$0xf]
      %v303 = vld [vmem:[%s271 + $0x1c] sm:$0xf]
      %v304 = vld [vmem:[%s276] sm:$0x3]
      %v313 = vunpack.c.l.b16 %v296
      %v314 = vunpack.c.l.b16 %v297
      %v315 = vunpack.c.l.b16 %v298
      %v316 = vunpack.c.l.b16 %v299
      %v317 = vunpack.c.l.b16 %v300
      %v318 = vunpack.c.l.b16 %v301
      %v319 = vunpack.c.l.b16 %v302
      %v320 = vunpack.c.l.b16 %v303
      %v321 = vpack.c.b16 %v314, %v313
      %v322 = vpack.c.b16 %v316, %v315
      %v323 = vpack.c.b16 %v318, %v317
      %v324 = vpack.c.b16 %v320, %v319
      %vm325 = vcmask 31744
      %v327 = vsel %vm325, %v321, 0
      %v330 = vsel %vm325, %v322, 0
      %v333 = vsel %vm325, %v323, 0
      %v336 = vsel %vm325, %v324, 0
      %vm338 = vcmask 1041408
      %v340 = vsel %vm338, %v304, 0
      %342 = vmatpush.bf16.msra.mxu0 0
      %343 = vmatpush.bf16.msra.mxu0 0
      %344 = vmatpush.bf16.msra.mxu0 0
      %345 = vmatpush.bf16.msra.mxu0 0
      %346 = vmatpush.bf16.msra.mxu0 0
      %347 = vmatpush.bf16.msra.mxu0 0
      %348 = vmatpush.bf16.msra.mxu0 0
      %349 = vmatpush.bf16.msra.mxu0 %v340
      %350 = vmatmul.bf16.gmra.mxu0 %v327
      %v351 = vpop.f32.mrf.mxu0
      %v352 = vadd.f32 0.0, %v351
      %v353 = vpop.f32.mrf.mxu0
      %v354 = vadd.f32 0.0, %v353
      %355 = vmatmul.bf16.gmra.mxu0 %v330
      %v356 = vpop.f32.mrf.mxu0
      %v357 = vadd.f32 0.0, %v356
      %v358 = vpop.f32.mrf.mxu0
      %v359 = vadd.f32 0.0, %v358
      %360 = vmatmul.bf16.gmra.mxu0 %v333
      %v361 = vpop.f32.mrf.mxu0
      %v362 = vadd.f32 0.0, %v361
      %v363 = vpop.f32.mrf.mxu0
      %v364 = vadd.f32 0.0, %v363
      %365 = vmatmul.bf16.gmra.mxu0 %v336
      %v366 = vpop.f32.mrf.mxu0
      %v367 = vadd.f32 0.0, %v366
      %v368 = vpop.f32.mrf.mxu0
      %v369 = vadd.f32 0.0, %v368
      %370 = vdwg.mxu0
      %v371 = vld [vmem:[#allocation2] sm:$0x1]
      %v372 = vadd.f32 %v352, %v354
      %v373 = vadd.f32 %v372, %v357
      %v374 = vadd.f32 %v373, %v359
      %v375 = vadd.f32 %v374, %v362
      %v376 = vadd.f32 %v375, %v364
      %v377 = vadd.f32 %v376, %v367
      %v378 = vadd.f32 %v377, %v369
      %v379 = vrot.slane %v378, 4
      %v380 = vadd.f32 %v378, %v379
      %v381 = vrot.slane %v380, 2
      %v382 = vadd.f32 %v380, %v381
      %v383 = vrot.slane %v382, 1
      %v384 = vadd.f32 %v382, %v383
      %v385 = vadd.f32 %v371, %v384
      %386 = vst [vmem:[#allocation2] sm:$0x1] %v385
      %v387 = vld [vmem:[#allocation3] sm:$0x1]
      %v388 = vmul.f32 %v352, %v352
      %v389 = vmul.f32 %v354, %v354
      %v390 = vmul.f32 %v357, %v357
      %v391 = vmul.f32 %v359, %v359
      %v392 = vmul.f32 %v362, %v362
      %v393 = vmul.f32 %v364, %v364
      %v394 = vmul.f32 %v367, %v367
      %v395 = vmul.f32 %v369, %v369
      %v396 = vadd.f32 %v388, %v389
      %v397 = vadd.f32 %v396, %v390
      %v398 = vadd.f32 %v397, %v391
      %v399 = vadd.f32 %v398, %v392
      %v400 = vadd.f32 %v399, %v393
      %v401 = vadd.f32 %v400, %v394
      %v402 = vadd.f32 %v401, %v395
      %v403 = vrot.slane %v402, 4
      %v404 = vadd.f32 %v402, %v403
      %v405 = vrot.slane %v404, 2
      %v406 = vadd.f32 %v404, %v405
      %v407 = vrot.slane %v406, 1
      %v408 = vadd.f32 %v406, %v407
      %v409 = vadd.f32 %v387, %v408
      %410 = vst [vmem:[#allocation3] sm:$0x1] %v409
      %p411 = scmp.eq.s32.totalorder %s22, 1
      // Predicated region
      $region41: #{residual_block_forward.8} parent=35 // pred_check
        %p412 = pneg %p411
      $region42: #{residual_block_forward.8} parent=35 // pred_check_branch
        %414 = sbr.rel (%p412) target = $region44
      $region43: #{residual_block_forward.8} parent=35 // pred_region
        %v415 = vld [vmem:[#allocation2] sm:$0x1]
        %v416 = vmul.f32 %v415, 0.0078125
        %v417 = vld [vmem:[#allocation3] sm:$0x1]
        %v418 = vmul.f32 %v417, 0.0078125
        %v419 = vmul.f32 %v416, %v416
        %v420 = vsub.f32 %v418, %v419
        %v421 = vmax.f32 %v420, 0.0
        %v422 = vld [vmem:[%s279] sm:$0x1]
        %v423 = vadd.f32 %v421, 1e-05
        %v424 = vrsqrt.pop %v423
        %v425 = vmul.f32 %v424, %v423
        %v426 = vmul.f32 %v425, %v424
        %v427 = vmul.f32 0.5, %v426
        %v428 = vsub.f32 1.5, %v427
        %v429 = vmul.f32 %v424, %v428
        %vm430 = vweird.f32 %v423
        %vm431 = vweird.f32 %v424
        %vm432 = vmor %vm430, %vm431
        %v433 = vsel %vm432, %v424, %v429
        %v434 = vmul.f32 %v422, %v433
        %435 = vst [vmem:[%s285] sm:$0x1] %v434
        %v436 = vld [vmem:[%s282] sm:$0x1]
        %v437 = vmul.f32 %v416, %v434
        %v438 = vsub.f32 %v436, %v437
        %439 = vst [vmem:[%s288] sm:$0x1] %v438
      $region44: #{residual_block_forward.8} parent=35 // pred_fallthru
        _
      %p440 = scmp.lt.s32.totalorder %s21, 0
      %s441 = scalar_select %p440, %s21, 0
      %s442 = scalar_lea.vmem %s4, %s441
      %p443 = scmp.lt.s32.totalorder %s21, 0
      %s444 = scalar_select %p443, %s21, 0
      %s445 = scalar_lea.vmem %s5, %s444
      // Predicated region
      $region45: #{residual_block_forward.8} parent=35 // pred_check
        %p446 = pneg %p151
      $region46: #{residual_block_forward.8} parent=35 // pred_check_branch
        %448 = sbr.rel (%p446) target = $region48
      $region47: #{residual_block_forward.8} parent=35 // pred_region
        _
      $region48: #{residual_block_forward.8} parent=35 // pred_fallthru
        _
      // Predicated region
      $region49: #{residual_block_forward.8} parent=35 // pred_check
        %p449 = pneg %p177
      $region50: #{residual_block_forward.8} parent=35 // pred_check_branch
        %451 = sbr.rel (%p449) target = $region52
      $region51: #{residual_block_forward.8} parent=35 // pred_region
        _
      $region52: #{residual_block_forward.8} parent=35 // pred_fallthru
        _
      // Predicated region
      $region53: #{residual_block_forward.8} parent=35 // pred_check
        %p452 = pneg %p151
      $region54: #{residual_block_forward.8} parent=35 // pred_check_branch
        %454 = sbr.rel (%p452) target = $region56
      $region55: #{residual_block_forward.8} parent=35 // pred_region
        %p455 = scmp.lt.s32.totalorder %s21, 0
        %s456 = scalar_select %p455, %s21, 0
        %s457 = scalar_lea.vmem %s4, %s456
      $region56: #{residual_block_forward.8} parent=35 // pred_fallthru
        _
      // Predicated region
      $region57: #{residual_block_forward.8} parent=35 // pred_check
        %p458 = pneg %p177
      $region58: #{residual_block_forward.8} parent=35 // pred_check_branch
        %460 = sbr.rel (%p458) target = $region60
      $region59: #{residual_block_forward.8} parent=35 // pred_region
        %p461 = scmp.lt.s32.totalorder %s21, 0
        %s462 = scalar_select %p461, %s21, 0
        %s463 = scalar_lea.vmem %s5, %s462
      $region60: #{residual_block_forward.8} parent=35 // pred_fallthru
        _
    $region36: #{residual_block_forward.8} parent=5 // pred_fallthru
      _
    %p464 = scmp.le.s32.totalorder 2, %s12
    // Predicated region
    $region61: #{residual_block_forward.8} parent=5 // pred_check
      %p465 = pneg %p464
    $region62: #{residual_block_forward.8} parent=5 // pred_check_branch
      %467 = sbr.rel (%p465) target = $region64
    $region63: #{residual_block_forward.8} parent=5 // pred_region
      %s468 = ssub.s32 %s12, 2
    $region64: #{residual_block_forward.8} parent=5 // pred_fallthru
      _
  $region6: #{residual_block_forward.8} parent=0 // loop_footer
    %s16 = sadd.s32 1, %s12
  $region7: #{residual_block_forward.8} parent=0 // loop_footer_branch
    %11 = sbr.rel target = $region3
  $region8: #{residual_block_forward.8} parent=0 // loop_exit
    _

</llo_original>
